<compile_context>
chip_gen: v7x
topology: tpu7x:2x2x1
jax: 0.10.0
libtpu: 0.0.40
codegen_flags: <defaults>
</compile_context>

<pallas_src>
import functools
import math

import numpy as np
import jax
import jax.numpy as jnp
from jax import lax
from jax.experimental import pallas as pl
from jax.experimental.pallas import tpu as pltpu


_LANE_PAD = 128  # 128-aligned zero padding on the flattened-pixel (lane) axis


# ----------------------------- in-kernel conv helpers -----------------------------

def _im2col_3x3(x, mask, img_w):
    """Build the (9*Cin, P) im2col matrix of a 3x3 / stride-1 / pad-1 conv.

    x    : (Cin, P)  activations, P = N*H*W (n-major, h, w-minor) -> pixels in lanes
    mask : (9, P)    validity mask per tap (0 where the shifted pixel falls off the image)
    """
    cin, p = x.shape
    zpad = jnp.zeros((cin, _LANE_PAD), jnp.float32)
    xp = jnp.concatenate([zpad, x, zpad], axis=1)           # lane-tile-aligned concat
    cols = []
    for k in range(9):
        dh, dw = k // 3 - 1, k % 3 - 1
        if dh == 0 and dw == 0:
            cols.append(x)                                   # center tap: no shift, no mask
        else:
            s = dh * img_w + dw
            cols.append(xp[:, _LANE_PAD + s:_LANE_PAD + s + p] * mask[k:k + 1, :])
    return jnp.concatenate(cols, axis=0)                     # (9*Cin, P)


def _conv3x3(x, w2d, b, mask, img_w, relu):
    """3x3 pad-1 stride-1 conv as im2col + one MXU matmul.  w2d: (Cout, 9*Cin)."""
    cols = _im2col_3x3(x, mask, img_w)
    y = jnp.dot(w2d, cols, preferred_element_type=jnp.float32) + b
    return jnp.maximum(y, 0.0) if relu else y


# ----------------------------- the fused kernel -----------------------------

def _second_stage_kernel(*refs, W, C):
    (x0_ref, x1_ref, m0_ref, m1_ref, d0_ref, d1_ref, u_ref) = refs[0:7]
    g0_w = refs[7:15]                 # 4 x (w2d, bias) for level-0 group convs
    g1_w = refs[15:23]                # 4 x (w2d, bias) for level-1 group convs
    up_w_ref, up_b_ref = refs[23:25]  # 1x1 up-conv (C, 2C), (C, 1)
    dn0_w_ref, dn0_b_ref = refs[25:27]   # stacked [ex_1_0; ex_2_0a]: (4C, 9C), (4C, 1)
    dnb_w_ref, dnb_b_ref = refs[27:29]   # ex_2_0b: (4C, 18C), (4C, 1)
    dn21_w_ref, dn21_b_ref = refs[29:31]  # ex_2_1: (4C, 18C), (4C, 1)
    out0_ref, out1_ref, out2_ref = refs[31:34]

    W1 = W // 2
    m0 = m0_ref[...]
    m1 = m1_ref[...]

    # groupConvUnit(level=1): 4 blocks per level (block := Conv3x3 pad1 + ReLU)
    g0 = x0_ref[...]
    for i in range(4):
        g0 = _conv3x3(g0, g0_w[2 * i][...], g0_w[2 * i + 1][...], m0, W, relu=True)
    g1 = x1_ref[...]
    for i in range(4):
        g1 = _conv3x3(g1, g1_w[2 * i][...], g1_w[2 * i + 1][...], m1, W1, relu=True)

    # exchangeConvUnit(C, in_level=1, out_level=2)
    # out0 = g0 + Conv1x1(2C->C)(bilinear_up(g1))
    #       (1x1 conv applied BEFORE the upsample -- exact by linearity, fewer FLOPs)
    h = jnp.dot(up_w_ref[...], g1, preferred_element_type=jnp.float32)      # (C, P1)
    out0_ref[...] = (g0
                     + jnp.dot(h, u_ref[...], preferred_element_type=jnp.float32)
                     + up_b_ref[...])

    # g0 down path: the two C->2C stride-2 convs share one im2col, one stacked-weight
    # matmul and one subsample matmul.
    cols0 = _im2col_3x3(g0, m0, W)                                           # (9C, P0)
    y = jnp.dot(dn0_w_ref[...], cols0, preferred_element_type=jnp.float32) + dn0_b_ref[...]
    ysub = jnp.dot(y, d0_ref[...], preferred_element_type=jnp.float32)       # (4C, P1)
    out1_ref[...] = g1 + ysub[0:2 * C, :]                                    # out1
    a = ysub[2 * C:4 * C, :]                                                 # (2C, P1)

    # out2 = subsample_d1( Conv3x3(2C->4C)(a) + Conv3x3(2C->4C)(g1) )  -- single d1 matmul
    yb = _conv3x3(a, dnb_w_ref[...], dnb_b_ref[...], m1, W1, relu=False)     # (4C, P1)
    y21 = _conv3x3(g1, dn21_w_ref[...], dn21_b_ref[...], m1, W1, relu=False)  # (4C, P1)
    out2_ref[...] = jnp.dot(yb + y21, d1_ref[...], preferred_element_type=jnp.float32)


# ----------------------------- host-side constant builders -----------------------------

def _bilinear_matrix(n_out, n_in):
    """(n_out, n_in) matrix matching F.interpolate(bilinear, align_corners=True)."""
    M = np.zeros((n_out, n_in), np.float32)
    scale = (n_in - 1) / (n_out - 1) if n_out > 1 else 0.0
    for o in range(n_out):
        src = o * scale
        i0 = min(max(int(math.floor(src)), 0), n_in - 1)
        i1 = min(i0 + 1, n_in - 1)
        frac = src - i0
        M[o, i0] += 1.0 - frac
        M[o, i1] += frac
    return M


def _tap_masks(N, H, W):
    """(9, N*H*W) validity mask per 3x3 tap (pad=1) on the n-major flattened pixel axis."""
    m = np.zeros((9, N * H * W), np.float32)
    hs, ws = np.arange(H), np.arange(W)
    for k in range(9):
        dh, dw = k // 3 - 1, k % 3 - 1
        vh = (hs + dh >= 0) & (hs + dh < H)
        vw = (ws + dw >= 0) & (ws + dw < W)
        m[k] = np.tile(np.outer(vh, vw).astype(np.float32).reshape(-1), N)
    return m


def _stride2_subsample(N, H, W):
    """(N*H*W, N*(H/2)*(W/2)) 0/1 matrix selecting even rows/cols per image."""
    Ho, Wo = H // 2, W // 2
    D = np.zeros((N * H * W, N * Ho * Wo), np.float32)
    for n in range(N):
        for ho in range(Ho):
            for wo in range(Wo):
                D[n * H * W + 2 * ho * W + 2 * wo, n * Ho * Wo + ho * Wo + wo] = 1.0
    return D


def _bilinear_upsample_matrix(N, Hi, Wi, Ho, Wo):
    """(N*Hi*Wi, N*Ho*Wo) block-diagonal (per image) bilinear interpolation matrix."""
    K = np.kron(_bilinear_matrix(Ho, Hi), _bilinear_matrix(Wo, Wi))   # (Ho*Wo, Hi*Wi)
    U = np.zeros((N * Hi * Wi, N * Ho * Wo), np.float32)
    for n in range(N):
        U[n * Hi * Wi:(n + 1) * Hi * Wi, n * Ho * Wo:(n + 1) * Ho * Wo] = K.T
    return U


# ----------------------------- wrapper -----------------------------

def _flatten_nchw(x):
    N, C, H, W = x.shape
    return jnp.transpose(x, (1, 0, 2, 3)).reshape(C, N * H * W)


def _unflatten_to_nchw(y, N, H, W):
    C = y.shape[0]
    return jnp.transpose(y.reshape(C, N, H, W), (1, 0, 2, 3))


def _conv_w2d_3x3(w):
    """OIHW (Cout, Cin, 3, 3) -> (Cout, 9*Cin); column index = (kh*3+kw)*Cin + cin."""
    Cout, Cin, KH, KW = w.shape
    return jnp.transpose(w, (0, 2, 3, 1)).reshape(Cout, KH * KW * Cin)


@jax.jit
def second_stage_forward(params, x0, x1):
    N, C, H, W = x0.shape
    H1, W1 = H // 2, W // 2
    H2, W2 = H // 4, W // 4
    P0, P1, P2 = N * H * W, N * H1 * W1, N * H2 * W2

    m0 = jnp.asarray(_tap_masks(N, H, W))
    m1 = jnp.asarray(_tap_masks(N, H1, W1))
    d0 = jnp.asarray(_stride2_subsample(N, H, W))
    d1 = jnp.asarray(_stride2_subsample(N, H1, W1))
    u = jnp.asarray(_bilinear_upsample_matrix(N, H1, W1, H, W))

    weight_args = []
    for wconv, bconv in params["group0"]:
        weight_args += [_conv_w2d_3x3(wconv), bconv.reshape(-1, 1)]
    for wconv, bconv in params["group1"]:
        weight_args += [_conv_w2d_3x3(wconv), bconv.reshape(-1, 1)]

    w_up, b_up = params["ex_0_1"]
    weight_args += [w_up.reshape(w_up.shape[0], w_up.shape[1]), b_up.reshape(-1, 1)]

    # Stack the two C->2C stride-2 convs that both consume g0 into one weight matrix.
    w10, b10 = params["ex_1_0"]
    w20a, b20a = params["ex_2_0a"]
    weight_args += [jnp.concatenate([_conv_w2d_3x3(w10), _conv_w2d_3x3(w20a)], axis=0),
                    jnp.concatenate([b10, b20a]).reshape(-1, 1)]

    w20b, b20b = params["ex_2_0b"]
    weight_args += [_conv_w2d_3x3(w20b), b20b.reshape(-1, 1)]
    w21, b21 = params["ex_2_1"]
    weight_args += [_conv_w2d_3x3(w21), b21.reshape(-1, 1)]

    kernel = functools.partial(_second_stage_kernel, W=W, C=C)
    out0, out1, out2 = pl.pallas_call(
        kernel,
        out_shape=(
            jax.ShapeDtypeStruct((C, P0), jnp.float32),
            jax.ShapeDtypeStruct((2 * C, P1), jnp.float32),
            jax.ShapeDtypeStruct((4 * C, P2), jnp.float32),
        ),
    )(_flatten_nchw(x0), _flatten_nchw(x1), m0, m1, d0, d1, u, *weight_args)

    return [
        _unflatten_to_nchw(out0, N, H, W),
        _unflatten_to_nchw(out1, N, H1, W1),
        _unflatten_to_nchw(out2, N, H2, W2),
    ]


# ----------------------------- parameters -----------------------------

def _init_conv(key, cin, cout, ksize):
    kw_, kb_ = jax.random.split(key)
    bound = 1.0 / math.sqrt(ksize * ksize * cin)
    w = jax.random.uniform(kw_, (cout, cin, ksize, ksize), jnp.float32, -bound, bound)
    b = jax.random.uniform(kb_, (cout,), jnp.float32, -bound, bound)
    return w, b


def init_params(C, key):
    keys = iter(jax.random.split(key, 16))
    p = {}
    p["group0"] = [_init_conv(next(keys), C, C, 3) for _ in range(4)]
    p["group1"] = [_init_conv(next(keys), 2 * C, 2 * C, 3) for _ in range(4)]
    p["ex_0_1"] = _init_conv(next(keys), 2 * C, C, 1)        # upconv 1x1 (2C->C)
    p["ex_1_0"] = _init_conv(next(keys), C, 2 * C, 3)        # downconv s2 (C->2C)
    p["ex_2_0a"] = _init_conv(next(keys), C, 2 * C, 3)       # downconv s2 (C->2C)
    p["ex_2_0b"] = _init_conv(next(keys), 2 * C, 4 * C, 3)   # downconv s2 (2C->4C)
    p["ex_2_1"] = _init_conv(next(keys), 2 * C, 4 * C, 3)    # downconv s2 (2C->4C)
    return p


# ----------------------------- pure-JAX reference -----------------------------

def _ref_conv(x, w, b, stride, padding):
    y = lax.conv_general_dilated(
        x, w, (stride, stride), [(padding, padding), (padding, padding)],
        dimension_numbers=("NCHW", "OIHW", "NCHW"))
    return y + b.reshape(1, -1, 1, 1)


def reference_forward(params, x0, x1):
    g0 = x0
    for wconv, bconv in params["group0"]:
        g0 = jnp.maximum(_ref_conv(g0, wconv, bconv, 1, 1), 0.0)
    g1 = x1
    for wconv, bconv in params["group1"]:
        g1 = jnp.maximum(_ref_conv(g1, wconv, bconv, 1, 1), 0.0)
    Ah = jnp.asarray(_bilinear_matrix(g0.shape[2], g1.shape[2]))
    Aw = jnp.asarray(_bilinear_matrix(g0.shape[3], g1.shape[3]))
    up = jnp.einsum("oh,pw,nchw->ncop", Ah, Aw, g1)
    out0 = g0 + _ref_conv(up, *params["ex_0_1"], 1, 0)
    out1 = g1 + _ref_conv(g0, *params["ex_1_0"], 2, 1)
    t = _ref_conv(_ref_conv(g0, *params["ex_2_0a"], 2, 1), *params["ex_2_0b"], 2, 1)
    out2 = t + _ref_conv(g1, *params["ex_2_1"], 2, 1)
    return [out0, out1, out2]


# ----------------------------- main -----------------------------

if __name__ == "__main__":
    C = 4
    N, H, W = 2, 16, 16

    key = jax.random.PRNGKey(0)
    k0, k1, kp = jax.random.split(key, 3)
    x0 = jax.random.normal(k0, (N, C, H, W), jnp.float32)                 # level-0 (NCHW)
    x1 = jax.random.normal(k1, (N, 2 * C, H // 2, W // 2), jnp.float32)   # level-1
    params = init_params(C, kp)

    outs = second_stage_forward(params, x0, x1)
    outs = [jax.block_until_ready(o) for o in outs]

    refs = reference_forward(params, x0, x1)
    expected = [(N, C, H, W), (N, 2 * C, H // 2, W // 2), (N, 4 * C, H // 4, W // 4)]
    for o, r, s in zip(outs, refs, expected):
        assert o.shape == s, (o.shape, s)
        err = float(jnp.max(jnp.abs(o - r)))
        assert jnp.allclose(o, r, rtol=1e-4, atol=1e-4), err

    print("KERNEL_OK")
</pallas_src>

<mosaic_0001>
module attributes {stable_mosaic.version = 11 : i64} {
  func.func @_second_stage_kernel(%arg0: memref<4x512xf32, #tpu.memory_space<vmem>>, %arg1: memref<8x128xf32, #tpu.memory_space<vmem>>, %arg2: memref<9x512xf32, #tpu.memory_space<vmem>>, %arg3: memref<9x128xf32, #tpu.memory_space<vmem>>, %arg4: memref<512x128xf32, #tpu.memory_space<vmem>>, %arg5: memref<128x32xf32, #tpu.memory_space<vmem>>, %arg6: memref<128x512xf32, #tpu.memory_space<vmem>>, %arg7: memref<4x36xf32, #tpu.memory_space<vmem>>, %arg8: memref<4x1xf32, #tpu.memory_space<vmem>>, %arg9: memref<4x36xf32, #tpu.memory_space<vmem>>, %arg10: memref<4x1xf32, #tpu.memory_space<vmem>>, %arg11: memref<4x36xf32, #tpu.memory_space<vmem>>, %arg12: memref<4x1xf32, #tpu.memory_space<vmem>>, %arg13: memref<4x36xf32, #tpu.memory_space<vmem>>, %arg14: memref<4x1xf32, #tpu.memory_space<vmem>>, %arg15: memref<8x72xf32, #tpu.memory_space<vmem>>, %arg16: memref<8x1xf32, #tpu.memory_space<vmem>>, %arg17: memref<8x72xf32, #tpu.memory_space<vmem>>, %arg18: memref<8x1xf32, #tpu.memory_space<vmem>>, %arg19: memref<8x72xf32, #tpu.memory_space<vmem>>, %arg20: memref<8x1xf32, #tpu.memory_space<vmem>>, %arg21: memref<8x72xf32, #tpu.memory_space<vmem>>, %arg22: memref<8x1xf32, #tpu.memory_space<vmem>>, %arg23: memref<4x8xf32, #tpu.memory_space<vmem>>, %arg24: memref<4x1xf32, #tpu.memory_space<vmem>>, %arg25: memref<16x36xf32, #tpu.memory_space<vmem>>, %arg26: memref<16x1xf32, #tpu.memory_space<vmem>>, %arg27: memref<16x72xf32, #tpu.memory_space<vmem>>, %arg28: memref<16x1xf32, #tpu.memory_space<vmem>>, %arg29: memref<16x72xf32, #tpu.memory_space<vmem>>, %arg30: memref<16x1xf32, #tpu.memory_space<vmem>>, %arg31: memref<4x512xf32, #tpu.memory_space<vmem>>, %arg32: memref<8x128xf32, #tpu.memory_space<vmem>>, %arg33: memref<16x32xf32, #tpu.memory_space<vmem>>) attributes {dimension_semantics = [], scalar_prefetch = 0 : i64, scratch_operands = 0 : i64, tpu.core_type = #tpu.core_type<tc>} {
    %c0 = arith.constant 0 : index
    %c0_0 = arith.constant 0 : index
    %0 = vector.load %arg2[%c0, %c0_0] : memref<9x512xf32, #tpu.memory_space<vmem>>, vector<9x512xf32>
    %c0_1 = arith.constant 0 : index
    %c0_2 = arith.constant 0 : index
    %1 = vector.load %arg3[%c0_1, %c0_2] : memref<9x128xf32, #tpu.memory_space<vmem>>, vector<9x128xf32>
    %c0_3 = arith.constant 0 : index
    %c0_4 = arith.constant 0 : index
    %2 = vector.load %arg0[%c0_3, %c0_4] : memref<4x512xf32, #tpu.memory_space<vmem>>, vector<4x512xf32>
    %c0_5 = arith.constant 0 : index
    %c0_6 = arith.constant 0 : index
    %3 = vector.load %arg7[%c0_5, %c0_6] : memref<4x36xf32, #tpu.memory_space<vmem>>, vector<4x36xf32>
    %c0_7 = arith.constant 0 : index
    %c0_8 = arith.constant 0 : index
    %4 = vector.load %arg8[%c0_7, %c0_8] : memref<4x1xf32, #tpu.memory_space<vmem>>, vector<4x1xf32>
    %cst = arith.constant 0.000000e+00 : f32
    %5 = vector.broadcast %cst : f32 to vector<4x128xf32>
    %6 = tpu.concatenate %5, %2, %5 in 1 : vector<4x128xf32>, vector<4x512xf32>, vector<4x128xf32> -> vector<4x768xf32>
    %7 = vector.extract_strided_slice %6 {offsets = [0, 111], sizes = [4, 512], strides = [1, 1]} : vector<4x768xf32> to vector<4x512xf32>
    %8 = vector.extract_strided_slice %0 {offsets = [0, 0], sizes = [1, 512], strides = [1, 1]} : vector<9x512xf32> to vector<1x512xf32>
    %9 = vector.broadcast %8 : vector<1x512xf32> to vector<4x512xf32>
    %10 = arith.mulf %7, %9 : vector<4x512xf32>
    %11 = vector.extract_strided_slice %6 {offsets = [0, 112], sizes = [4, 512], strides = [1, 1]} : vector<4x768xf32> to vector<4x512xf32>
    %12 = vector.extract_strided_slice %0 {offsets = [1, 0], sizes = [1, 512], strides = [1, 1]} : vector<9x512xf32> to vector<1x512xf32>
    %13 = vector.broadcast %12 : vector<1x512xf32> to vector<4x512xf32>
    %14 = arith.mulf %11, %13 : vector<4x512xf32>
    %15 = vector.extract_strided_slice %6 {offsets = [0, 113], sizes = [4, 512], strides = [1, 1]} : vector<4x768xf32> to vector<4x512xf32>
    %16 = vector.extract_strided_slice %0 {offsets = [2, 0], sizes = [1, 512], strides = [1, 1]} : vector<9x512xf32> to vector<1x512xf32>
    %17 = vector.broadcast %16 : vector<1x512xf32> to vector<4x512xf32>
    %18 = arith.mulf %15, %17 : vector<4x512xf32>
    %19 = vector.extract_strided_slice %6 {offsets = [0, 127], sizes = [4, 512], strides = [1, 1]} : vector<4x768xf32> to vector<4x512xf32>
    %20 = vector.extract_strided_slice %0 {offsets = [3, 0], sizes = [1, 512], strides = [1, 1]} : vector<9x512xf32> to vector<1x512xf32>
    %21 = vector.broadcast %20 : vector<1x512xf32> to vector<4x512xf32>
    %22 = arith.mulf %19, %21 : vector<4x512xf32>
    %23 = vector.extract_strided_slice %6 {offsets = [0, 129], sizes = [4, 512], strides = [1, 1]} : vector<4x768xf32> to vector<4x512xf32>
    %24 = vector.extract_strided_slice %0 {offsets = [5, 0], sizes = [1, 512], strides = [1, 1]} : vector<9x512xf32> to vector<1x512xf32>
    %25 = vector.broadcast %24 : vector<1x512xf32> to vector<4x512xf32>
    %26 = arith.mulf %23, %25 : vector<4x512xf32>
    %27 = vector.extract_strided_slice %6 {offsets = [0, 143], sizes = [4, 512], strides = [1, 1]} : vector<4x768xf32> to vector<4x512xf32>
    %28 = vector.extract_strided_slice %0 {offsets = [6, 0], sizes = [1, 512], strides = [1, 1]} : vector<9x512xf32> to vector<1x512xf32>
    %29 = vector.broadcast %28 : vector<1x512xf32> to vector<4x512xf32>
    %30 = arith.mulf %27, %29 : vector<4x512xf32>
    %31 = vector.extract_strided_slice %6 {offsets = [0, 144], sizes = [4, 512], strides = [1, 1]} : vector<4x768xf32> to vector<4x512xf32>
    %32 = vector.extract_strided_slice %0 {offsets = [7, 0], sizes = [1, 512], strides = [1, 1]} : vector<9x512xf32> to vector<1x512xf32>
    %33 = vector.broadcast %32 : vector<1x512xf32> to vector<4x512xf32>
    %34 = arith.mulf %31, %33 : vector<4x512xf32>
    %35 = vector.extract_strided_slice %6 {offsets = [0, 145], sizes = [4, 512], strides = [1, 1]} : vector<4x768xf32> to vector<4x512xf32>
    %36 = vector.extract_strided_slice %0 {offsets = [8, 0], sizes = [1, 512], strides = [1, 1]} : vector<9x512xf32> to vector<1x512xf32>
    %37 = vector.broadcast %36 : vector<1x512xf32> to vector<4x512xf32>
    %38 = arith.mulf %35, %37 : vector<4x512xf32>
    %39 = tpu.concatenate %10, %14, %18, %22, %2, %26, %30, %34, %38 in 0 : vector<4x512xf32>, vector<4x512xf32>, vector<4x512xf32>, vector<4x512xf32>, vector<4x512xf32>, vector<4x512xf32>, vector<4x512xf32>, vector<4x512xf32>, vector<4x512xf32> -> vector<36x512xf32>
    %cst_9 = arith.constant dense<0.000000e+00> : vector<4x512xf32>
    %40 = tpu.matmul %3, %39, %cst_9 {dimension_numbers = #tpu.dot_dimension_numbers<[1], [0], [0], [1], [0, 0, 1, 1], [], []>} : vector<4x36xf32>, vector<36x512xf32>, vector<4x512xf32> -> vector<4x512xf32>
    %41 = vector.broadcast %4 : vector<4x1xf32> to vector<4x512xf32>
    %42 = arith.addf %40, %41 : vector<4x512xf32>
    %cst_10 = arith.constant 0.000000e+00 : f32
    %43 = vector.broadcast %cst_10 : f32 to vector<4x512xf32>
    %44 = arith.maximumf %42, %43 : vector<4x512xf32>
    %c0_11 = arith.constant 0 : index
    %c0_12 = arith.constant 0 : index
    %45 = vector.load %arg9[%c0_11, %c0_12] : memref<4x36xf32, #tpu.memory_space<vmem>>, vector<4x36xf32>
    %c0_13 = arith.constant 0 : index
    %c0_14 = arith.constant 0 : index
    %46 = vector.load %arg10[%c0_13, %c0_14] : memref<4x1xf32, #tpu.memory_space<vmem>>, vector<4x1xf32>
    %cst_15 = arith.constant 0.000000e+00 : f32
    %47 = vector.broadcast %cst_15 : f32 to vector<4x128xf32>
    %48 = tpu.concatenate %47, %44, %47 in 1 : vector<4x128xf32>, vector<4x512xf32>, vector<4x128xf32> -> vector<4x768xf32>
    %49 = vector.extract_strided_slice %48 {offsets = [0, 111], sizes = [4, 512], strides = [1, 1]} : vector<4x768xf32> to vector<4x512xf32>
    %50 = vector.extract_strided_slice %0 {offsets = [0, 0], sizes = [1, 512], strides = [1, 1]} : vector<9x512xf32> to vector<1x512xf32>
    %51 = vector.broadcast %50 : vector<1x512xf32> to vector<4x512xf32>
    %52 = arith.mulf %49, %51 : vector<4x512xf32>
    %53 = vector.extract_strided_slice %48 {offsets = [0, 112], sizes = [4, 512], strides = [1, 1]} : vector<4x768xf32> to vector<4x512xf32>
    %54 = vector.extract_strided_slice %0 {offsets = [1, 0], sizes = [1, 512], strides = [1, 1]} : vector<9x512xf32> to vector<1x512xf32>
    %55 = vector.broadcast %54 : vector<1x512xf32> to vector<4x512xf32>
    %56 = arith.mulf %53, %55 : vector<4x512xf32>
    %57 = vector.extract_strided_slice %48 {offsets = [0, 113], sizes = [4, 512], strides = [1, 1]} : vector<4x768xf32> to vector<4x512xf32>
    %58 = vector.extract_strided_slice %0 {offsets = [2, 0], sizes = [1, 512], strides = [1, 1]} : vector<9x512xf32> to vector<1x512xf32>
    %59 = vector.broadcast %58 : vector<1x512xf32> to vector<4x512xf32>
    %60 = arith.mulf %57, %59 : vector<4x512xf32>
    %61 = vector.extract_strided_slice %48 {offsets = [0, 127], sizes = [4, 512], strides = [1, 1]} : vector<4x768xf32> to vector<4x512xf32>
    %62 = vector.extract_strided_slice %0 {offsets = [3, 0], sizes = [1, 512], strides = [1, 1]} : vector<9x512xf32> to vector<1x512xf32>
    %63 = vector.broadcast %62 : vector<1x512xf32> to vector<4x512xf32>
    %64 = arith.mulf %61, %63 : vector<4x512xf32>
    %65 = vector.extract_strided_slice %48 {offsets = [0, 129], sizes = [4, 512], strides = [1, 1]} : vector<4x768xf32> to vector<4x512xf32>
    %66 = vector.extract_strided_slice %0 {offsets = [5, 0], sizes = [1, 512], strides = [1, 1]} : vector<9x512xf32> to vector<1x512xf32>
    %67 = vector.broadcast %66 : vector<1x512xf32> to vector<4x512xf32>
    %68 = arith.mulf %65, %67 : vector<4x512xf32>
    %69 = vector.extract_strided_slice %48 {offsets = [0, 143], sizes = [4, 512], strides = [1, 1]} : vector<4x768xf32> to vector<4x512xf32>
    %70 = vector.extract_strided_slice %0 {offsets = [6, 0], sizes = [1, 512], strides = [1, 1]} : vector<9x512xf32> to vector<1x512xf32>
    %71 = vector.broadcast %70 : vector<1x512xf32> to vector<4x512xf32>
    %72 = arith.mulf %69, %71 : vector<4x512xf32>
    %73 = vector.extract_strided_slice %48 {offsets = [0, 144], sizes = [4, 512], strides = [1, 1]} : vector<4x768xf32> to vector<4x512xf32>
    %74 = vector.extract_strided_slice %0 {offsets = [7, 0], sizes = [1, 512], strides = [1, 1]} : vector<9x512xf32> to vector<1x512xf32>
    %75 = vector.broadcast %74 : vector<1x512xf32> to vector<4x512xf32>
    %76 = arith.mulf %73, %75 : vector<4x512xf32>
    %77 = vector.extract_strided_slice %48 {offsets = [0, 145], sizes = [4, 512], strides = [1, 1]} : vector<4x768xf32> to vector<4x512xf32>
    %78 = vector.extract_strided_slice %0 {offsets = [8, 0], sizes = [1, 512], strides = [1, 1]} : vector<9x512xf32> to vector<1x512xf32>
    %79 = vector.broadcast %78 : vector<1x512xf32> to vector<4x512xf32>
    %80 = arith.mulf %77, %79 : vector<4x512xf32>
    %81 = tpu.concatenate %52, %56, %60, %64, %44, %68, %72, %76, %80 in 0 : vector<4x512xf32>, vector<4x512xf32>, vector<4x512xf32>, vector<4x512xf32>, vector<4x512xf32>, vector<4x512xf32>, vector<4x512xf32>, vector<4x512xf32>, vector<4x512xf32> -> vector<36x512xf32>
    %cst_16 = arith.constant dense<0.000000e+00> : vector<4x512xf32>
    %82 = tpu.matmul %45, %81, %cst_16 {dimension_numbers = #tpu.dot_dimension_numbers<[1], [0], [0], [1], [0, 0, 1, 1], [], []>} : vector<4x36xf32>, vector<36x512xf32>, vector<4x512xf32> -> vector<4x512xf32>
    %83 = vector.broadcast %46 : vector<4x1xf32> to vector<4x512xf32>
    %84 = arith.addf %82, %83 : vector<4x512xf32>
    %cst_17 = arith.constant 0.000000e+00 : f32
    %85 = vector.broadcast %cst_17 : f32 to vector<4x512xf32>
    %86 = arith.maximumf %84, %85 : vector<4x512xf32>
    %c0_18 = arith.constant 0 : index
    %c0_19 = arith.constant 0 : index
    %87 = vector.load %arg11[%c0_18, %c0_19] : memref<4x36xf32, #tpu.memory_space<vmem>>, vector<4x36xf32>
    %c0_20 = arith.constant 0 : index
    %c0_21 = arith.constant 0 : index
    %88 = vector.load %arg12[%c0_20, %c0_21] : memref<4x1xf32, #tpu.memory_space<vmem>>, vector<4x1xf32>
    %cst_22 = arith.constant 0.000000e+00 : f32
    %89 = vector.broadcast %cst_22 : f32 to vector<4x128xf32>
    %90 = tpu.concatenate %89, %86, %89 in 1 : vector<4x128xf32>, vector<4x512xf32>, vector<4x128xf32> -> vector<4x768xf32>
    %91 = vector.extract_strided_slice %90 {offsets = [0, 111], sizes = [4, 512], strides = [1, 1]} : vector<4x768xf32> to vector<4x512xf32>
    %92 = vector.extract_strided_slice %0 {offsets = [0, 0], sizes = [1, 512], strides = [1, 1]} : vector<9x512xf32> to vector<1x512xf32>
    %93 = vector.broadcast %92 : vector<1x512xf32> to vector<4x512xf32>
    %94 = arith.mulf %91, %93 : vector<4x512xf32>
    %95 = vector.extract_strided_slice %90 {offsets = [0, 112], sizes = [4, 512], strides = [1, 1]} : vector<4x768xf32> to vector<4x512xf32>
    %96 = vector.extract_strided_slice %0 {offsets = [1, 0], sizes = [1, 512], strides = [1, 1]} : vector<9x512xf32> to vector<1x512xf32>
    %97 = vector.broadcast %96 : vector<1x512xf32> to vector<4x512xf32>
    %98 = arith.mulf %95, %97 : vector<4x512xf32>
    %99 = vector.extract_strided_slice %90 {offsets = [0, 113], sizes = [4, 512], strides = [1, 1]} : vector<4x768xf32> to vector<4x512xf32>
    %100 = vector.extract_strided_slice %0 {offsets = [2, 0], sizes = [1, 512], strides = [1, 1]} : vector<9x512xf32> to vector<1x512xf32>
    %101 = vector.broadcast %100 : vector<1x512xf32> to vector<4x512xf32>
    %102 = arith.mulf %99, %101 : vector<4x512xf32>
    %103 = vector.extract_strided_slice %90 {offsets = [0, 127], sizes = [4, 512], strides = [1, 1]} : vector<4x768xf32> to vector<4x512xf32>
    %104 = vector.extract_strided_slice %0 {offsets = [3, 0], sizes = [1, 512], strides = [1, 1]} : vector<9x512xf32> to vector<1x512xf32>
    %105 = vector.broadcast %104 : vector<1x512xf32> to vector<4x512xf32>
    %106 = arith.mulf %103, %105 : vector<4x512xf32>
    %107 = vector.extract_strided_slice %90 {offsets = [0, 129], sizes = [4, 512], strides = [1, 1]} : vector<4x768xf32> to vector<4x512xf32>
    %108 = vector.extract_strided_slice %0 {offsets = [5, 0], sizes = [1, 512], strides = [1, 1]} : vector<9x512xf32> to vector<1x512xf32>
    %109 = vector.broadcast %108 : vector<1x512xf32> to vector<4x512xf32>
    %110 = arith.mulf %107, %109 : vector<4x512xf32>
    %111 = vector.extract_strided_slice %90 {offsets = [0, 143], sizes = [4, 512], strides = [1, 1]} : vector<4x768xf32> to vector<4x512xf32>
    %112 = vector.extract_strided_slice %0 {offsets = [6, 0], sizes = [1, 512], strides = [1, 1]} : vector<9x512xf32> to vector<1x512xf32>
    %113 = vector.broadcast %112 : vector<1x512xf32> to vector<4x512xf32>
    %114 = arith.mulf %111, %113 : vector<4x512xf32>
    %115 = vector.extract_strided_slice %90 {offsets = [0, 144], sizes = [4, 512], strides = [1, 1]} : vector<4x768xf32> to vector<4x512xf32>
    %116 = vector.extract_strided_slice %0 {offsets = [7, 0], sizes = [1, 512], strides = [1, 1]} : vector<9x512xf32> to vector<1x512xf32>
    %117 = vector.broadcast %116 : vector<1x512xf32> to vector<4x512xf32>
    %118 = arith.mulf %115, %117 : vector<4x512xf32>
    %119 = vector.extract_strided_slice %90 {offsets = [0, 145], sizes = [4, 512], strides = [1, 1]} : vector<4x768xf32> to vector<4x512xf32>
    %120 = vector.extract_strided_slice %0 {offsets = [8, 0], sizes = [1, 512], strides = [1, 1]} : vector<9x512xf32> to vector<1x512xf32>
    %121 = vector.broadcast %120 : vector<1x512xf32> to vector<4x512xf32>
    %122 = arith.mulf %119, %121 : vector<4x512xf32>
    %123 = tpu.concatenate %94, %98, %102, %106, %86, %110, %114, %118, %122 in 0 : vector<4x512xf32>, vector<4x512xf32>, vector<4x512xf32>, vector<4x512xf32>, vector<4x512xf32>, vector<4x512xf32>, vector<4x512xf32>, vector<4x512xf32>, vector<4x512xf32> -> vector<36x512xf32>
    %cst_23 = arith.constant dense<0.000000e+00> : vector<4x512xf32>
    %124 = tpu.matmul %87, %123, %cst_23 {dimension_numbers = #tpu.dot_dimension_numbers<[1], [0], [0], [1], [0, 0, 1, 1], [], []>} : vector<4x36xf32>, vector<36x512xf32>, vector<4x512xf32> -> vector<4x512xf32>
    %125 = vector.broadcast %88 : vector<4x1xf32> to vector<4x512xf32>
    %126 = arith.addf %124, %125 : vector<4x512xf32>
    %cst_24 = arith.constant 0.000000e+00 : f32
    %127 = vector.broadcast %cst_24 : f32 to vector<4x512xf32>
    %128 = arith.maximumf %126, %127 : vector<4x512xf32>
    %c0_25 = arith.constant 0 : index
    %c0_26 = arith.constant 0 : index
    %129 = vector.load %arg13[%c0_25, %c0_26] : memref<4x36xf32, #tpu.memory_space<vmem>>, vector<4x36xf32>
    %c0_27 = arith.constant 0 : index
    %c0_28 = arith.constant 0 : index
    %130 = vector.load %arg14[%c0_27, %c0_28] : memref<4x1xf32, #tpu.memory_space<vmem>>, vector<4x1xf32>
    %cst_29 = arith.constant 0.000000e+00 : f32
    %131 = vector.broadcast %cst_29 : f32 to vector<4x128xf32>
    %132 = tpu.concatenate %131, %128, %131 in 1 : vector<4x128xf32>, vector<4x512xf32>, vector<4x128xf32> -> vector<4x768xf32>
    %133 = vector.extract_strided_slice %132 {offsets = [0, 111], sizes = [4, 512], strides = [1, 1]} : vector<4x768xf32> to vector<4x512xf32>
    %134 = vector.extract_strided_slice %0 {offsets = [0, 0], sizes = [1, 512], strides = [1, 1]} : vector<9x512xf32> to vector<1x512xf32>
    %135 = vector.broadcast %134 : vector<1x512xf32> to vector<4x512xf32>
    %136 = arith.mulf %133, %135 : vector<4x512xf32>
    %137 = vector.extract_strided_slice %132 {offsets = [0, 112], sizes = [4, 512], strides = [1, 1]} : vector<4x768xf32> to vector<4x512xf32>
    %138 = vector.extract_strided_slice %0 {offsets = [1, 0], sizes = [1, 512], strides = [1, 1]} : vector<9x512xf32> to vector<1x512xf32>
    %139 = vector.broadcast %138 : vector<1x512xf32> to vector<4x512xf32>
    %140 = arith.mulf %137, %139 : vector<4x512xf32>
    %141 = vector.extract_strided_slice %132 {offsets = [0, 113], sizes = [4, 512], strides = [1, 1]} : vector<4x768xf32> to vector<4x512xf32>
    %142 = vector.extract_strided_slice %0 {offsets = [2, 0], sizes = [1, 512], strides = [1, 1]} : vector<9x512xf32> to vector<1x512xf32>
    %143 = vector.broadcast %142 : vector<1x512xf32> to vector<4x512xf32>
    %144 = arith.mulf %141, %143 : vector<4x512xf32>
    %145 = vector.extract_strided_slice %132 {offsets = [0, 127], sizes = [4, 512], strides = [1, 1]} : vector<4x768xf32> to vector<4x512xf32>
    %146 = vector.extract_strided_slice %0 {offsets = [3, 0], sizes = [1, 512], strides = [1, 1]} : vector<9x512xf32> to vector<1x512xf32>
    %147 = vector.broadcast %146 : vector<1x512xf32> to vector<4x512xf32>
    %148 = arith.mulf %145, %147 : vector<4x512xf32>
    %149 = vector.extract_strided_slice %132 {offsets = [0, 129], sizes = [4, 512], strides = [1, 1]} : vector<4x768xf32> to vector<4x512xf32>
    %150 = vector.extract_strided_slice %0 {offsets = [5, 0], sizes = [1, 512], strides = [1, 1]} : vector<9x512xf32> to vector<1x512xf32>
    %151 = vector.broadcast %150 : vector<1x512xf32> to vector<4x512xf32>
    %152 = arith.mulf %149, %151 : vector<4x512xf32>
    %153 = vector.extract_strided_slice %132 {offsets = [0, 143], sizes = [4, 512], strides = [1, 1]} : vector<4x768xf32> to vector<4x512xf32>
    %154 = vector.extract_strided_slice %0 {offsets = [6, 0], sizes = [1, 512], strides = [1, 1]} : vector<9x512xf32> to vector<1x512xf32>
    %155 = vector.broadcast %154 : vector<1x512xf32> to vector<4x512xf32>
    %156 = arith.mulf %153, %155 : vector<4x512xf32>
    %157 = vector.extract_strided_slice %132 {offsets = [0, 144], sizes = [4, 512], strides = [1, 1]} : vector<4x768xf32> to vector<4x512xf32>
    %158 = vector.extract_strided_slice %0 {offsets = [7, 0], sizes = [1, 512], strides = [1, 1]} : vector<9x512xf32> to vector<1x512xf32>
    %159 = vector.broadcast %158 : vector<1x512xf32> to vector<4x512xf32>
    %160 = arith.mulf %157, %159 : vector<4x512xf32>
    %161 = vector.extract_strided_slice %132 {offsets = [0, 145], sizes = [4, 512], strides = [1, 1]} : vector<4x768xf32> to vector<4x512xf32>
    %162 = vector.extract_strided_slice %0 {offsets = [8, 0], sizes = [1, 512], strides = [1, 1]} : vector<9x512xf32> to vector<1x512xf32>
    %163 = vector.broadcast %162 : vector<1x512xf32> to vector<4x512xf32>
    %164 = arith.mulf %161, %163 : vector<4x512xf32>
    %165 = tpu.concatenate %136, %140, %144, %148, %128, %152, %156, %160, %164 in 0 : vector<4x512xf32>, vector<4x512xf32>, vector<4x512xf32>, vector<4x512xf32>, vector<4x512xf32>, vector<4x512xf32>, vector<4x512xf32>, vector<4x512xf32>, vector<4x512xf32> -> vector<36x512xf32>
    %cst_30 = arith.constant dense<0.000000e+00> : vector<4x512xf32>
    %166 = tpu.matmul %129, %165, %cst_30 {dimension_numbers = #tpu.dot_dimension_numbers<[1], [0], [0], [1], [0, 0, 1, 1], [], []>} : vector<4x36xf32>, vector<36x512xf32>, vector<4x512xf32> -> vector<4x512xf32>
    %167 = vector.broadcast %130 : vector<4x1xf32> to vector<4x512xf32>
    %168 = arith.addf %166, %167 : vector<4x512xf32>
    %cst_31 = arith.constant 0.000000e+00 : f32
    %169 = vector.broadcast %cst_31 : f32 to vector<4x512xf32>
    %170 = arith.maximumf %168, %169 : vector<4x512xf32>
    %c0_32 = arith.constant 0 : index
    %c0_33 = arith.constant 0 : index
    %171 = vector.load %arg1[%c0_32, %c0_33] : memref<8x128xf32, #tpu.memory_space<vmem>>, vector<8x128xf32>
    %c0_34 = arith.constant 0 : index
    %c0_35 = arith.constant 0 : index
    %172 = vector.load %arg15[%c0_34, %c0_35] : memref<8x72xf32, #tpu.memory_space<vmem>>, vector<8x72xf32>
    %c0_36 = arith.constant 0 : index
    %c0_37 = arith.constant 0 : index
    %173 = vector.load %arg16[%c0_36, %c0_37] : memref<8x1xf32, #tpu.memory_space<vmem>>, vector<8x1xf32>
    %cst_38 = arith.constant 0.000000e+00 : f32
    %174 = vector.broadcast %cst_38 : f32 to vector<8x128xf32>
    %175 = tpu.concatenate %174, %171, %174 in 1 : vector<8x128xf32>, vector<8x128xf32>, vector<8x128xf32> -> vector<8x384xf32>
    %176 = vector.extract_strided_slice %175 {offsets = [0, 119], sizes = [8, 128], strides = [1, 1]} : vector<8x384xf32> to vector<8x128xf32>
    %177 = vector.extract_strided_slice %1 {offsets = [0, 0], sizes = [1, 128], strides = [1, 1]} : vector<9x128xf32> to vector<1x128xf32>
    %178 = vector.broadcast %177 : vector<1x128xf32> to vector<8x128xf32>
    %179 = arith.mulf %176, %178 : vector<8x128xf32>
    %180 = vector.extract_strided_slice %175 {offsets = [0, 120], sizes = [8, 128], strides = [1, 1]} : vector<8x384xf32> to vector<8x128xf32>
    %181 = vector.extract_strided_slice %1 {offsets = [1, 0], sizes = [1, 128], strides = [1, 1]} : vector<9x128xf32> to vector<1x128xf32>
    %182 = vector.broadcast %181 : vector<1x128xf32> to vector<8x128xf32>
    %183 = arith.mulf %180, %182 : vector<8x128xf32>
    %184 = vector.extract_strided_slice %175 {offsets = [0, 121], sizes = [8, 128], strides = [1, 1]} : vector<8x384xf32> to vector<8x128xf32>
    %185 = vector.extract_strided_slice %1 {offsets = [2, 0], sizes = [1, 128], strides = [1, 1]} : vector<9x128xf32> to vector<1x128xf32>
    %186 = vector.broadcast %185 : vector<1x128xf32> to vector<8x128xf32>
    %187 = arith.mulf %184, %186 : vector<8x128xf32>
    %188 = vector.extract_strided_slice %175 {offsets = [0, 127], sizes = [8, 128], strides = [1, 1]} : vector<8x384xf32> to vector<8x128xf32>
    %189 = vector.extract_strided_slice %1 {offsets = [3, 0], sizes = [1, 128], strides = [1, 1]} : vector<9x128xf32> to vector<1x128xf32>
    %190 = vector.broadcast %189 : vector<1x128xf32> to vector<8x128xf32>
    %191 = arith.mulf %188, %190 : vector<8x128xf32>
    %192 = vector.extract_strided_slice %175 {offsets = [0, 129], sizes = [8, 128], strides = [1, 1]} : vector<8x384xf32> to vector<8x128xf32>
    %193 = vector.extract_strided_slice %1 {offsets = [5, 0], sizes = [1, 128], strides = [1, 1]} : vector<9x128xf32> to vector<1x128xf32>
    %194 = vector.broadcast %193 : vector<1x128xf32> to vector<8x128xf32>
    %195 = arith.mulf %192, %194 : vector<8x128xf32>
    %196 = vector.extract_strided_slice %175 {offsets = [0, 135], sizes = [8, 128], strides = [1, 1]} : vector<8x384xf32> to vector<8x128xf32>
    %197 = vector.extract_strided_slice %1 {offsets = [6, 0], sizes = [1, 128], strides = [1, 1]} : vector<9x128xf32> to vector<1x128xf32>
    %198 = vector.broadcast %197 : vector<1x128xf32> to vector<8x128xf32>
    %199 = arith.mulf %196, %198 : vector<8x128xf32>
    %200 = vector.extract_strided_slice %175 {offsets = [0, 136], sizes = [8, 128], strides = [1, 1]} : vector<8x384xf32> to vector<8x128xf32>
    %201 = vector.extract_strided_slice %1 {offsets = [7, 0], sizes = [1, 128], strides = [1, 1]} : vector<9x128xf32> to vector<1x128xf32>
    %202 = vector.broadcast %201 : vector<1x128xf32> to vector<8x128xf32>
    %203 = arith.mulf %200, %202 : vector<8x128xf32>
    %204 = vector.extract_strided_slice %175 {offsets = [0, 137], sizes = [8, 128], strides = [1, 1]} : vector<8x384xf32> to vector<8x128xf32>
    %205 = vector.extract_strided_slice %1 {offsets = [8, 0], sizes = [1, 128], strides = [1, 1]} : vector<9x128xf32> to vector<1x128xf32>
    %206 = vector.broadcast %205 : vector<1x128xf32> to vector<8x128xf32>
    %207 = arith.mulf %204, %206 : vector<8x128xf32>
    %208 = tpu.concatenate %179, %183, %187, %191, %171, %195, %199, %203, %207 in 0 : vector<8x128xf32>, vector<8x128xf32>, vector<8x128xf32>, vector<8x128xf32>, vector<8x128xf32>, vector<8x128xf32>, vector<8x128xf32>, vector<8x128xf32>, vector<8x128xf32> -> vector<72x128xf32>
    %cst_39 = arith.constant dense<0.000000e+00> : vector<8x128xf32>
    %209 = tpu.matmul %172, %208, %cst_39 {dimension_numbers = #tpu.dot_dimension_numbers<[1], [0], [0], [1], [0, 0, 1, 1], [], []>} : vector<8x72xf32>, vector<72x128xf32>, vector<8x128xf32> -> vector<8x128xf32>
    %210 = vector.broadcast %173 : vector<8x1xf32> to vector<8x128xf32>
    %211 = arith.addf %209, %210 : vector<8x128xf32>
    %cst_40 = arith.constant 0.000000e+00 : f32
    %212 = vector.broadcast %cst_40 : f32 to vector<8x128xf32>
    %213 = arith.maximumf %211, %212 : vector<8x128xf32>
    %c0_41 = arith.constant 0 : index
    %c0_42 = arith.constant 0 : index
    %214 = vector.load %arg17[%c0_41, %c0_42] : memref<8x72xf32, #tpu.memory_space<vmem>>, vector<8x72xf32>
    %c0_43 = arith.constant 0 : index
    %c0_44 = arith.constant 0 : index
    %215 = vector.load %arg18[%c0_43, %c0_44] : memref<8x1xf32, #tpu.memory_space<vmem>>, vector<8x1xf32>
    %cst_45 = arith.constant 0.000000e+00 : f32
    %216 = vector.broadcast %cst_45 : f32 to vector<8x128xf32>
    %217 = tpu.concatenate %216, %213, %216 in 1 : vector<8x128xf32>, vector<8x128xf32>, vector<8x128xf32> -> vector<8x384xf32>
    %218 = vector.extract_strided_slice %217 {offsets = [0, 119], sizes = [8, 128], strides = [1, 1]} : vector<8x384xf32> to vector<8x128xf32>
    %219 = vector.extract_strided_slice %1 {offsets = [0, 0], sizes = [1, 128], strides = [1, 1]} : vector<9x128xf32> to vector<1x128xf32>
    %220 = vector.broadcast %219 : vector<1x128xf32> to vector<8x128xf32>
    %221 = arith.mulf %218, %220 : vector<8x128xf32>
    %222 = vector.extract_strided_slice %217 {offsets = [0, 120], sizes = [8, 128], strides = [1, 1]} : vector<8x384xf32> to vector<8x128xf32>
    %223 = vector.extract_strided_slice %1 {offsets = [1, 0], sizes = [1, 128], strides = [1, 1]} : vector<9x128xf32> to vector<1x128xf32>
    %224 = vector.broadcast %223 : vector<1x128xf32> to vector<8x128xf32>
    %225 = arith.mulf %222, %224 : vector<8x128xf32>
    %226 = vector.extract_strided_slice %217 {offsets = [0, 121], sizes = [8, 128], strides = [1, 1]} : vector<8x384xf32> to vector<8x128xf32>
    %227 = vector.extract_strided_slice %1 {offsets = [2, 0], sizes = [1, 128], strides = [1, 1]} : vector<9x128xf32> to vector<1x128xf32>
    %228 = vector.broadcast %227 : vector<1x128xf32> to vector<8x128xf32>
    %229 = arith.mulf %226, %228 : vector<8x128xf32>
    %230 = vector.extract_strided_slice %217 {offsets = [0, 127], sizes = [8, 128], strides = [1, 1]} : vector<8x384xf32> to vector<8x128xf32>
    %231 = vector.extract_strided_slice %1 {offsets = [3, 0], sizes = [1, 128], strides = [1, 1]} : vector<9x128xf32> to vector<1x128xf32>
    %232 = vector.broadcast %231 : vector<1x128xf32> to vector<8x128xf32>
    %233 = arith.mulf %230, %232 : vector<8x128xf32>
    %234 = vector.extract_strided_slice %217 {offsets = [0, 129], sizes = [8, 128], strides = [1, 1]} : vector<8x384xf32> to vector<8x128xf32>
    %235 = vector.extract_strided_slice %1 {offsets = [5, 0], sizes = [1, 128], strides = [1, 1]} : vector<9x128xf32> to vector<1x128xf32>
    %236 = vector.broadcast %235 : vector<1x128xf32> to vector<8x128xf32>
    %237 = arith.mulf %234, %236 : vector<8x128xf32>
    %238 = vector.extract_strided_slice %217 {offsets = [0, 135], sizes = [8, 128], strides = [1, 1]} : vector<8x384xf32> to vector<8x128xf32>
    %239 = vector.extract_strided_slice %1 {offsets = [6, 0], sizes = [1, 128], strides = [1, 1]} : vector<9x128xf32> to vector<1x128xf32>
    %240 = vector.broadcast %239 : vector<1x128xf32> to vector<8x128xf32>
    %241 = arith.mulf %238, %240 : vector<8x128xf32>
    %242 = vector.extract_strided_slice %217 {offsets = [0, 136], sizes = [8, 128], strides = [1, 1]} : vector<8x384xf32> to vector<8x128xf32>
    %243 = vector.extract_strided_slice %1 {offsets = [7, 0], sizes = [1, 128], strides = [1, 1]} : vector<9x128xf32> to vector<1x128xf32>
    %244 = vector.broadcast %243 : vector<1x128xf32> to vector<8x128xf32>
    %245 = arith.mulf %242, %244 : vector<8x128xf32>
    %246 = vector.extract_strided_slice %217 {offsets = [0, 137], sizes = [8, 128], strides = [1, 1]} : vector<8x384xf32> to vector<8x128xf32>
    %247 = vector.extract_strided_slice %1 {offsets = [8, 0], sizes = [1, 128], strides = [1, 1]} : vector<9x128xf32> to vector<1x128xf32>
    %248 = vector.broadcast %247 : vector<1x128xf32> to vector<8x128xf32>
    %249 = arith.mulf %246, %248 : vector<8x128xf32>
    %250 = tpu.concatenate %221, %225, %229, %233, %213, %237, %241, %245, %249 in 0 : vector<8x128xf32>, vector<8x128xf32>, vector<8x128xf32>, vector<8x128xf32>, vector<8x128xf32>, vector<8x128xf32>, vector<8x128xf32>, vector<8x128xf32>, vector<8x128xf32> -> vector<72x128xf32>
    %cst_46 = arith.constant dense<0.000000e+00> : vector<8x128xf32>
    %251 = tpu.matmul %214, %250, %cst_46 {dimension_numbers = #tpu.dot_dimension_numbers<[1], [0], [0], [1], [0, 0, 1, 1], [], []>} : vector<8x72xf32>, vector<72x128xf32>, vector<8x128xf32> -> vector<8x128xf32>
    %252 = vector.broadcast %215 : vector<8x1xf32> to vector<8x128xf32>
    %253 = arith.addf %251, %252 : vector<8x128xf32>
    %cst_47 = arith.constant 0.000000e+00 : f32
    %254 = vector.broadcast %cst_47 : f32 to vector<8x128xf32>
    %255 = arith.maximumf %253, %254 : vector<8x128xf32>
    %c0_48 = arith.constant 0 : index
    %c0_49 = arith.constant 0 : index
    %256 = vector.load %arg19[%c0_48, %c0_49] : memref<8x72xf32, #tpu.memory_space<vmem>>, vector<8x72xf32>
    %c0_50 = arith.constant 0 : index
    %c0_51 = arith.constant 0 : index
    %257 = vector.load %arg20[%c0_50, %c0_51] : memref<8x1xf32, #tpu.memory_space<vmem>>, vector<8x1xf32>
    %cst_52 = arith.constant 0.000000e+00 : f32
    %258 = vector.broadcast %cst_52 : f32 to vector<8x128xf32>
    %259 = tpu.concatenate %258, %255, %258 in 1 : vector<8x128xf32>, vector<8x128xf32>, vector<8x128xf32> -> vector<8x384xf32>
    %260 = vector.extract_strided_slice %259 {offsets = [0, 119], sizes = [8, 128], strides = [1, 1]} : vector<8x384xf32> to vector<8x128xf32>
    %261 = vector.extract_strided_slice %1 {offsets = [0, 0], sizes = [1, 128], strides = [1, 1]} : vector<9x128xf32> to vector<1x128xf32>
    %262 = vector.broadcast %261 : vector<1x128xf32> to vector<8x128xf32>
    %263 = arith.mulf %260, %262 : vector<8x128xf32>
    %264 = vector.extract_strided_slice %259 {offsets = [0, 120], sizes = [8, 128], strides = [1, 1]} : vector<8x384xf32> to vector<8x128xf32>
    %265 = vector.extract_strided_slice %1 {offsets = [1, 0], sizes = [1, 128], strides = [1, 1]} : vector<9x128xf32> to vector<1x128xf32>
    %266 = vector.broadcast %265 : vector<1x128xf32> to vector<8x128xf32>
    %267 = arith.mulf %264, %266 : vector<8x128xf32>
    %268 = vector.extract_strided_slice %259 {offsets = [0, 121], sizes = [8, 128], strides = [1, 1]} : vector<8x384xf32> to vector<8x128xf32>
    %269 = vector.extract_strided_slice %1 {offsets = [2, 0], sizes = [1, 128], strides = [1, 1]} : vector<9x128xf32> to vector<1x128xf32>
    %270 = vector.broadcast %269 : vector<1x128xf32> to vector<8x128xf32>
    %271 = arith.mulf %268, %270 : vector<8x128xf32>
    %272 = vector.extract_strided_slice %259 {offsets = [0, 127], sizes = [8, 128], strides = [1, 1]} : vector<8x384xf32> to vector<8x128xf32>
    %273 = vector.extract_strided_slice %1 {offsets = [3, 0], sizes = [1, 128], strides = [1, 1]} : vector<9x128xf32> to vector<1x128xf32>
    %274 = vector.broadcast %273 : vector<1x128xf32> to vector<8x128xf32>
    %275 = arith.mulf %272, %274 : vector<8x128xf32>
    %276 = vector.extract_strided_slice %259 {offsets = [0, 129], sizes = [8, 128], strides = [1, 1]} : vector<8x384xf32> to vector<8x128xf32>
    %277 = vector.extract_strided_slice %1 {offsets = [5, 0], sizes = [1, 128], strides = [1, 1]} : vector<9x128xf32> to vector<1x128xf32>
    %278 = vector.broadcast %277 : vector<1x128xf32> to vector<8x128xf32>
    %279 = arith.mulf %276, %278 : vector<8x128xf32>
    %280 = vector.extract_strided_slice %259 {offsets = [0, 135], sizes = [8, 128], strides = [1, 1]} : vector<8x384xf32> to vector<8x128xf32>
    %281 = vector.extract_strided_slice %1 {offsets = [6, 0], sizes = [1, 128], strides = [1, 1]} : vector<9x128xf32> to vector<1x128xf32>
    %282 = vector.broadcast %281 : vector<1x128xf32> to vector<8x128xf32>
    %283 = arith.mulf %280, %282 : vector<8x128xf32>
    %284 = vector.extract_strided_slice %259 {offsets = [0, 136], sizes = [8, 128], strides = [1, 1]} : vector<8x384xf32> to vector<8x128xf32>
    %285 = vector.extract_strided_slice %1 {offsets = [7, 0], sizes = [1, 128], strides = [1, 1]} : vector<9x128xf32> to vector<1x128xf32>
    %286 = vector.broadcast %285 : vector<1x128xf32> to vector<8x128xf32>
    %287 = arith.mulf %284, %286 : vector<8x128xf32>
    %288 = vector.extract_strided_slice %259 {offsets = [0, 137], sizes = [8, 128], strides = [1, 1]} : vector<8x384xf32> to vector<8x128xf32>
    %289 = vector.extract_strided_slice %1 {offsets = [8, 0], sizes = [1, 128], strides = [1, 1]} : vector<9x128xf32> to vector<1x128xf32>
    %290 = vector.broadcast %289 : vector<1x128xf32> to vector<8x128xf32>
    %291 = arith.mulf %288, %290 : vector<8x128xf32>
    %292 = tpu.concatenate %263, %267, %271, %275, %255, %279, %283, %287, %291 in 0 : vector<8x128xf32>, vector<8x128xf32>, vector<8x128xf32>, vector<8x128xf32>, vector<8x128xf32>, vector<8x128xf32>, vector<8x128xf32>, vector<8x128xf32>, vector<8x128xf32> -> vector<72x128xf32>
    %cst_53 = arith.constant dense<0.000000e+00> : vector<8x128xf32>
    %293 = tpu.matmul %256, %292, %cst_53 {dimension_numbers = #tpu.dot_dimension_numbers<[1], [0], [0], [1], [0, 0, 1, 1], [], []>} : vector<8x72xf32>, vector<72x128xf32>, vector<8x128xf32> -> vector<8x128xf32>
    %294 = vector.broadcast %257 : vector<8x1xf32> to vector<8x128xf32>
    %295 = arith.addf %293, %294 : vector<8x128xf32>
    %cst_54 = arith.constant 0.000000e+00 : f32
    %296 = vector.broadcast %cst_54 : f32 to vector<8x128xf32>
    %297 = arith.maximumf %295, %296 : vector<8x128xf32>
    %c0_55 = arith.constant 0 : index
    %c0_56 = arith.constant 0 : index
    %298 = vector.load %arg21[%c0_55, %c0_56] : memref<8x72xf32, #tpu.memory_space<vmem>>, vector<8x72xf32>
    %c0_57 = arith.constant 0 : index
    %c0_58 = arith.constant 0 : index
    %299 = vector.load %arg22[%c0_57, %c0_58] : memref<8x1xf32, #tpu.memory_space<vmem>>, vector<8x1xf32>
    %cst_59 = arith.constant 0.000000e+00 : f32
    %300 = vector.broadcast %cst_59 : f32 to vector<8x128xf32>
    %301 = tpu.concatenate %300, %297, %300 in 1 : vector<8x128xf32>, vector<8x128xf32>, vector<8x128xf32> -> vector<8x384xf32>
    %302 = vector.extract_strided_slice %301 {offsets = [0, 119], sizes = [8, 128], strides = [1, 1]} : vector<8x384xf32> to vector<8x128xf32>
    %303 = vector.extract_strided_slice %1 {offsets = [0, 0], sizes = [1, 128], strides = [1, 1]} : vector<9x128xf32> to vector<1x128xf32>
    %304 = vector.broadcast %303 : vector<1x128xf32> to vector<8x128xf32>
    %305 = arith.mulf %302, %304 : vector<8x128xf32>
    %306 = vector.extract_strided_slice %301 {offsets = [0, 120], sizes = [8, 128], strides = [1, 1]} : vector<8x384xf32> to vector<8x128xf32>
    %307 = vector.extract_strided_slice %1 {offsets = [1, 0], sizes = [1, 128], strides = [1, 1]} : vector<9x128xf32> to vector<1x128xf32>
    %308 = vector.broadcast %307 : vector<1x128xf32> to vector<8x128xf32>
    %309 = arith.mulf %306, %308 : vector<8x128xf32>
    %310 = vector.extract_strided_slice %301 {offsets = [0, 121], sizes = [8, 128], strides = [1, 1]} : vector<8x384xf32> to vector<8x128xf32>
    %311 = vector.extract_strided_slice %1 {offsets = [2, 0], sizes = [1, 128], strides = [1, 1]} : vector<9x128xf32> to vector<1x128xf32>
    %312 = vector.broadcast %311 : vector<1x128xf32> to vector<8x128xf32>
    %313 = arith.mulf %310, %312 : vector<8x128xf32>
    %314 = vector.extract_strided_slice %301 {offsets = [0, 127], sizes = [8, 128], strides = [1, 1]} : vector<8x384xf32> to vector<8x128xf32>
    %315 = vector.extract_strided_slice %1 {offsets = [3, 0], sizes = [1, 128], strides = [1, 1]} : vector<9x128xf32> to vector<1x128xf32>
    %316 = vector.broadcast %315 : vector<1x128xf32> to vector<8x128xf32>
    %317 = arith.mulf %314, %316 : vector<8x128xf32>
    %318 = vector.extract_strided_slice %301 {offsets = [0, 129], sizes = [8, 128], strides = [1, 1]} : vector<8x384xf32> to vector<8x128xf32>
    %319 = vector.extract_strided_slice %1 {offsets = [5, 0], sizes = [1, 128], strides = [1, 1]} : vector<9x128xf32> to vector<1x128xf32>
    %320 = vector.broadcast %319 : vector<1x128xf32> to vector<8x128xf32>
    %321 = arith.mulf %318, %320 : vector<8x128xf32>
    %322 = vector.extract_strided_slice %301 {offsets = [0, 135], sizes = [8, 128], strides = [1, 1]} : vector<8x384xf32> to vector<8x128xf32>
    %323 = vector.extract_strided_slice %1 {offsets = [6, 0], sizes = [1, 128], strides = [1, 1]} : vector<9x128xf32> to vector<1x128xf32>
    %324 = vector.broadcast %323 : vector<1x128xf32> to vector<8x128xf32>
    %325 = arith.mulf %322, %324 : vector<8x128xf32>
    %326 = vector.extract_strided_slice %301 {offsets = [0, 136], sizes = [8, 128], strides = [1, 1]} : vector<8x384xf32> to vector<8x128xf32>
    %327 = vector.extract_strided_slice %1 {offsets = [7, 0], sizes = [1, 128], strides = [1, 1]} : vector<9x128xf32> to vector<1x128xf32>
    %328 = vector.broadcast %327 : vector<1x128xf32> to vector<8x128xf32>
    %329 = arith.mulf %326, %328 : vector<8x128xf32>
    %330 = vector.extract_strided_slice %301 {offsets = [0, 137], sizes = [8, 128], strides = [1, 1]} : vector<8x384xf32> to vector<8x128xf32>
    %331 = vector.extract_strided_slice %1 {offsets = [8, 0], sizes = [1, 128], strides = [1, 1]} : vector<9x128xf32> to vector<1x128xf32>
    %332 = vector.broadcast %331 : vector<1x128xf32> to vector<8x128xf32>
    %333 = arith.mulf %330, %332 : vector<8x128xf32>
    %334 = tpu.concatenate %305, %309, %313, %317, %297, %321, %325, %329, %333 in 0 : vector<8x128xf32>, vector<8x128xf32>, vector<8x128xf32>, vector<8x128xf32>, vector<8x128xf32>, vector<8x128xf32>, vector<8x128xf32>, vector<8x128xf32>, vector<8x128xf32> -> vector<72x128xf32>
    %cst_60 = arith.constant dense<0.000000e+00> : vector<8x128xf32>
    %335 = tpu.matmul %298, %334, %cst_60 {dimension_numbers = #tpu.dot_dimension_numbers<[1], [0], [0], [1], [0, 0, 1, 1], [], []>} : vector<8x72xf32>, vector<72x128xf32>, vector<8x128xf32> -> vector<8x128xf32>
    %336 = vector.broadcast %299 : vector<8x1xf32> to vector<8x128xf32>
    %337 = arith.addf %335, %336 : vector<8x128xf32>
    %cst_61 = arith.constant 0.000000e+00 : f32
    %338 = vector.broadcast %cst_61 : f32 to vector<8x128xf32>
    %339 = arith.maximumf %337, %338 : vector<8x128xf32>
    %c0_62 = arith.constant 0 : index
    %c0_63 = arith.constant 0 : index
    %340 = vector.load %arg23[%c0_62, %c0_63] : memref<4x8xf32, #tpu.memory_space<vmem>>, vector<4x8xf32>
    %cst_64 = arith.constant dense<0.000000e+00> : vector<4x128xf32>
    %341 = tpu.matmul %340, %339, %cst_64 {dimension_numbers = #tpu.dot_dimension_numbers<[1], [0], [0], [1], [0, 0, 1, 1], [], []>} : vector<4x8xf32>, vector<8x128xf32>, vector<4x128xf32> -> vector<4x128xf32>
    %c0_65 = arith.constant 0 : index
    %c0_66 = arith.constant 0 : index
    %342 = vector.load %arg6[%c0_65, %c0_66] : memref<128x512xf32, #tpu.memory_space<vmem>>, vector<128x512xf32>
    %cst_67 = arith.constant dense<0.000000e+00> : vector<4x512xf32>
    %343 = tpu.matmul %341, %342, %cst_67 {dimension_numbers = #tpu.dot_dimension_numbers<[1], [0], [0], [1], [0, 0, 1, 1], [], []>} : vector<4x128xf32>, vector<128x512xf32>, vector<4x512xf32> -> vector<4x512xf32>
    %344 = arith.addf %170, %343 : vector<4x512xf32>
    %c0_68 = arith.constant 0 : index
    %c0_69 = arith.constant 0 : index
    %345 = vector.load %arg24[%c0_68, %c0_69] : memref<4x1xf32, #tpu.memory_space<vmem>>, vector<4x1xf32>
    %346 = vector.broadcast %345 : vector<4x1xf32> to vector<4x512xf32>
    %347 = arith.addf %344, %346 : vector<4x512xf32>
    %c0_70 = arith.constant 0 : index
    %c0_71 = arith.constant 0 : index
    %348 = vector.load %arg31[%c0_70, %c0_71] : memref<4x512xf32, #tpu.memory_space<vmem>>, vector<4x512xf32>
    tpu.vector_store %arg31[%c0_70, %c0_71], %347 {strides = array<i32>} : memref<4x512xf32, #tpu.memory_space<vmem>>, vector<4x512xf32>,
    %cst_72 = arith.constant 0.000000e+00 : f32
    %349 = vector.broadcast %cst_72 : f32 to vector<4x128xf32>
    %350 = tpu.concatenate %349, %170, %349 in 1 : vector<4x128xf32>, vector<4x512xf32>, vector<4x128xf32> -> vector<4x768xf32>
    %351 = vector.extract_strided_slice %350 {offsets = [0, 111], sizes = [4, 512], strides = [1, 1]} : vector<4x768xf32> to vector<4x512xf32>
    %352 = vector.extract_strided_slice %0 {offsets = [0, 0], sizes = [1, 512], strides = [1, 1]} : vector<9x512xf32> to vector<1x512xf32>
    %353 = vector.broadcast %352 : vector<1x512xf32> to vector<4x512xf32>
    %354 = arith.mulf %351, %353 : vector<4x512xf32>
    %355 = vector.extract_strided_slice %350 {offsets = [0, 112], sizes = [4, 512], strides = [1, 1]} : vector<4x768xf32> to vector<4x512xf32>
    %356 = vector.extract_strided_slice %0 {offsets = [1, 0], sizes = [1, 512], strides = [1, 1]} : vector<9x512xf32> to vector<1x512xf32>
    %357 = vector.broadcast %356 : vector<1x512xf32> to vector<4x512xf32>
    %358 = arith.mulf %355, %357 : vector<4x512xf32>
    %359 = vector.extract_strided_slice %350 {offsets = [0, 113], sizes = [4, 512], strides = [1, 1]} : vector<4x768xf32> to vector<4x512xf32>
    %360 = vector.extract_strided_slice %0 {offsets = [2, 0], sizes = [1, 512], strides = [1, 1]} : vector<9x512xf32> to vector<1x512xf32>
    %361 = vector.broadcast %360 : vector<1x512xf32> to vector<4x512xf32>
    %362 = arith.mulf %359, %361 : vector<4x512xf32>
    %363 = vector.extract_strided_slice %350 {offsets = [0, 127], sizes = [4, 512], strides = [1, 1]} : vector<4x768xf32> to vector<4x512xf32>
    %364 = vector.extract_strided_slice %0 {offsets = [3, 0], sizes = [1, 512], strides = [1, 1]} : vector<9x512xf32> to vector<1x512xf32>
    %365 = vector.broadcast %364 : vector<1x512xf32> to vector<4x512xf32>
    %366 = arith.mulf %363, %365 : vector<4x512xf32>
    %367 = vector.extract_strided_slice %350 {offsets = [0, 129], sizes = [4, 512], strides = [1, 1]} : vector<4x768xf32> to vector<4x512xf32>
    %368 = vector.extract_strided_slice %0 {offsets = [5, 0], sizes = [1, 512], strides = [1, 1]} : vector<9x512xf32> to vector<1x512xf32>
    %369 = vector.broadcast %368 : vector<1x512xf32> to vector<4x512xf32>
    %370 = arith.mulf %367, %369 : vector<4x512xf32>
    %371 = vector.extract_strided_slice %350 {offsets = [0, 143], sizes = [4, 512], strides = [1, 1]} : vector<4x768xf32> to vector<4x512xf32>
    %372 = vector.extract_strided_slice %0 {offsets = [6, 0], sizes = [1, 512], strides = [1, 1]} : vector<9x512xf32> to vector<1x512xf32>
    %373 = vector.broadcast %372 : vector<1x512xf32> to vector<4x512xf32>
    %374 = arith.mulf %371, %373 : vector<4x512xf32>
    %375 = vector.extract_strided_slice %350 {offsets = [0, 144], sizes = [4, 512], strides = [1, 1]} : vector<4x768xf32> to vector<4x512xf32>
    %376 = vector.extract_strided_slice %0 {offsets = [7, 0], sizes = [1, 512], strides = [1, 1]} : vector<9x512xf32> to vector<1x512xf32>
    %377 = vector.broadcast %376 : vector<1x512xf32> to vector<4x512xf32>
    %378 = arith.mulf %375, %377 : vector<4x512xf32>
    %379 = vector.extract_strided_slice %350 {offsets = [0, 145], sizes = [4, 512], strides = [1, 1]} : vector<4x768xf32> to vector<4x512xf32>
    %380 = vector.extract_strided_slice %0 {offsets = [8, 0], sizes = [1, 512], strides = [1, 1]} : vector<9x512xf32> to vector<1x512xf32>
    %381 = vector.broadcast %380 : vector<1x512xf32> to vector<4x512xf32>
    %382 = arith.mulf %379, %381 : vector<4x512xf32>
    %383 = tpu.concatenate %354, %358, %362, %366, %170, %370, %374, %378, %382 in 0 : vector<4x512xf32>, vector<4x512xf32>, vector<4x512xf32>, vector<4x512xf32>, vector<4x512xf32>, vector<4x512xf32>, vector<4x512xf32>, vector<4x512xf32>, vector<4x512xf32> -> vector<36x512xf32>
    %c0_73 = arith.constant 0 : index
    %c0_74 = arith.constant 0 : index
    %384 = vector.load %arg25[%c0_73, %c0_74] : memref<16x36xf32, #tpu.memory_space<vmem>>, vector<16x36xf32>
    %cst_75 = arith.constant dense<0.000000e+00> : vector<16x512xf32>
    %385 = tpu.matmul %384, %383, %cst_75 {dimension_numbers = #tpu.dot_dimension_numbers<[1], [0], [0], [1], [0, 0, 1, 1], [], []>} : vector<16x36xf32>, vector<36x512xf32>, vector<16x512xf32> -> vector<16x512xf32>
    %c0_76 = arith.constant 0 : index
    %c0_77 = arith.constant 0 : index
    %386 = vector.load %arg26[%c0_76, %c0_77] : memref<16x1xf32, #tpu.memory_space<vmem>>, vector<16x1xf32>
    %387 = vector.broadcast %386 : vector<16x1xf32> to vector<16x512xf32>
    %388 = arith.addf %385, %387 : vector<16x512xf32>
    %c0_78 = arith.constant 0 : index
    %c0_79 = arith.constant 0 : index
    %389 = vector.load %arg4[%c0_78, %c0_79] : memref<512x128xf32, #tpu.memory_space<vmem>>, vector<512x128xf32>
    %cst_80 = arith.constant dense<0.000000e+00> : vector<16x128xf32>
    %390 = tpu.matmul %388, %389, %cst_80 {dimension_numbers = #tpu.dot_dimension_numbers<[1], [0], [0], [1], [0, 0, 1, 1], [], []>} : vector<16x512xf32>, vector<512x128xf32>, vector<16x128xf32> -> vector<16x128xf32>
    %391 = vector.extract_strided_slice %390 {offsets = [0, 0], sizes = [8, 128], strides = [1, 1]} : vector<16x128xf32> to vector<8x128xf32>
    %392 = arith.addf %339, %391 : vector<8x128xf32>
    %c0_81 = arith.constant 0 : index
    %c0_82 = arith.constant 0 : index
    %393 = vector.load %arg32[%c0_81, %c0_82] : memref<8x128xf32, #tpu.memory_space<vmem>>, vector<8x128xf32>
    tpu.vector_store %arg32[%c0_81, %c0_82], %392 {strides = array<i32>} : memref<8x128xf32, #tpu.memory_space<vmem>>, vector<8x128xf32>,
    %394 = vector.extract_strided_slice %390 {offsets = [8, 0], sizes = [8, 128], strides = [1, 1]} : vector<16x128xf32> to vector<8x128xf32>
    %c0_83 = arith.constant 0 : index
    %c0_84 = arith.constant 0 : index
    %395 = vector.load %arg27[%c0_83, %c0_84] : memref<16x72xf32, #tpu.memory_space<vmem>>, vector<16x72xf32>
    %c0_85 = arith.constant 0 : index
    %c0_86 = arith.constant 0 : index
    %396 = vector.load %arg28[%c0_85, %c0_86] : memref<16x1xf32, #tpu.memory_space<vmem>>, vector<16x1xf32>
    %cst_87 = arith.constant 0.000000e+00 : f32
    %397 = vector.broadcast %cst_87 : f32 to vector<8x128xf32>
    %398 = tpu.concatenate %397, %394, %397 in 1 : vector<8x128xf32>, vector<8x128xf32>, vector<8x128xf32> -> vector<8x384xf32>
    %399 = vector.extract_strided_slice %398 {offsets = [0, 119], sizes = [8, 128], strides = [1, 1]} : vector<8x384xf32> to vector<8x128xf32>
    %400 = vector.extract_strided_slice %1 {offsets = [0, 0], sizes = [1, 128], strides = [1, 1]} : vector<9x128xf32> to vector<1x128xf32>
    %401 = vector.broadcast %400 : vector<1x128xf32> to vector<8x128xf32>
    %402 = arith.mulf %399, %401 : vector<8x128xf32>
    %403 = vector.extract_strided_slice %398 {offsets = [0, 120], sizes = [8, 128], strides = [1, 1]} : vector<8x384xf32> to vector<8x128xf32>
    %404 = vector.extract_strided_slice %1 {offsets = [1, 0], sizes = [1, 128], strides = [1, 1]} : vector<9x128xf32> to vector<1x128xf32>
    %405 = vector.broadcast %404 : vector<1x128xf32> to vector<8x128xf32>
    %406 = arith.mulf %403, %405 : vector<8x128xf32>
    %407 = vector.extract_strided_slice %398 {offsets = [0, 121], sizes = [8, 128], strides = [1, 1]} : vector<8x384xf32> to vector<8x128xf32>
    %408 = vector.extract_strided_slice %1 {offsets = [2, 0], sizes = [1, 128], strides = [1, 1]} : vector<9x128xf32> to vector<1x128xf32>
    %409 = vector.broadcast %408 : vector<1x128xf32> to vector<8x128xf32>
    %410 = arith.mulf %407, %409 : vector<8x128xf32>
    %411 = vector.extract_strided_slice %398 {offsets = [0, 127], sizes = [8, 128], strides = [1, 1]} : vector<8x384xf32> to vector<8x128xf32>
    %412 = vector.extract_strided_slice %1 {offsets = [3, 0], sizes = [1, 128], strides = [1, 1]} : vector<9x128xf32> to vector<1x128xf32>
    %413 = vector.broadcast %412 : vector<1x128xf32> to vector<8x128xf32>
    %414 = arith.mulf %411, %413 : vector<8x128xf32>
    %415 = vector.extract_strided_slice %398 {offsets = [0, 129], sizes = [8, 128], strides = [1, 1]} : vector<8x384xf32> to vector<8x128xf32>
    %416 = vector.extract_strided_slice %1 {offsets = [5, 0], sizes = [1, 128], strides = [1, 1]} : vector<9x128xf32> to vector<1x128xf32>
    %417 = vector.broadcast %416 : vector<1x128xf32> to vector<8x128xf32>
    %418 = arith.mulf %415, %417 : vector<8x128xf32>
    %419 = vector.extract_strided_slice %398 {offsets = [0, 135], sizes = [8, 128], strides = [1, 1]} : vector<8x384xf32> to vector<8x128xf32>
    %420 = vector.extract_strided_slice %1 {offsets = [6, 0], sizes = [1, 128], strides = [1, 1]} : vector<9x128xf32> to vector<1x128xf32>
    %421 = vector.broadcast %420 : vector<1x128xf32> to vector<8x128xf32>
    %422 = arith.mulf %419, %421 : vector<8x128xf32>
    %423 = vector.extract_strided_slice %398 {offsets = [0, 136], sizes = [8, 128], strides = [1, 1]} : vector<8x384xf32> to vector<8x128xf32>
    %424 = vector.extract_strided_slice %1 {offsets = [7, 0], sizes = [1, 128], strides = [1, 1]} : vector<9x128xf32> to vector<1x128xf32>
    %425 = vector.broadcast %424 : vector<1x128xf32> to vector<8x128xf32>
    %426 = arith.mulf %423, %425 : vector<8x128xf32>
    %427 = vector.extract_strided_slice %398 {offsets = [0, 137], sizes = [8, 128], strides = [1, 1]} : vector<8x384xf32> to vector<8x128xf32>
    %428 = vector.extract_strided_slice %1 {offsets = [8, 0], sizes = [1, 128], strides = [1, 1]} : vector<9x128xf32> to vector<1x128xf32>
    %429 = vector.broadcast %428 : vector<1x128xf32> to vector<8x128xf32>
    %430 = arith.mulf %427, %429 : vector<8x128xf32>
    %431 = tpu.concatenate %402, %406, %410, %414, %394, %418, %422, %426, %430 in 0 : vector<8x128xf32>, vector<8x128xf32>, vector<8x128xf32>, vector<8x128xf32>, vector<8x128xf32>, vector<8x128xf32>, vector<8x128xf32>, vector<8x128xf32>, vector<8x128xf32> -> vector<72x128xf32>
    %cst_88 = arith.constant dense<0.000000e+00> : vector<16x128xf32>
    %432 = tpu.matmul %395, %431, %cst_88 {dimension_numbers = #tpu.dot_dimension_numbers<[1], [0], [0], [1], [0, 0, 1, 1], [], []>} : vector<16x72xf32>, vector<72x128xf32>, vector<16x128xf32> -> vector<16x128xf32>
    %433 = vector.broadcast %396 : vector<16x1xf32> to vector<16x128xf32>
    %434 = arith.addf %432, %433 : vector<16x128xf32>
    %c0_89 = arith.constant 0 : index
    %c0_90 = arith.constant 0 : index
    %435 = vector.load %arg29[%c0_89, %c0_90] : memref<16x72xf32, #tpu.memory_space<vmem>>, vector<16x72xf32>
    %c0_91 = arith.constant 0 : index
    %c0_92 = arith.constant 0 : index
    %436 = vector.load %arg30[%c0_91, %c0_92] : memref<16x1xf32, #tpu.memory_space<vmem>>, vector<16x1xf32>
    %cst_93 = arith.constant 0.000000e+00 : f32
    %437 = vector.broadcast %cst_93 : f32 to vector<8x128xf32>
    %438 = tpu.concatenate %437, %339, %437 in 1 : vector<8x128xf32>, vector<8x128xf32>, vector<8x128xf32> -> vector<8x384xf32>
    %439 = vector.extract_strided_slice %438 {offsets = [0, 119], sizes = [8, 128], strides = [1, 1]} : vector<8x384xf32> to vector<8x128xf32>
    %440 = vector.extract_strided_slice %1 {offsets = [0, 0], sizes = [1, 128], strides = [1, 1]} : vector<9x128xf32> to vector<1x128xf32>
    %441 = vector.broadcast %440 : vector<1x128xf32> to vector<8x128xf32>
    %442 = arith.mulf %439, %441 : vector<8x128xf32>
    %443 = vector.extract_strided_slice %438 {offsets = [0, 120], sizes = [8, 128], strides = [1, 1]} : vector<8x384xf32> to vector<8x128xf32>
    %444 = vector.extract_strided_slice %1 {offsets = [1, 0], sizes = [1, 128], strides = [1, 1]} : vector<9x128xf32> to vector<1x128xf32>
    %445 = vector.broadcast %444 : vector<1x128xf32> to vector<8x128xf32>
    %446 = arith.mulf %443, %445 : vector<8x128xf32>
    %447 = vector.extract_strided_slice %438 {offsets = [0, 121], sizes = [8, 128], strides = [1, 1]} : vector<8x384xf32> to vector<8x128xf32>
    %448 = vector.extract_strided_slice %1 {offsets = [2, 0], sizes = [1, 128], strides = [1, 1]} : vector<9x128xf32> to vector<1x128xf32>
    %449 = vector.broadcast %448 : vector<1x128xf32> to vector<8x128xf32>
    %450 = arith.mulf %447, %449 : vector<8x128xf32>
    %451 = vector.extract_strided_slice %438 {offsets = [0, 127], sizes = [8, 128], strides = [1, 1]} : vector<8x384xf32> to vector<8x128xf32>
    %452 = vector.extract_strided_slice %1 {offsets = [3, 0], sizes = [1, 128], strides = [1, 1]} : vector<9x128xf32> to vector<1x128xf32>
    %453 = vector.broadcast %452 : vector<1x128xf32> to vector<8x128xf32>
    %454 = arith.mulf %451, %453 : vector<8x128xf32>
    %455 = vector.extract_strided_slice %438 {offsets = [0, 129], sizes = [8, 128], strides = [1, 1]} : vector<8x384xf32> to vector<8x128xf32>
    %456 = vector.extract_strided_slice %1 {offsets = [5, 0], sizes = [1, 128], strides = [1, 1]} : vector<9x128xf32> to vector<1x128xf32>
    %457 = vector.broadcast %456 : vector<1x128xf32> to vector<8x128xf32>
    %458 = arith.mulf %455, %457 : vector<8x128xf32>
    %459 = vector.extract_strided_slice %438 {offsets = [0, 135], sizes = [8, 128], strides = [1, 1]} : vector<8x384xf32> to vector<8x128xf32>
    %460 = vector.extract_strided_slice %1 {offsets = [6, 0], sizes = [1, 128], strides = [1, 1]} : vector<9x128xf32> to vector<1x128xf32>
    %461 = vector.broadcast %460 : vector<1x128xf32> to vector<8x128xf32>
    %462 = arith.mulf %459, %461 : vector<8x128xf32>
    %463 = vector.extract_strided_slice %438 {offsets = [0, 136], sizes = [8, 128], strides = [1, 1]} : vector<8x384xf32> to vector<8x128xf32>
    %464 = vector.extract_strided_slice %1 {offsets = [7, 0], sizes = [1, 128], strides = [1, 1]} : vector<9x128xf32> to vector<1x128xf32>
    %465 = vector.broadcast %464 : vector<1x128xf32> to vector<8x128xf32>
    %466 = arith.mulf %463, %465 : vector<8x128xf32>
    %467 = vector.extract_strided_slice %438 {offsets = [0, 137], sizes = [8, 128], strides = [1, 1]} : vector<8x384xf32> to vector<8x128xf32>
    %468 = vector.extract_strided_slice %1 {offsets = [8, 0], sizes = [1, 128], strides = [1, 1]} : vector<9x128xf32> to vector<1x128xf32>
    %469 = vector.broadcast %468 : vector<1x128xf32> to vector<8x128xf32>
    %470 = arith.mulf %467, %469 : vector<8x128xf32>
    %471 = tpu.concatenate %442, %446, %450, %454, %339, %458, %462, %466, %470 in 0 : vector<8x128xf32>, vector<8x128xf32>, vector<8x128xf32>, vector<8x128xf32>, vector<8x128xf32>, vector<8x128xf32>, vector<8x128xf32>, vector<8x128xf32>, vector<8x128xf32> -> vector<72x128xf32>
    %cst_94 = arith.constant dense<0.000000e+00> : vector<16x128xf32>
    %472 = tpu.matmul %435, %471, %cst_94 {dimension_numbers = #tpu.dot_dimension_numbers<[1], [0], [0], [1], [0, 0, 1, 1], [], []>} : vector<16x72xf32>, vector<72x128xf32>, vector<16x128xf32> -> vector<16x128xf32>
    %473 = vector.broadcast %436 : vector<16x1xf32> to vector<16x128xf32>
    %474 = arith.addf %472, %473 : vector<16x128xf32>
    %475 = arith.addf %434, %474 : vector<16x128xf32>
    %c0_95 = arith.constant 0 : index
    %c0_96 = arith.constant 0 : index
    %476 = vector.load %arg5[%c0_95, %c0_96] : memref<128x32xf32, #tpu.memory_space<vmem>>, vector<128x32xf32>
    %cst_97 = arith.constant dense<0.000000e+00> : vector<16x32xf32>
    %477 = tpu.matmul %475, %476, %cst_97 {dimension_numbers = #tpu.dot_dimension_numbers<[1], [0], [0], [1], [0, 0, 1, 1], [], []>} : vector<16x128xf32>, vector<128x32xf32>, vector<16x32xf32> -> vector<16x32xf32>
    %c0_98 = arith.constant 0 : index
    %c0_99 = arith.constant 0 : index
    %478 = vector.load %arg33[%c0_98, %c0_99] : memref<16x32xf32, #tpu.memory_space<vmem>>, vector<16x32xf32>
    tpu.vector_store %arg33[%c0_98, %c0_99], %477 {strides = array<i32>} : memref<16x32xf32, #tpu.memory_space<vmem>>, vector<16x32xf32>,
    return
  }
}

</mosaic_0001>

<llo_original>
// kernel: second_stage_forward.1
$region0: #{second_stage_forward.1}
  #allocation0 [shape = 'u32[]', space=smem, size = 0x4, offset = 0x4, fixed_abs, tag = 'smem constant byte address 0x4 - core index']
  #allocation1 [shape = 'u32[144,128]{1,0:T(1,128)}', space=vmem, size = 0x12000, scoped, tag = 'internal scratch']
  %s0 = inlined_call_operand.smem [shape: u32[34], index: -1, kind: input, shape index: {}]
  %s1 = sld [smem:[%s0]]
  %s2 = scalar_lea.smem %s0, 1
  %s3 = sld [smem:[%s2]]
  %s4 = scalar_lea.smem %s0, 2
  %s5 = sld [smem:[%s4]]
  %s6 = scalar_lea.smem %s0, 3
  %s7 = sld [smem:[%s6]]
  %s8 = scalar_lea.smem %s0, 4
  %s9 = sld [smem:[%s8]]
  %s10 = scalar_lea.smem %s0, 5
  %s11 = sld [smem:[%s10]]
  %s12 = scalar_lea.smem %s0, 6
  %s13 = sld [smem:[%s12]]
  %s14 = scalar_lea.smem %s0, 7
  %s15 = sld [smem:[%s14]]
  %s16 = scalar_lea.smem %s0, 8
  %s17 = sld [smem:[%s16]]
  %s18 = scalar_lea.smem %s0, 9
  %s19 = sld [smem:[%s18]]
  %s20 = scalar_lea.smem %s0, 10
  %s21 = sld [smem:[%s20]]
  %s22 = scalar_lea.smem %s0, 11
  %s23 = sld [smem:[%s22]]
  %s24 = scalar_lea.smem %s0, 12
  %s25 = sld [smem:[%s24]]
  %s26 = scalar_lea.smem %s0, 13
  %s27 = sld [smem:[%s26]]
  %s28 = scalar_lea.smem %s0, 14
  %s29 = sld [smem:[%s28]]
  %s30 = scalar_lea.smem %s0, 15
  %s31 = sld [smem:[%s30]]
  %s32 = scalar_lea.smem %s0, 16
  %s33 = sld [smem:[%s32]]
  %s34 = scalar_lea.smem %s0, 17
  %s35 = sld [smem:[%s34]]
  %s36 = scalar_lea.smem %s0, 18
  %s37 = sld [smem:[%s36]]
  %s38 = scalar_lea.smem %s0, 19
  %s39 = sld [smem:[%s38]]
  %s40 = scalar_lea.smem %s0, 20
  %s41 = sld [smem:[%s40]]
  %s42 = scalar_lea.smem %s0, 21
  %s43 = sld [smem:[%s42]]
  %s44 = scalar_lea.smem %s0, 22
  %s45 = sld [smem:[%s44]]
  %s46 = scalar_lea.smem %s0, 23
  %s47 = sld [smem:[%s46]]
  %s48 = scalar_lea.smem %s0, 24
  %s49 = sld [smem:[%s48]]
  %s50 = scalar_lea.smem %s0, 25
  %s51 = sld [smem:[%s50]]
  %s52 = scalar_lea.smem %s0, 26
  %s53 = sld [smem:[%s52]]
  %s54 = scalar_lea.smem %s0, 27
  %s55 = sld [smem:[%s54]]
  %s56 = scalar_lea.smem %s0, 28
  %s57 = sld [smem:[%s56]]
  %s58 = scalar_lea.smem %s0, 29
  %s59 = sld [smem:[%s58]]
  %s60 = scalar_lea.smem %s0, 30
  %s61 = sld [smem:[%s60]]
  %s62 = scalar_lea.smem %s0, 31
  %s63 = sld [smem:[%s62]]
  %s64 = scalar_lea.smem %s0, 32
  %s65 = sld [smem:[%s64]]
  %s66 = scalar_lea.smem %s0, 33
  %s67 = sld [smem:[%s66]]
  %68 = xla_tuple %s63, %s65, %s67
  %s69 = sld [smem:[#allocation0]]
  $region150: #{second_stage_forward.1} parent=0
    _
  %s71 = ssub.s32 1, %s69
  %s72 = scalar_select 0, %s71, %s69
  // Predicated region
  $region2: #{second_stage_forward.1} parent=0 // pred_check
    _
  $region3: #{second_stage_forward.1} parent=0 // pred_check_branch
    %74 = sbr.rel (0) target = $region5
  $region4: #{second_stage_forward.1} parent=0 // pred_region
    _
  $region5: #{second_stage_forward.1} parent=0 // pred_fallthru
    _
  // Predicated region
  $region6: #{second_stage_forward.1} parent=0 // pred_check
    _
  $region7: #{second_stage_forward.1} parent=0 // pred_check_branch
    %76 = sbr.rel (0) target = $region9
  $region8: #{second_stage_forward.1} parent=0 // pred_region
    _
  $region9: #{second_stage_forward.1} parent=0 // pred_fallthru
    _
  // Predicated region
  $region10: #{second_stage_forward.1} parent=0 // pred_check
    _
  $region11: #{second_stage_forward.1} parent=0 // pred_check_branch
    %78 = sbr.rel (0) target = $region13
  $region12: #{second_stage_forward.1} parent=0 // pred_region
    _
  $region13: #{second_stage_forward.1} parent=0 // pred_fallthru
    _
  // Predicated region
  $region14: #{second_stage_forward.1} parent=0 // pred_check
    _
  $region15: #{second_stage_forward.1} parent=0 // pred_check_branch
    %80 = sbr.rel (0) target = $region17
  $region16: #{second_stage_forward.1} parent=0 // pred_region
    _
  $region17: #{second_stage_forward.1} parent=0 // pred_fallthru
    _
  // Predicated region
  $region18: #{second_stage_forward.1} parent=0 // pred_check
    _
  $region19: #{second_stage_forward.1} parent=0 // pred_check_branch
    %82 = sbr.rel (0) target = $region21
  $region20: #{second_stage_forward.1} parent=0 // pred_region
    _
  $region21: #{second_stage_forward.1} parent=0 // pred_fallthru
    _
  // Predicated region
  $region22: #{second_stage_forward.1} parent=0 // pred_check
    _
  $region23: #{second_stage_forward.1} parent=0 // pred_check_branch
    %84 = sbr.rel (0) target = $region25
  $region24: #{second_stage_forward.1} parent=0 // pred_region
    _
  $region25: #{second_stage_forward.1} parent=0 // pred_fallthru
    _
  // Predicated region
  $region26: #{second_stage_forward.1} parent=0 // pred_check
    _
  $region27: #{second_stage_forward.1} parent=0 // pred_check_branch
    %86 = sbr.rel (0) target = $region29
  $region28: #{second_stage_forward.1} parent=0 // pred_region
    _
  $region29: #{second_stage_forward.1} parent=0 // pred_fallthru
    _
  // Predicated region
  $region30: #{second_stage_forward.1} parent=0 // pred_check
    _
  $region31: #{second_stage_forward.1} parent=0 // pred_check_branch
    %88 = sbr.rel (0) target = $region33
  $region32: #{second_stage_forward.1} parent=0 // pred_region
    _
  $region33: #{second_stage_forward.1} parent=0 // pred_fallthru
    _
  // Predicated region
  $region34: #{second_stage_forward.1} parent=0 // pred_check
    _
  $region35: #{second_stage_forward.1} parent=0 // pred_check_branch
    %90 = sbr.rel (0) target = $region37
  $region36: #{second_stage_forward.1} parent=0 // pred_region
    _
  $region37: #{second_stage_forward.1} parent=0 // pred_fallthru
    _
  // Predicated region
  $region38: #{second_stage_forward.1} parent=0 // pred_check
    _
  $region39: #{second_stage_forward.1} parent=0 // pred_check_branch
    %92 = sbr.rel (0) target = $region41
  $region40: #{second_stage_forward.1} parent=0 // pred_region
    _
  $region41: #{second_stage_forward.1} parent=0 // pred_fallthru
    _
  // Predicated region
  $region42: #{second_stage_forward.1} parent=0 // pred_check
    _
  $region43: #{second_stage_forward.1} parent=0 // pred_check_branch
    %94 = sbr.rel (0) target = $region45
  $region44: #{second_stage_forward.1} parent=0 // pred_region
    _
  $region45: #{second_stage_forward.1} parent=0 // pred_fallthru
    _
  // Predicated region
  $region46: #{second_stage_forward.1} parent=0 // pred_check
    _
  $region47: #{second_stage_forward.1} parent=0 // pred_check_branch
    %96 = sbr.rel (0) target = $region49
  $region48: #{second_stage_forward.1} parent=0 // pred_region
    _
  $region49: #{second_stage_forward.1} parent=0 // pred_fallthru
    _
  // Predicated region
  $region50: #{second_stage_forward.1} parent=0 // pred_check
    _
  $region51: #{second_stage_forward.1} parent=0 // pred_check_branch
    %98 = sbr.rel (0) target = $region53
  $region52: #{second_stage_forward.1} parent=0 // pred_region
    _
  $region53: #{second_stage_forward.1} parent=0 // pred_fallthru
    _
  // Predicated region
  $region54: #{second_stage_forward.1} parent=0 // pred_check
    _
  $region55: #{second_stage_forward.1} parent=0 // pred_check_branch
    %100 = sbr.rel (0) target = $region57
  $region56: #{second_stage_forward.1} parent=0 // pred_region
    _
  $region57: #{second_stage_forward.1} parent=0 // pred_fallthru
    _
  // Predicated region
  $region58: #{second_stage_forward.1} parent=0 // pred_check
    _
  $region59: #{second_stage_forward.1} parent=0 // pred_check_branch
    %102 = sbr.rel (0) target = $region61
  $region60: #{second_stage_forward.1} parent=0 // pred_region
    _
  $region61: #{second_stage_forward.1} parent=0 // pred_fallthru
    _
  // Predicated region
  $region62: #{second_stage_forward.1} parent=0 // pred_check
    _
  $region63: #{second_stage_forward.1} parent=0 // pred_check_branch
    %104 = sbr.rel (0) target = $region65
  $region64: #{second_stage_forward.1} parent=0 // pred_region
    _
  $region65: #{second_stage_forward.1} parent=0 // pred_fallthru
    _
  // Predicated region
  $region66: #{second_stage_forward.1} parent=0 // pred_check
    _
  $region67: #{second_stage_forward.1} parent=0 // pred_check_branch
    %106 = sbr.rel (0) target = $region69
  $region68: #{second_stage_forward.1} parent=0 // pred_region
    _
  $region69: #{second_stage_forward.1} parent=0 // pred_fallthru
    _
  // Predicated region
  $region70: #{second_stage_forward.1} parent=0 // pred_check
    _
  $region71: #{second_stage_forward.1} parent=0 // pred_check_branch
    %108 = sbr.rel (0) target = $region73
  $region72: #{second_stage_forward.1} parent=0 // pred_region
    _
  $region73: #{second_stage_forward.1} parent=0 // pred_fallthru
    _
  // Predicated region
  $region74: #{second_stage_forward.1} parent=0 // pred_check
    _
  $region75: #{second_stage_forward.1} parent=0 // pred_check_branch
    %110 = sbr.rel (0) target = $region77
  $region76: #{second_stage_forward.1} parent=0 // pred_region
    _
  $region77: #{second_stage_forward.1} parent=0 // pred_fallthru
    _
  // Predicated region
  $region78: #{second_stage_forward.1} parent=0 // pred_check
    _
  $region79: #{second_stage_forward.1} parent=0 // pred_check_branch
    %112 = sbr.rel (0) target = $region81
  $region80: #{second_stage_forward.1} parent=0 // pred_region
    _
  $region81: #{second_stage_forward.1} parent=0 // pred_fallthru
    _
  // Predicated region
  $region82: #{second_stage_forward.1} parent=0 // pred_check
    _
  $region83: #{second_stage_forward.1} parent=0 // pred_check_branch
    %114 = sbr.rel (0) target = $region85
  $region84: #{second_stage_forward.1} parent=0 // pred_region
    _
  $region85: #{second_stage_forward.1} parent=0 // pred_fallthru
    _
  // Predicated region
  $region86: #{second_stage_forward.1} parent=0 // pred_check
    _
  $region87: #{second_stage_forward.1} parent=0 // pred_check_branch
    %116 = sbr.rel (0) target = $region89
  $region88: #{second_stage_forward.1} parent=0 // pred_region
    _
  $region89: #{second_stage_forward.1} parent=0 // pred_fallthru
    _
  // Predicated region
  $region90: #{second_stage_forward.1} parent=0 // pred_check
    _
  $region91: #{second_stage_forward.1} parent=0 // pred_check_branch
    %118 = sbr.rel (0) target = $region93
  $region92: #{second_stage_forward.1} parent=0 // pred_region
    _
  $region93: #{second_stage_forward.1} parent=0 // pred_fallthru
    _
  // Predicated region
  $region94: #{second_stage_forward.1} parent=0 // pred_check
    _
  $region95: #{second_stage_forward.1} parent=0 // pred_check_branch
    %120 = sbr.rel (0) target = $region97
  $region96: #{second_stage_forward.1} parent=0 // pred_region
    _
  $region97: #{second_stage_forward.1} parent=0 // pred_fallthru
    _
  // Predicated region
  $region98: #{second_stage_forward.1} parent=0 // pred_check
    _
  $region99: #{second_stage_forward.1} parent=0 // pred_check_branch
    %122 = sbr.rel (0) target = $region101
  $region100: #{second_stage_forward.1} parent=0 // pred_region
    _
  $region101: #{second_stage_forward.1} parent=0 // pred_fallthru
    _
  // Predicated region
  $region102: #{second_stage_forward.1} parent=0 // pred_check
    _
  $region103: #{second_stage_forward.1} parent=0 // pred_check_branch
    %124 = sbr.rel (0) target = $region105
  $region104: #{second_stage_forward.1} parent=0 // pred_region
    _
  $region105: #{second_stage_forward.1} parent=0 // pred_fallthru
    _
  // Predicated region
  $region106: #{second_stage_forward.1} parent=0 // pred_check
    _
  $region107: #{second_stage_forward.1} parent=0 // pred_check_branch
    %126 = sbr.rel (0) target = $region109
  $region108: #{second_stage_forward.1} parent=0 // pred_region
    _
  $region109: #{second_stage_forward.1} parent=0 // pred_fallthru
    _
  // Predicated region
  $region110: #{second_stage_forward.1} parent=0 // pred_check
    _
  $region111: #{second_stage_forward.1} parent=0 // pred_check_branch
    %128 = sbr.rel (0) target = $region113
  $region112: #{second_stage_forward.1} parent=0 // pred_region
    _
  $region113: #{second_stage_forward.1} parent=0 // pred_fallthru
    _
  // Predicated region
  $region114: #{second_stage_forward.1} parent=0 // pred_check
    _
  $region115: #{second_stage_forward.1} parent=0 // pred_check_branch
    %130 = sbr.rel (0) target = $region117
  $region116: #{second_stage_forward.1} parent=0 // pred_region
    _
  $region117: #{second_stage_forward.1} parent=0 // pred_fallthru
    _
  // Predicated region
  $region118: #{second_stage_forward.1} parent=0 // pred_check
    _
  $region119: #{second_stage_forward.1} parent=0 // pred_check_branch
    %132 = sbr.rel (0) target = $region121
  $region120: #{second_stage_forward.1} parent=0 // pred_region
    _
  $region121: #{second_stage_forward.1} parent=0 // pred_fallthru
    _
  // Predicated region
  $region122: #{second_stage_forward.1} parent=0 // pred_check
    _
  $region123: #{second_stage_forward.1} parent=0 // pred_check_branch
    %134 = sbr.rel (0) target = $region125
  $region124: #{second_stage_forward.1} parent=0 // pred_region
    _
  $region125: #{second_stage_forward.1} parent=0 // pred_fallthru
    _
  %v135 = vld [vmem:[%s5] sm:$0xff]
  %v136 = vld [vmem:[%s5 + $0x8] sm:$0xff]
  %v137 = vld [vmem:[%s5 + $0x10] sm:$0xff]
  %v138 = vld [vmem:[%s5 + $0x18] sm:$0xff]
  %v139 = vld [vmem:[%s5 + $0x20] sm:$0x1]
  %v140 = vld [vmem:[%s5 + $0x28] sm:$0x1]
  %v141 = vld [vmem:[%s5 + $0x30] sm:$0x1]
  %v142 = vld [vmem:[%s5 + $0x38] sm:$0x1]
  %v143 = vld [vmem:[%s7] sm:$0xff]
  %v144 = vld [vmem:[%s7 + $0x8] sm:$0x1]
  %v145 = vld [vmem:[%s1] sm:$0xff]
  %v146 = vld [vmem:[%s1 + $0x8] sm:$0xff]
  %v147 = vld [vmem:[%s15] sm:$0xf]
  %v148 = vld [vmem:[%s17] sm:$0xf]
  %v151 = vcombine.high %v145, %v145
  %v152 = vcombine.high %v146, %v146
  %v155 = vlaneseq
  %v156 = vshrl.u32 %v155, 7
  %v157 = vsub.s32 0, %v156
  %v158 = vrot.slane %v135, %v157
  %v159 = vlaneseq
  %v160 = vshrl.u32 %v159, 7
  %v161 = vsub.s32 0, %v160
  %v162 = vrot.slane %v136, %v161
  %v163 = vlaneseq
  %v164 = vshrl.u32 %v163, 7
  %v165 = vsub.s32 0, %v164
  %v166 = vrot.slane %v137, %v165
  %v167 = vlaneseq
  %v168 = vshrl.u32 %v167, 7
  %v169 = vsub.s32 0, %v168
  %v170 = vrot.slane %v138, %v169
  %175 = vrot.lane.b32.xlu0 %v158, 111
  %v176 = vpop.permute.xlu0 %175
  %177 = vrot.lane.b32.xlu0 %v162, 111
  %v178 = vpop.permute.xlu0 %177
  %179 = vrot.lane.b32.xlu0 %v166, 111
  %v180 = vpop.permute.xlu0 %179
  %181 = vrot.lane.b32.xlu0 %v170, 111
  %v182 = vpop.permute.xlu0 %181
  %vm183 = vcmask 908288
  %v184 = vsel %vm183, %v176, %v178
  %v185 = vsel %vm183, %v178, %v180
  %v186 = vsel %vm183, %v180, %v182
  %v192 = vmul.f32 %v176, 0.0
  %v193 = vmul.f32 %v145, %v184
  %v194 = vmul.f32 %v151, %v185
  %v195 = vmul.f32 %v146, %v186
  %v196 = vmul.f32 %v152, %v182
  %v197 = vlaneseq
  %v198 = vshrl.u32 %v197, 7
  %v199 = vsub.s32 1, %v198
  %v200 = vrot.slane %v135, %v199
  %v201 = vlaneseq
  %v202 = vshrl.u32 %v201, 7
  %v203 = vsub.s32 1, %v202
  %v204 = vrot.slane %v136, %v203
  %v205 = vlaneseq
  %v206 = vshrl.u32 %v205, 7
  %v207 = vsub.s32 1, %v206
  %v208 = vrot.slane %v137, %v207
  %v209 = vlaneseq
  %v210 = vshrl.u32 %v209, 7
  %v211 = vsub.s32 1, %v210
  %v212 = vrot.slane %v138, %v211
  %217 = vrot.lane.b32.xlu0 %v200, 112
  %v218 = vpop.permute.xlu0 %217
  %219 = vrot.lane.b32.xlu0 %v204, 112
  %v220 = vpop.permute.xlu0 %219
  %221 = vrot.lane.b32.xlu0 %v208, 112
  %v222 = vpop.permute.xlu0 %221
  %223 = vrot.lane.b32.xlu0 %v212, 112
  %v224 = vpop.permute.xlu0 %223
  %vm225 = vcmask 916480
  %v226 = vsel %vm225, %v218, %v220
  %v227 = vsel %vm225, %v220, %v222
  %v228 = vsel %vm225, %v222, %v224
  %v234 = vmul.f32 %v218, 0.0
  %v235 = vmul.f32 %v145, %v226
  %v236 = vmul.f32 %v151, %v227
  %v237 = vmul.f32 %v146, %v228
  %v238 = vmul.f32 %v152, %v224
  %v239 = vlaneseq
  %v240 = vshrl.u32 %v239, 7
  %v241 = vsub.s32 2, %v240
  %v242 = vrot.slane %v135, %v241
  %v243 = vlaneseq
  %v244 = vshrl.u32 %v243, 7
  %v245 = vsub.s32 2, %v244
  %v246 = vrot.slane %v136, %v245
  %v247 = vlaneseq
  %v248 = vshrl.u32 %v247, 7
  %v249 = vsub.s32 2, %v248
  %v250 = vrot.slane %v137, %v249
  %v251 = vlaneseq
  %v252 = vshrl.u32 %v251, 7
  %v253 = vsub.s32 2, %v252
  %v254 = vrot.slane %v138, %v253
  %259 = vrot.lane.b32.xlu0 %v242, 113
  %v260 = vpop.permute.xlu0 %259
  %261 = vrot.lane.b32.xlu0 %v246, 113
  %v262 = vpop.permute.xlu0 %261
  %263 = vrot.lane.b32.xlu0 %v250, 113
  %v264 = vpop.permute.xlu0 %263
  %265 = vrot.lane.b32.xlu0 %v254, 113
  %v266 = vpop.permute.xlu0 %265
  %vm267 = vcmask 924672
  %v268 = vsel %vm267, %v260, %v262
  %v269 = vsel %vm267, %v262, %v264
  %v270 = vsel %vm267, %v264, %v266
  %v276 = vmul.f32 %v260, 0.0
  %v277 = vmul.f32 %v145, %v268
  %v278 = vmul.f32 %v151, %v269
  %v279 = vmul.f32 %v146, %v270
  %v280 = vmul.f32 %v152, %v266
  %v281 = vlaneseq
  %v282 = vshrl.u32 %v281, 7
  %v283 = vsub.s32 3, %v282
  %v284 = vrot.slane %v135, %v283
  %v285 = vlaneseq
  %v286 = vshrl.u32 %v285, 7
  %v287 = vsub.s32 3, %v286
  %v288 = vrot.slane %v136, %v287
  %v289 = vlaneseq
  %v290 = vshrl.u32 %v289, 7
  %v291 = vsub.s32 3, %v290
  %v292 = vrot.slane %v137, %v291
  %v293 = vlaneseq
  %v294 = vshrl.u32 %v293, 7
  %v295 = vsub.s32 3, %v294
  %v296 = vrot.slane %v138, %v295
  %301 = vrot.lane.b32.xlu0 %v284, 127
  %v302 = vpop.permute.xlu0 %301
  %303 = vrot.lane.b32.xlu0 %v288, 127
  %v304 = vpop.permute.xlu0 %303
  %305 = vrot.lane.b32.xlu0 %v292, 127
  %v306 = vpop.permute.xlu0 %305
  %307 = vrot.lane.b32.xlu0 %v296, 127
  %v308 = vpop.permute.xlu0 %307
  %vm309 = vcmask 1039360
  %v310 = vsel %vm309, %v302, %v304
  %v311 = vsel %vm309, %v304, %v306
  %v312 = vsel %vm309, %v306, %v308
  %v318 = vmul.f32 %v302, 0.0
  %v319 = vmul.f32 %v145, %v310
  %v320 = vmul.f32 %v151, %v311
  %v321 = vmul.f32 %v146, %v312
  %v322 = vmul.f32 %v152, %v308
  %v323 = vlaneseq
  %v324 = vshrl.u32 %v323, 7
  %v325 = vsub.s32 5, %v324
  %v326 = vrot.slane %v135, %v325
  %v327 = vlaneseq
  %v328 = vshrl.u32 %v327, 7
  %v329 = vsub.s32 5, %v328
  %v330 = vrot.slane %v136, %v329
  %v331 = vlaneseq
  %v332 = vshrl.u32 %v331, 7
  %v333 = vsub.s32 5, %v332
  %v334 = vrot.slane %v137, %v333
  %v335 = vlaneseq
  %v336 = vshrl.u32 %v335, 7
  %v337 = vsub.s32 5, %v336
  %v338 = vrot.slane %v138, %v337
  %343 = vrot.lane.b32.xlu0 %v326, 1
  %v344 = vpop.permute.xlu0 %343
  %345 = vrot.lane.b32.xlu0 %v330, 1
  %v346 = vpop.permute.xlu0 %345
  %347 = vrot.lane.b32.xlu0 %v334, 1
  %v348 = vpop.permute.xlu0 %347
  %349 = vrot.lane.b32.xlu0 %v338, 1
  %v350 = vpop.permute.xlu0 %349
  %vm351 = vcmask 7168
  %v352 = vsel %vm351, %v344, %v346
  %v353 = vsel %vm351, %v346, %v348
  %v354 = vsel %vm351, %v348, %v350
  %v360 = vmul.f32 %v145, %v344
  %v361 = vmul.f32 %v151, %v352
  %v362 = vmul.f32 %v146, %v353
  %v363 = vmul.f32 %v152, %v354
  %v364 = vmul.f32 %v350, 0.0
  %v365 = vlaneseq
  %v366 = vshrl.u32 %v365, 7
  %v367 = vsub.s32 6, %v366
  %v368 = vrot.slane %v135, %v367
  %v369 = vlaneseq
  %v370 = vshrl.u32 %v369, 7
  %v371 = vsub.s32 6, %v370
  %v372 = vrot.slane %v136, %v371
  %v373 = vlaneseq
  %v374 = vshrl.u32 %v373, 7
  %v375 = vsub.s32 6, %v374
  %v376 = vrot.slane %v137, %v375
  %v377 = vlaneseq
  %v378 = vshrl.u32 %v377, 7
  %v379 = vsub.s32 6, %v378
  %v380 = vrot.slane %v138, %v379
  %385 = vrot.lane.b32.xlu0 %v368, 15
  %v386 = vpop.permute.xlu0 %385
  %387 = vrot.lane.b32.xlu0 %v372, 15
  %v388 = vpop.permute.xlu0 %387
  %389 = vrot.lane.b32.xlu0 %v376, 15
  %v390 = vpop.permute.xlu0 %389
  %391 = vrot.lane.b32.xlu0 %v380, 15
  %v392 = vpop.permute.xlu0 %391
  %vm393 = vcmask 121856
  %v394 = vsel %vm393, %v386, %v388
  %v395 = vsel %vm393, %v388, %v390
  %v396 = vsel %vm393, %v390, %v392
  %v402 = vmul.f32 %v145, %v386
  %v403 = vmul.f32 %v151, %v394
  %v404 = vmul.f32 %v146, %v395
  %v405 = vmul.f32 %v152, %v396
  %v406 = vmul.f32 %v392, 0.0
  %v407 = vlaneseq
  %v408 = vshrl.u32 %v407, 7
  %v409 = vsub.s32 7, %v408
  %v410 = vrot.slane %v135, %v409
  %v411 = vlaneseq
  %v412 = vshrl.u32 %v411, 7
  %v413 = vsub.s32 7, %v412
  %v414 = vrot.slane %v136, %v413
  %v415 = vlaneseq
  %v416 = vshrl.u32 %v415, 7
  %v417 = vsub.s32 7, %v416
  %v418 = vrot.slane %v137, %v417
  %v419 = vlaneseq
  %v420 = vshrl.u32 %v419, 7
  %v421 = vsub.s32 7, %v420
  %v422 = vrot.slane %v138, %v421
  %427 = vrot.lane.b32.xlu0 %v410, 16
  %v428 = vpop.permute.xlu0 %427
  %429 = vrot.lane.b32.xlu0 %v414, 16
  %v430 = vpop.permute.xlu0 %429
  %431 = vrot.lane.b32.xlu0 %v418, 16
  %v432 = vpop.permute.xlu0 %431
  %433 = vrot.lane.b32.xlu0 %v422, 16
  %v434 = vpop.permute.xlu0 %433
  %vm435 = vcmask 130048
  %v436 = vsel %vm435, %v428, %v430
  %v437 = vsel %vm435, %v430, %v432
  %v438 = vsel %vm435, %v432, %v434
  %v444 = vmul.f32 %v145, %v428
  %v445 = vmul.f32 %v151, %v436
  %v446 = vmul.f32 %v146, %v437
  %v447 = vmul.f32 %v152, %v438
  %v448 = vmul.f32 %v434, 0.0
  %v449 = vlaneseq
  %v450 = vshrl.u32 %v449, 7
  %v451 = vsub.s32 0, %v450
  %v452 = vrot.slane %v139, %v451
  %v453 = vlaneseq
  %v454 = vshrl.u32 %v453, 7
  %v455 = vsub.s32 0, %v454
  %v456 = vrot.slane %v140, %v455
  %v457 = vlaneseq
  %v458 = vshrl.u32 %v457, 7
  %v459 = vsub.s32 0, %v458
  %v460 = vrot.slane %v141, %v459
  %v461 = vlaneseq
  %v462 = vshrl.u32 %v461, 7
  %v463 = vsub.s32 0, %v462
  %v464 = vrot.slane %v142, %v463
  %469 = vrot.lane.b32.xlu0 %v452, 17
  %v470 = vpop.permute.xlu0 %469
  %471 = vrot.lane.b32.xlu0 %v456, 17
  %v472 = vpop.permute.xlu0 %471
  %473 = vrot.lane.b32.xlu0 %v460, 17
  %v474 = vpop.permute.xlu0 %473
  %475 = vrot.lane.b32.xlu0 %v464, 17
  %v476 = vpop.permute.xlu0 %475
  %vm477 = vcmask 138240
  %v478 = vsel %vm477, %v470, %v472
  %v479 = vsel %vm477, %v472, %v474
  %v480 = vsel %vm477, %v474, %v476
  %v486 = vmul.f32 %v145, %v470
  %v487 = vmul.f32 %v151, %v478
  %v488 = vmul.f32 %v146, %v479
  %v489 = vmul.f32 %v152, %v480
  %v490 = vmul.f32 %v476, 0.0
  %v496 = vrot.slane %v234, 4
  %v497 = vrot.slane %v235, 4
  %v498 = vrot.slane %v236, 4
  %v499 = vrot.slane %v237, 4
  %v500 = vrot.slane %v238, 4
  %501 = vrot.lane.b32.xlu0 %v496, 127
  %v502 = vpop.permute.xlu0 %501
  %503 = vrot.lane.b32.xlu0 %v497, 127
  %v504 = vpop.permute.xlu0 %503
  %505 = vrot.lane.b32.xlu0 %v498, 127
  %v506 = vpop.permute.xlu0 %505
  %507 = vrot.lane.b32.xlu0 %v499, 127
  %v508 = vpop.permute.xlu0 %507
  %509 = vrot.lane.b32.xlu0 %v500, 127
  %v510 = vpop.permute.xlu0 %509
  %v511 = vsel %vm309, %v502, %v504
  %v512 = vsel %vm309, %v504, %v506
  %v513 = vsel %vm309, %v506, %v508
  %v514 = vsel %vm309, %v508, %v510
  %525 = vrot.lane.b32.xlu0 %v276, 126
  %v526 = vpop.permute.xlu0 %525
  %527 = vrot.lane.b32.xlu0 %v277, 126
  %v528 = vpop.permute.xlu0 %527
  %529 = vrot.lane.b32.xlu0 %v278, 126
  %v530 = vpop.permute.xlu0 %529
  %531 = vrot.lane.b32.xlu0 %v279, 126
  %v532 = vpop.permute.xlu0 %531
  %533 = vrot.lane.b32.xlu0 %v280, 126
  %v534 = vpop.permute.xlu0 %533
  %vm535 = vcmask 1031168
  %v536 = vsel %vm535, %v526, %v528
  %v537 = vsel %vm535, %v528, %v530
  %v538 = vsel %vm535, %v530, %v532
  %v539 = vsel %vm535, %v532, %v534
  %v550 = vrot.slane %v318, 4
  %v551 = vrot.slane %v319, 4
  %v552 = vrot.slane %v320, 4
  %v553 = vrot.slane %v321, 4
  %v554 = vrot.slane %v322, 4
  %555 = vrot.lane.b32.xlu0 %v550, 112
  %v556 = vpop.permute.xlu0 %555
  %557 = vrot.lane.b32.xlu0 %v551, 112
  %v558 = vpop.permute.xlu0 %557
  %559 = vrot.lane.b32.xlu0 %v552, 112
  %v560 = vpop.permute.xlu0 %559
  %561 = vrot.lane.b32.xlu0 %v553, 112
  %v562 = vpop.permute.xlu0 %561
  %563 = vrot.lane.b32.xlu0 %v554, 112
  %v564 = vpop.permute.xlu0 %563
  %v565 = vsel %vm225, %v556, %v558
  %v566 = vsel %vm225, %v558, %v560
  %v567 = vsel %vm225, %v560, %v562
  %v568 = vsel %vm225, %v562, %v564
  %574 = vrot.lane.b32.xlu0 %v145, 111
  %v575 = vpop.permute.xlu0 %574
  %576 = vrot.lane.b32.xlu0 %v151, 111
  %v577 = vpop.permute.xlu0 %576
  %578 = vrot.lane.b32.xlu0 %v146, 111
  %v579 = vpop.permute.xlu0 %578
  %580 = vrot.lane.b32.xlu0 %v152, 111
  %v581 = vpop.permute.xlu0 %580
  %v582 = vsel %vm183, %v575, %v577
  %v583 = vsel %vm183, %v577, %v579
  %v584 = vsel %vm183, %v579, %v581
  %v595 = vrot.slane %v360, 4
  %v596 = vrot.slane %v361, 4
  %v597 = vrot.slane %v362, 4
  %v598 = vrot.slane %v363, 4
  %v599 = vrot.slane %v364, 4
  %600 = vrot.lane.b32.xlu0 %v595, 110
  %v601 = vpop.permute.xlu0 %600
  %602 = vrot.lane.b32.xlu0 %v596, 110
  %v603 = vpop.permute.xlu0 %602
  %604 = vrot.lane.b32.xlu0 %v597, 110
  %v605 = vpop.permute.xlu0 %604
  %606 = vrot.lane.b32.xlu0 %v598, 110
  %v607 = vpop.permute.xlu0 %606
  %608 = vrot.lane.b32.xlu0 %v599, 110
  %v609 = vpop.permute.xlu0 %608
  %vm610 = vcmask 900096
  %v611 = vsel %vm610, %v601, %v603
  %v612 = vsel %vm610, %v603, %v605
  %v613 = vsel %vm610, %v605, %v607
  %v614 = vsel %vm610, %v607, %v609
  %625 = vrot.lane.b32.xlu0 %v402, 96
  %v626 = vpop.permute.xlu0 %625
  %627 = vrot.lane.b32.xlu0 %v403, 96
  %v628 = vpop.permute.xlu0 %627
  %629 = vrot.lane.b32.xlu0 %v404, 96
  %v630 = vpop.permute.xlu0 %629
  %631 = vrot.lane.b32.xlu0 %v405, 96
  %v632 = vpop.permute.xlu0 %631
  %633 = vrot.lane.b32.xlu0 %v406, 96
  %v634 = vpop.permute.xlu0 %633
  %vm635 = vcmask 785408
  %v636 = vsel %vm635, %v626, %v628
  %v637 = vsel %vm635, %v628, %v630
  %v638 = vsel %vm635, %v630, %v632
  %v639 = vsel %vm635, %v632, %v634
  %v650 = vrot.slane %v444, 4
  %v651 = vrot.slane %v445, 4
  %v652 = vrot.slane %v446, 4
  %v653 = vrot.slane %v447, 4
  %v654 = vrot.slane %v448, 4
  %655 = vrot.lane.b32.xlu0 %v650, 95
  %v656 = vpop.permute.xlu0 %655
  %657 = vrot.lane.b32.xlu0 %v651, 95
  %v658 = vpop.permute.xlu0 %657
  %659 = vrot.lane.b32.xlu0 %v652, 95
  %v660 = vpop.permute.xlu0 %659
  %661 = vrot.lane.b32.xlu0 %v653, 95
  %v662 = vpop.permute.xlu0 %661
  %663 = vrot.lane.b32.xlu0 %v654, 95
  %v664 = vpop.permute.xlu0 %663
  %vm665 = vcmask 777216
  %v666 = vsel %vm665, %v656, %v658
  %v667 = vsel %vm665, %v658, %v660
  %v668 = vsel %vm665, %v660, %v662
  %v669 = vsel %vm665, %v662, %v664
  %680 = vrot.lane.b32.xlu0 %v486, 94
  %v681 = vpop.permute.xlu0 %680
  %682 = vrot.lane.b32.xlu0 %v487, 94
  %v683 = vpop.permute.xlu0 %682
  %684 = vrot.lane.b32.xlu0 %v488, 94
  %v685 = vpop.permute.xlu0 %684
  %686 = vrot.lane.b32.xlu0 %v489, 94
  %v687 = vpop.permute.xlu0 %686
  %688 = vrot.lane.b32.xlu0 %v490, 94
  %v689 = vpop.permute.xlu0 %688
  %vm690 = vcmask 769024
  %v691 = vsel %vm690, %v681, %v683
  %v692 = vsel %vm690, %v683, %v685
  %v693 = vsel %vm690, %v685, %v687
  %v694 = vsel %vm690, %v687, %v689
  %vm695 = vcmask 1043456
  %v696 = vsel %vm695, %v192, %v511
  %v697 = vsel %vm695, %v193, %v512
  %v698 = vsel %vm695, %v194, %v513
  %v699 = vsel %vm695, %v195, %v514
  %v700 = vsel %vm695, %v196, %v510
  %v701 = vsel %vm695, %v536, %v565
  %v702 = vsel %vm695, %v537, %v566
  %v703 = vsel %vm695, %v538, %v567
  %v704 = vsel %vm695, %v539, %v568
  %v705 = vsel %vm695, %v534, %v564
  %v706 = vsel %vm695, %v575, %v601
  %v707 = vsel %vm695, %v582, %v611
  %v708 = vsel %vm695, %v583, %v612
  %v709 = vsel %vm695, %v584, %v613
  %v710 = vsel %vm695, %v581, %v614
  %v711 = vsel %vm695, %v626, %v656
  %v712 = vsel %vm695, %v636, %v666
  %v713 = vsel %vm695, %v637, %v667
  %v714 = vsel %vm695, %v638, %v668
  %v715 = vsel %vm695, %v639, %v669
  %717 = vset.pattern.permute.xlu0 0
  %718 = vperm.xlu0 %717, %v148
  %v719 = vpop.permute.xlu0 %718
  %741 = vrot.lane.b32.xlu0 %v696, 17
  %v742 = vpop.permute.xlu0 %741
  %743 = vrot.lane.b32.xlu0 %v697, 17
  %v744 = vpop.permute.xlu0 %743
  %745 = vrot.lane.b32.xlu0 %v698, 17
  %v746 = vpop.permute.xlu0 %745
  %747 = vrot.lane.b32.xlu0 %v699, 17
  %v748 = vpop.permute.xlu0 %747
  %749 = vrot.lane.b32.xlu0 %v700, 17
  %v750 = vpop.permute.xlu0 %749
  %751 = vrot.lane.b32.xlu0 %v701, 17
  %v752 = vpop.permute.xlu0 %751
  %753 = vrot.lane.b32.xlu0 %v702, 17
  %v754 = vpop.permute.xlu0 %753
  %755 = vrot.lane.b32.xlu0 %v703, 17
  %v756 = vpop.permute.xlu0 %755
  %757 = vrot.lane.b32.xlu0 %v704, 17
  %v758 = vpop.permute.xlu0 %757
  %759 = vrot.lane.b32.xlu0 %v705, 17
  %v760 = vpop.permute.xlu0 %759
  %761 = vrot.lane.b32.xlu0 %v706, 17
  %v762 = vpop.permute.xlu0 %761
  %763 = vrot.lane.b32.xlu0 %v707, 17
  %v764 = vpop.permute.xlu0 %763
  %765 = vrot.lane.b32.xlu0 %v708, 17
  %v766 = vpop.permute.xlu0 %765
  %767 = vrot.lane.b32.xlu0 %v709, 17
  %v768 = vpop.permute.xlu0 %767
  %769 = vrot.lane.b32.xlu0 %v710, 17
  %v770 = vpop.permute.xlu0 %769
  %771 = vrot.lane.b32.xlu0 %v711, 17
  %v772 = vpop.permute.xlu0 %771
  %773 = vrot.lane.b32.xlu0 %v712, 17
  %v774 = vpop.permute.xlu0 %773
  %775 = vrot.lane.b32.xlu0 %v713, 17
  %v776 = vpop.permute.xlu0 %775
  %777 = vrot.lane.b32.xlu0 %v714, 17
  %v778 = vpop.permute.xlu0 %777
  %779 = vrot.lane.b32.xlu0 %v715, 17
  %v780 = vpop.permute.xlu0 %779
  %781 = vrot.lane.b32.xlu0 %v681, 17
  %v782 = vpop.permute.xlu0 %781
  %783 = vrot.lane.b32.xlu0 %v691, 17
  %v784 = vpop.permute.xlu0 %783
  %785 = vrot.lane.b32.xlu0 %v692, 17
  %v786 = vpop.permute.xlu0 %785
  %787 = vrot.lane.b32.xlu0 %v693, 17
  %v788 = vpop.permute.xlu0 %787
  %789 = vrot.lane.b32.xlu0 %v694, 17
  %v790 = vpop.permute.xlu0 %789
  %v791 = vsel %vm477, %v742, %v744
  %v792 = vsel %vm477, %v744, %v746
  %v793 = vsel %vm477, %v746, %v748
  %v794 = vsel %vm477, %v748, %v750
  %v795 = vsel %vm477, %v752, %v754
  %v796 = vsel %vm477, %v754, %v756
  %v797 = vsel %vm477, %v756, %v758
  %v798 = vsel %vm477, %v758, %v760
  %v799 = vsel %vm477, %v762, %v764
  %v800 = vsel %vm477, %v764, %v766
  %v801 = vsel %vm477, %v766, %v768
  %v802 = vsel %vm477, %v768, %v770
  %v803 = vsel %vm477, %v772, %v774
  %v804 = vsel %vm477, %v774, %v776
  %v805 = vsel %vm477, %v776, %v778
  %v806 = vsel %vm477, %v778, %v780
  %v807 = vsel %vm477, %v782, %v784
  %v808 = vsel %vm477, %v784, %v786
  %v809 = vsel %vm477, %v786, %v788
  %v810 = vsel %vm477, %v788, %v790
  %vm827 = vcmask 293888
  %v829 = vsel %vm827, %v147, 0
  %v831 = vsel %vm695, %v807, 0
  %v833 = vsel %vm695, %v808, 0
  %v835 = vsel %vm695, %v809, 0
  %v837 = vsel %vm695, %v810, 0
  %839 = vmatprep.subr.mxu0 %v792
  %840 = vmatpush1.msra.mxu0 %v791
  %841 = vmatprep.subr.mxu0 %v796
  %842 = vmatpush1.msra.mxu0 %v795
  %843 = vmatprep.subr.mxu0 %v800
  %844 = vmatpush1.msra.mxu0 %v799
  %845 = vmatprep.subr.mxu0 %v804
  %846 = vmatpush1.msra.mxu0 %v803
  %847 = vmatprep.subr.mxu0 %v833
  %848 = vmatpush1.msra.mxu0 %v831
  %849 = vmatprep.subr.mxu0 0.0
  %850 = vmatpush1.msra.mxu0 0.0
  %851 = vmatprep.subr.mxu0 0.0
  %852 = vmatpush1.msra.mxu0 0.0
  %853 = vmatprep.subr.mxu0 0.0
  %854 = vmatpush1.msra.mxu0 0.0
  %855 = vmatprep.subr.mxu0 0.0
  %856 = vmatpush1.msra.mxu0 0.0
  %857 = vmatprep.subr.mxu0 0.0
  %858 = vmatpush1.msra.mxu0 0.0
  %859 = vmatprep.subr.mxu0 0.0
  %860 = vmatpush1.msra.mxu0 0.0
  %861 = vmatprep.subr.mxu0 0.0
  %862 = vmatpush1.msra.mxu0 0.0
  %863 = vmatprep.subr.mxu0 0.0
  %864 = vmatpush1.msra.mxu0 0.0
  %865 = vmatprep.subr.mxu0 0.0
  %866 = vmatpush1.msra.mxu0 0.0
  %867 = vmatprep.subr.mxu0 0.0
  %868 = vmatpush1.msra.mxu0 0.0
  %869 = vmatprep.subr.mxu0 0.0
  %870 = vmatpush1.msra.mxu0 0.0
  %871 = vmatprep.subr.mxu0 0.0
  %872 = vmatpush1.msra.mxu0 0.0
  %873 = vmatprep.subr.mxu0 0.0
  %874 = vmatpush1.msra.mxu0 0.0
  %875 = vmatprep.subr.mxu0 0.0
  %876 = vmatpush1.msra.mxu0 0.0
  %877 = vmatprep.subr.mxu0 0.0
  %878 = vmatpush1.msra.mxu0 0.0
  %879 = vmatprep.subr.mxu0 0.0
  %880 = vmatpush1.msra.mxu0 0.0
  %881 = vmatprep.subr.mxu0 0.0
  %882 = vmatpush1.msra.mxu0 0.0
  %883 = vmatprep.subr.mxu0 0.0
  %884 = vmatpush1.msra.mxu0 0.0
  %885 = vmatprep.subr.mxu0 0.0
  %886 = vmatpush1.msra.mxu0 0.0
  %887 = vmatprep.subr.mxu0 0.0
  %888 = vmatpush1.msra.mxu0 0.0
  %889 = vmatprep.subr.mxu0 0.0
  %890 = vmatpush1.msra.mxu0 0.0
  %891 = vmatprep.subr.mxu0 0.0
  %892 = vmatpush1.msra.mxu0 0.0
  %893 = vmatprep.subr.mxu0 0.0
  %894 = vmatpush1.msra.mxu0 0.0
  %895 = vmatprep.subr.mxu0 0.0
  %896 = vmatpush1.msra.mxu0 0.0
  %897 = vmatprep.subr.mxu0 0.0
  %898 = vmatpush1.msra.mxu0 0.0
  %899 = vmatprep.subr.mxu0 0.0
  %900 = vmatpush1.msra.mxu0 0.0
  %901 = vmatprep.subr.mxu0 0.0
  %902 = vmatpush1.msra.mxu0 0.0
  %903 = vmatprep.mubr.f32.mxu0 0.0
  %904 = vmatmul.mubr.f32.gmra.mrb[0].mxu0 %v829
  %v905 = vpop.f32.mrb[0].mxu0
  %v906 = vadd.f32 %v719, %v905
  %v907 = vpop.f32.mrb[0].mxu0
  %v908 = vadd.f32 %v719, %v907
  %909 = vdwg.mxu0
  %910 = vmatprep.subr.mxu0 %v794
  %911 = vmatpush1.msra.mxu0 %v793
  %912 = vmatprep.subr.mxu0 %v798
  %913 = vmatpush1.msra.mxu0 %v797
  %914 = vmatprep.subr.mxu0 %v802
  %915 = vmatpush1.msra.mxu0 %v801
  %916 = vmatprep.subr.mxu0 %v806
  %917 = vmatpush1.msra.mxu0 %v805
  %918 = vmatprep.subr.mxu0 %v837
  %919 = vmatpush1.msra.mxu0 %v835
  %920 = vmatprep.subr.mxu0 0.0
  %921 = vmatpush1.msra.mxu0 0.0
  %922 = vmatprep.subr.mxu0 0.0
  %923 = vmatpush1.msra.mxu0 0.0
  %924 = vmatprep.subr.mxu0 0.0
  %925 = vmatpush1.msra.mxu0 0.0
  %926 = vmatprep.subr.mxu0 0.0
  %927 = vmatpush1.msra.mxu0 0.0
  %928 = vmatprep.subr.mxu0 0.0
  %929 = vmatpush1.msra.mxu0 0.0
  %930 = vmatprep.subr.mxu0 0.0
  %931 = vmatpush1.msra.mxu0 0.0
  %932 = vmatprep.subr.mxu0 0.0
  %933 = vmatpush1.msra.mxu0 0.0
  %934 = vmatprep.subr.mxu0 0.0
  %935 = vmatpush1.msra.mxu0 0.0
  %936 = vmatprep.subr.mxu0 0.0
  %937 = vmatpush1.msra.mxu0 0.0
  %938 = vmatprep.subr.mxu0 0.0
  %939 = vmatpush1.msra.mxu0 0.0
  %940 = vmatprep.subr.mxu0 0.0
  %941 = vmatpush1.msra.mxu0 0.0
  %942 = vmatprep.subr.mxu0 0.0
  %943 = vmatpush1.msra.mxu0 0.0
  %944 = vmatprep.subr.mxu0 0.0
  %945 = vmatpush1.msra.mxu0 0.0
  %946 = vmatprep.subr.mxu0 0.0
  %947 = vmatpush1.msra.mxu0 0.0
  %948 = vmatprep.subr.mxu0 0.0
  %949 = vmatpush1.msra.mxu0 0.0
  %950 = vmatprep.subr.mxu0 0.0
  %951 = vmatpush1.msra.mxu0 0.0
  %952 = vmatprep.subr.mxu0 0.0
  %953 = vmatpush1.msra.mxu0 0.0
  %954 = vmatprep.subr.mxu0 0.0
  %955 = vmatpush1.msra.mxu0 0.0
  %956 = vmatprep.subr.mxu0 0.0
  %957 = vmatpush1.msra.mxu0 0.0
  %958 = vmatprep.subr.mxu0 0.0
  %959 = vmatpush1.msra.mxu0 0.0
  %960 = vmatprep.subr.mxu0 0.0
  %961 = vmatpush1.msra.mxu0 0.0
  %962 = vmatprep.subr.mxu0 0.0
  %963 = vmatpush1.msra.mxu0 0.0
  %964 = vmatprep.subr.mxu0 0.0
  %965 = vmatpush1.msra.mxu0 0.0
  %966 = vmatprep.subr.mxu0 0.0
  %967 = vmatpush1.msra.mxu0 0.0
  %968 = vmatprep.subr.mxu0 0.0
  %969 = vmatpush1.msra.mxu0 0.0
  %970 = vmatprep.subr.mxu0 0.0
  %971 = vmatpush1.msra.mxu0 0.0
  %972 = vmatprep.subr.mxu0 0.0
  %973 = vmatpush1.msra.mxu0 0.0
  %974 = vmatprep.mubr.f32.mxu0 0.0
  %975 = vmatmul.mubr.f32.gmra.mrb[0].mxu0 %v829
  %v976 = vpop.f32.mrb[0].mxu0
  %v977 = vadd.f32 %v719, %v976
  %v978 = vpop.f32.mrb[0].mxu0
  %v979 = vadd.f32 %v719, %v978
  %980 = vdwg.mxu0
  %v981 = vmax.f32 %v906, 0.0
  %v982 = vmax.f32 %v908, 0.0
  %v983 = vmax.f32 %v977, 0.0
  %v984 = vmax.f32 %v979, 0.0
  %v985 = vld [vmem:[%s19] sm:$0xf]
  %v986 = vld [vmem:[%s21] sm:$0xf]
  %v987 = vmul.f32 %v981, %v184
  %v988 = vmul.f32 %v982, %v185
  %v989 = vmul.f32 %v983, %v186
  %v990 = vmul.f32 %v984, %v182
  %v991 = vmul.f32 %v981, %v226
  %v992 = vmul.f32 %v982, %v227
  %v993 = vmul.f32 %v983, %v228
  %v994 = vmul.f32 %v984, %v224
  %v995 = vmul.f32 %v981, %v268
  %v996 = vmul.f32 %v982, %v269
  %v997 = vmul.f32 %v983, %v270
  %v998 = vmul.f32 %v984, %v266
  %v999 = vmul.f32 %v981, %v310
  %v1000 = vmul.f32 %v982, %v311
  %v1001 = vmul.f32 %v983, %v312
  %v1002 = vmul.f32 %v984, %v308
  %v1003 = vmul.f32 %v981, %v344
  %v1004 = vmul.f32 %v982, %v352
  %v1005 = vmul.f32 %v983, %v353
  %v1006 = vmul.f32 %v984, %v354
  %v1007 = vmul.f32 %v981, %v386
  %v1008 = vmul.f32 %v982, %v394
  %v1009 = vmul.f32 %v983, %v395
  %v1010 = vmul.f32 %v984, %v396
  %v1011 = vmul.f32 %v981, %v428
  %v1012 = vmul.f32 %v982, %v436
  %v1013 = vmul.f32 %v983, %v437
  %v1014 = vmul.f32 %v984, %v438
  %v1015 = vmul.f32 %v981, %v470
  %v1016 = vmul.f32 %v982, %v478
  %v1017 = vmul.f32 %v983, %v479
  %v1018 = vmul.f32 %v984, %v480
  %v1023 = vrot.slane %v991, 4
  %v1024 = vrot.slane %v992, 4
  %v1025 = vrot.slane %v993, 4
  %v1026 = vrot.slane %v994, 4
  %1027 = vrot.lane.b32.xlu0 %v1023, 127
  %v1028 = vpop.permute.xlu0 %1027
  %1029 = vrot.lane.b32.xlu0 %v1024, 127
  %v1030 = vpop.permute.xlu0 %1029
  %1031 = vrot.lane.b32.xlu0 %v1025, 127
  %v1032 = vpop.permute.xlu0 %1031
  %1033 = vrot.lane.b32.xlu0 %v1026, 127
  %v1034 = vpop.permute.xlu0 %1033
  %v1035 = vsel %vm309, %v502, %v1028
  %v1036 = vsel %vm309, %v1028, %v1030
  %v1037 = vsel %vm309, %v1030, %v1032
  %v1038 = vsel %vm309, %v1032, %v1034
  %1048 = vrot.lane.b32.xlu0 %v995, 126
  %v1049 = vpop.permute.xlu0 %1048
  %1050 = vrot.lane.b32.xlu0 %v996, 126
  %v1051 = vpop.permute.xlu0 %1050
  %1052 = vrot.lane.b32.xlu0 %v997, 126
  %v1053 = vpop.permute.xlu0 %1052
  %1054 = vrot.lane.b32.xlu0 %v998, 126
  %v1055 = vpop.permute.xlu0 %1054
  %v1056 = vsel %vm535, %v526, %v1049
  %v1057 = vsel %vm535, %v1049, %v1051
  %v1058 = vsel %vm535, %v1051, %v1053
  %v1059 = vsel %vm535, %v1053, %v1055
  %v1069 = vrot.slane %v999, 4
  %v1070 = vrot.slane %v1000, 4
  %v1071 = vrot.slane %v1001, 4
  %v1072 = vrot.slane %v1002, 4
  %1073 = vrot.lane.b32.xlu0 %v1069, 112
  %v1074 = vpop.permute.xlu0 %1073
  %1075 = vrot.lane.b32.xlu0 %v1070, 112
  %v1076 = vpop.permute.xlu0 %1075
  %1077 = vrot.lane.b32.xlu0 %v1071, 112
  %v1078 = vpop.permute.xlu0 %1077
  %1079 = vrot.lane.b32.xlu0 %v1072, 112
  %v1080 = vpop.permute.xlu0 %1079
  %v1081 = vsel %vm225, %v556, %v1074
  %v1082 = vsel %vm225, %v1074, %v1076
  %v1083 = vsel %vm225, %v1076, %v1078
  %v1084 = vsel %vm225, %v1078, %v1080
  %1094 = vrot.lane.b32.xlu0 %v981, 111
  %v1095 = vpop.permute.xlu0 %1094
  %1096 = vrot.lane.b32.xlu0 %v982, 111
  %v1097 = vpop.permute.xlu0 %1096
  %1098 = vrot.lane.b32.xlu0 %v983, 111
  %v1099 = vpop.permute.xlu0 %1098
  %1100 = vrot.lane.b32.xlu0 %v984, 111
  %v1101 = vpop.permute.xlu0 %1100
  %v1102 = vsel %vm183, %v1095, %v1097
  %v1103 = vsel %vm183, %v1097, %v1099
  %v1104 = vsel %vm183, %v1099, %v1101
  %v1114 = vrot.slane %v1003, 4
  %v1115 = vrot.slane %v1004, 4
  %v1116 = vrot.slane %v1005, 4
  %v1117 = vrot.slane %v1006, 4
  %1118 = vrot.lane.b32.xlu0 %v1114, 110
  %v1119 = vpop.permute.xlu0 %1118
  %1120 = vrot.lane.b32.xlu0 %v1115, 110
  %v1121 = vpop.permute.xlu0 %1120
  %1122 = vrot.lane.b32.xlu0 %v1116, 110
  %v1123 = vpop.permute.xlu0 %1122
  %1124 = vrot.lane.b32.xlu0 %v1117, 110
  %v1125 = vpop.permute.xlu0 %1124
  %v1126 = vsel %vm610, %v1119, %v1121
  %v1127 = vsel %vm610, %v1121, %v1123
  %v1128 = vsel %vm610, %v1123, %v1125
  %v1129 = vsel %vm610, %v1125, %v609
  %1139 = vrot.lane.b32.xlu0 %v1007, 96
  %v1140 = vpop.permute.xlu0 %1139
  %1141 = vrot.lane.b32.xlu0 %v1008, 96
  %v1142 = vpop.permute.xlu0 %1141
  %1143 = vrot.lane.b32.xlu0 %v1009, 96
  %v1144 = vpop.permute.xlu0 %1143
  %1145 = vrot.lane.b32.xlu0 %v1010, 96
  %v1146 = vpop.permute.xlu0 %1145
  %v1147 = vsel %vm635, %v1140, %v1142
  %v1148 = vsel %vm635, %v1142, %v1144
  %v1149 = vsel %vm635, %v1144, %v1146
  %v1150 = vsel %vm635, %v1146, %v634
  %v1160 = vrot.slane %v1011, 4
  %v1161 = vrot.slane %v1012, 4
  %v1162 = vrot.slane %v1013, 4
  %v1163 = vrot.slane %v1014, 4
  %1164 = vrot.lane.b32.xlu0 %v1160, 95
  %v1165 = vpop.permute.xlu0 %1164
  %1166 = vrot.lane.b32.xlu0 %v1161, 95
  %v1167 = vpop.permute.xlu0 %1166
  %1168 = vrot.lane.b32.xlu0 %v1162, 95
  %v1169 = vpop.permute.xlu0 %1168
  %1170 = vrot.lane.b32.xlu0 %v1163, 95
  %v1171 = vpop.permute.xlu0 %1170
  %v1172 = vsel %vm665, %v1165, %v1167
  %v1173 = vsel %vm665, %v1167, %v1169
  %v1174 = vsel %vm665, %v1169, %v1171
  %v1175 = vsel %vm665, %v1171, %v664
  %1185 = vrot.lane.b32.xlu0 %v1015, 94
  %v1186 = vpop.permute.xlu0 %1185
  %1187 = vrot.lane.b32.xlu0 %v1016, 94
  %v1188 = vpop.permute.xlu0 %1187
  %1189 = vrot.lane.b32.xlu0 %v1017, 94
  %v1190 = vpop.permute.xlu0 %1189
  %1191 = vrot.lane.b32.xlu0 %v1018, 94
  %v1192 = vpop.permute.xlu0 %1191
  %v1193 = vsel %vm690, %v1186, %v1188
  %v1194 = vsel %vm690, %v1188, %v1190
  %v1195 = vsel %vm690, %v1190, %v1192
  %v1196 = vsel %vm690, %v1192, %v689
  %v1197 = vsel %vm695, %v192, %v1035
  %v1198 = vsel %vm695, %v987, %v1036
  %v1199 = vsel %vm695, %v988, %v1037
  %v1200 = vsel %vm695, %v989, %v1038
  %v1201 = vsel %vm695, %v990, %v1034
  %v1202 = vsel %vm695, %v1056, %v1081
  %v1203 = vsel %vm695, %v1057, %v1082
  %v1204 = vsel %vm695, %v1058, %v1083
  %v1205 = vsel %vm695, %v1059, %v1084
  %v1206 = vsel %vm695, %v1055, %v1080
  %v1207 = vsel %vm695, %v1095, %v1119
  %v1208 = vsel %vm695, %v1102, %v1126
  %v1209 = vsel %vm695, %v1103, %v1127
  %v1210 = vsel %vm695, %v1104, %v1128
  %v1211 = vsel %vm695, %v1101, %v1129
  %v1212 = vsel %vm695, %v1140, %v1165
  %v1213 = vsel %vm695, %v1147, %v1172
  %v1214 = vsel %vm695, %v1148, %v1173
  %v1215 = vsel %vm695, %v1149, %v1174
  %v1216 = vsel %vm695, %v1150, %v1175
  %1218 = vset.pattern.permute.xlu0 0
  %1219 = vperm.xlu0 %1218, %v986
  %v1220 = vpop.permute.xlu0 %1219
  %1242 = vrot.lane.b32.xlu0 %v1197, 17
  %v1243 = vpop.permute.xlu0 %1242
  %1244 = vrot.lane.b32.xlu0 %v1198, 17
  %v1245 = vpop.permute.xlu0 %1244
  %1246 = vrot.lane.b32.xlu0 %v1199, 17
  %v1247 = vpop.permute.xlu0 %1246
  %1248 = vrot.lane.b32.xlu0 %v1200, 17
  %v1249 = vpop.permute.xlu0 %1248
  %1250 = vrot.lane.b32.xlu0 %v1201, 17
  %v1251 = vpop.permute.xlu0 %1250
  %1252 = vrot.lane.b32.xlu0 %v1202, 17
  %v1253 = vpop.permute.xlu0 %1252
  %1254 = vrot.lane.b32.xlu0 %v1203, 17
  %v1255 = vpop.permute.xlu0 %1254
  %1256 = vrot.lane.b32.xlu0 %v1204, 17
  %v1257 = vpop.permute.xlu0 %1256
  %1258 = vrot.lane.b32.xlu0 %v1205, 17
  %v1259 = vpop.permute.xlu0 %1258
  %1260 = vrot.lane.b32.xlu0 %v1206, 17
  %v1261 = vpop.permute.xlu0 %1260
  %1262 = vrot.lane.b32.xlu0 %v1207, 17
  %v1263 = vpop.permute.xlu0 %1262
  %1264 = vrot.lane.b32.xlu0 %v1208, 17
  %v1265 = vpop.permute.xlu0 %1264
  %1266 = vrot.lane.b32.xlu0 %v1209, 17
  %v1267 = vpop.permute.xlu0 %1266
  %1268 = vrot.lane.b32.xlu0 %v1210, 17
  %v1269 = vpop.permute.xlu0 %1268
  %1270 = vrot.lane.b32.xlu0 %v1211, 17
  %v1271 = vpop.permute.xlu0 %1270
  %1272 = vrot.lane.b32.xlu0 %v1212, 17
  %v1273 = vpop.permute.xlu0 %1272
  %1274 = vrot.lane.b32.xlu0 %v1213, 17
  %v1275 = vpop.permute.xlu0 %1274
  %1276 = vrot.lane.b32.xlu0 %v1214, 17
  %v1277 = vpop.permute.xlu0 %1276
  %1278 = vrot.lane.b32.xlu0 %v1215, 17
  %v1279 = vpop.permute.xlu0 %1278
  %1280 = vrot.lane.b32.xlu0 %v1216, 17
  %v1281 = vpop.permute.xlu0 %1280
  %1282 = vrot.lane.b32.xlu0 %v1186, 17
  %v1283 = vpop.permute.xlu0 %1282
  %1284 = vrot.lane.b32.xlu0 %v1193, 17
  %v1285 = vpop.permute.xlu0 %1284
  %1286 = vrot.lane.b32.xlu0 %v1194, 17
  %v1287 = vpop.permute.xlu0 %1286
  %1288 = vrot.lane.b32.xlu0 %v1195, 17
  %v1289 = vpop.permute.xlu0 %1288
  %1290 = vrot.lane.b32.xlu0 %v1196, 17
  %v1291 = vpop.permute.xlu0 %1290
  %v1292 = vsel %vm477, %v1243, %v1245
  %v1293 = vsel %vm477, %v1245, %v1247
  %v1294 = vsel %vm477, %v1247, %v1249
  %v1295 = vsel %vm477, %v1249, %v1251
  %v1296 = vsel %vm477, %v1253, %v1255
  %v1297 = vsel %vm477, %v1255, %v1257
  %v1298 = vsel %vm477, %v1257, %v1259
  %v1299 = vsel %vm477, %v1259, %v1261
  %v1300 = vsel %vm477, %v1263, %v1265
  %v1301 = vsel %vm477, %v1265, %v1267
  %v1302 = vsel %vm477, %v1267, %v1269
  %v1303 = vsel %vm477, %v1269, %v1271
  %v1304 = vsel %vm477, %v1273, %v1275
  %v1305 = vsel %vm477, %v1275, %v1277
  %v1306 = vsel %vm477, %v1277, %v1279
  %v1307 = vsel %vm477, %v1279, %v1281
  %v1308 = vsel %vm477, %v1283, %v1285
  %v1309 = vsel %vm477, %v1285, %v1287
  %v1310 = vsel %vm477, %v1287, %v1289
  %v1311 = vsel %vm477, %v1289, %v1291
  %v1329 = vsel %vm827, %v985, 0
  %v1331 = vsel %vm695, %v1308, 0
  %v1333 = vsel %vm695, %v1309, 0
  %v1335 = vsel %vm695, %v1310, 0
  %v1337 = vsel %vm695, %v1311, 0
  %1339 = vmatprep.subr.mxu0 %v1293
  %1340 = vmatpush1.msra.mxu0 %v1292
  %1341 = vmatprep.subr.mxu0 %v1297
  %1342 = vmatpush1.msra.mxu0 %v1296
  %1343 = vmatprep.subr.mxu0 %v1301
  %1344 = vmatpush1.msra.mxu0 %v1300
  %1345 = vmatprep.subr.mxu0 %v1305
  %1346 = vmatpush1.msra.mxu0 %v1304
  %1347 = vmatprep.subr.mxu0 %v1333
  %1348 = vmatpush1.msra.mxu0 %v1331
  %1349 = vmatprep.subr.mxu0 0.0
  %1350 = vmatpush1.msra.mxu0 0.0
  %1351 = vmatprep.subr.mxu0 0.0
  %1352 = vmatpush1.msra.mxu0 0.0
  %1353 = vmatprep.subr.mxu0 0.0
  %1354 = vmatpush1.msra.mxu0 0.0
  %1355 = vmatprep.subr.mxu0 0.0
  %1356 = vmatpush1.msra.mxu0 0.0
  %1357 = vmatprep.subr.mxu0 0.0
  %1358 = vmatpush1.msra.mxu0 0.0
  %1359 = vmatprep.subr.mxu0 0.0
  %1360 = vmatpush1.msra.mxu0 0.0
  %1361 = vmatprep.subr.mxu0 0.0
  %1362 = vmatpush1.msra.mxu0 0.0
  %1363 = vmatprep.subr.mxu0 0.0
  %1364 = vmatpush1.msra.mxu0 0.0
  %1365 = vmatprep.subr.mxu0 0.0
  %1366 = vmatpush1.msra.mxu0 0.0
  %1367 = vmatprep.subr.mxu0 0.0
  %1368 = vmatpush1.msra.mxu0 0.0
  %1369 = vmatprep.subr.mxu0 0.0
  %1370 = vmatpush1.msra.mxu0 0.0
  %1371 = vmatprep.subr.mxu0 0.0
  %1372 = vmatpush1.msra.mxu0 0.0
  %1373 = vmatprep.subr.mxu0 0.0
  %1374 = vmatpush1.msra.mxu0 0.0
  %1375 = vmatprep.subr.mxu0 0.0
  %1376 = vmatpush1.msra.mxu0 0.0
  %1377 = vmatprep.subr.mxu0 0.0
  %1378 = vmatpush1.msra.mxu0 0.0
  %1379 = vmatprep.subr.mxu0 0.0
  %1380 = vmatpush1.msra.mxu0 0.0
  %1381 = vmatprep.subr.mxu0 0.0
  %1382 = vmatpush1.msra.mxu0 0.0
  %1383 = vmatprep.subr.mxu0 0.0
  %1384 = vmatpush1.msra.mxu0 0.0
  %1385 = vmatprep.subr.mxu0 0.0
  %1386 = vmatpush1.msra.mxu0 0.0
  %1387 = vmatprep.subr.mxu0 0.0
  %1388 = vmatpush1.msra.mxu0 0.0
  %1389 = vmatprep.subr.mxu0 0.0
  %1390 = vmatpush1.msra.mxu0 0.0
  %1391 = vmatprep.subr.mxu0 0.0
  %1392 = vmatpush1.msra.mxu0 0.0
  %1393 = vmatprep.subr.mxu0 0.0
  %1394 = vmatpush1.msra.mxu0 0.0
  %1395 = vmatprep.subr.mxu0 0.0
  %1396 = vmatpush1.msra.mxu0 0.0
  %1397 = vmatprep.subr.mxu0 0.0
  %1398 = vmatpush1.msra.mxu0 0.0
  %1399 = vmatprep.subr.mxu0 0.0
  %1400 = vmatpush1.msra.mxu0 0.0
  %1401 = vmatprep.subr.mxu0 0.0
  %1402 = vmatpush1.msra.mxu0 0.0
  %1403 = vmatprep.mubr.f32.mxu0 0.0
  %1404 = vmatmul.mubr.f32.gmra.mrb[0].mxu0 %v1329
  %v1405 = vpop.f32.mrb[0].mxu0
  %v1406 = vadd.f32 %v1220, %v1405
  %v1407 = vpop.f32.mrb[0].mxu0
  %v1408 = vadd.f32 %v1220, %v1407
  %1409 = vdwg.mxu0
  %1410 = vmatprep.subr.mxu0 %v1295
  %1411 = vmatpush1.msra.mxu0 %v1294
  %1412 = vmatprep.subr.mxu0 %v1299
  %1413 = vmatpush1.msra.mxu0 %v1298
  %1414 = vmatprep.subr.mxu0 %v1303
  %1415 = vmatpush1.msra.mxu0 %v1302
  %1416 = vmatprep.subr.mxu0 %v1307
  %1417 = vmatpush1.msra.mxu0 %v1306
  %1418 = vmatprep.subr.mxu0 %v1337
  %1419 = vmatpush1.msra.mxu0 %v1335
  %1420 = vmatprep.subr.mxu0 0.0
  %1421 = vmatpush1.msra.mxu0 0.0
  %1422 = vmatprep.subr.mxu0 0.0
  %1423 = vmatpush1.msra.mxu0 0.0
  %1424 = vmatprep.subr.mxu0 0.0
  %1425 = vmatpush1.msra.mxu0 0.0
  %1426 = vmatprep.subr.mxu0 0.0
  %1427 = vmatpush1.msra.mxu0 0.0
  %1428 = vmatprep.subr.mxu0 0.0
  %1429 = vmatpush1.msra.mxu0 0.0
  %1430 = vmatprep.subr.mxu0 0.0
  %1431 = vmatpush1.msra.mxu0 0.0
  %1432 = vmatprep.subr.mxu0 0.0
  %1433 = vmatpush1.msra.mxu0 0.0
  %1434 = vmatprep.subr.mxu0 0.0
  %1435 = vmatpush1.msra.mxu0 0.0
  %1436 = vmatprep.subr.mxu0 0.0
  %1437 = vmatpush1.msra.mxu0 0.0
  %1438 = vmatprep.subr.mxu0 0.0
  %1439 = vmatpush1.msra.mxu0 0.0
  %1440 = vmatprep.subr.mxu0 0.0
  %1441 = vmatpush1.msra.mxu0 0.0
  %1442 = vmatprep.subr.mxu0 0.0
  %1443 = vmatpush1.msra.mxu0 0.0
  %1444 = vmatprep.subr.mxu0 0.0
  %1445 = vmatpush1.msra.mxu0 0.0
  %1446 = vmatprep.subr.mxu0 0.0
  %1447 = vmatpush1.msra.mxu0 0.0
  %1448 = vmatprep.subr.mxu0 0.0
  %1449 = vmatpush1.msra.mxu0 0.0
  %1450 = vmatprep.subr.mxu0 0.0
  %1451 = vmatpush1.msra.mxu0 0.0
  %1452 = vmatprep.subr.mxu0 0.0
  %1453 = vmatpush1.msra.mxu0 0.0
  %1454 = vmatprep.subr.mxu0 0.0
  %1455 = vmatpush1.msra.mxu0 0.0
  %1456 = vmatprep.subr.mxu0 0.0
  %1457 = vmatpush1.msra.mxu0 0.0
  %1458 = vmatprep.subr.mxu0 0.0
  %1459 = vmatpush1.msra.mxu0 0.0
  %1460 = vmatprep.subr.mxu0 0.0
  %1461 = vmatpush1.msra.mxu0 0.0
  %1462 = vmatprep.subr.mxu0 0.0
  %1463 = vmatpush1.msra.mxu0 0.0
  %1464 = vmatprep.subr.mxu0 0.0
  %1465 = vmatpush1.msra.mxu0 0.0
  %1466 = vmatprep.subr.mxu0 0.0
  %1467 = vmatpush1.msra.mxu0 0.0
  %1468 = vmatprep.subr.mxu0 0.0
  %1469 = vmatpush1.msra.mxu0 0.0
  %1470 = vmatprep.subr.mxu0 0.0
  %1471 = vmatpush1.msra.mxu0 0.0
  %1472 = vmatprep.subr.mxu0 0.0
  %1473 = vmatpush1.msra.mxu0 0.0
  %1474 = vmatprep.mubr.f32.mxu0 0.0
  %1475 = vmatmul.mubr.f32.gmra.mrb[0].mxu0 %v1329
  %v1476 = vpop.f32.mrb[0].mxu0
  %v1477 = vadd.f32 %v1220, %v1476
  %v1478 = vpop.f32.mrb[0].mxu0
  %v1479 = vadd.f32 %v1220, %v1478
  %1480 = vdwg.mxu0
  %v1481 = vmax.f32 %v1406, 0.0
  %v1482 = vmax.f32 %v1408, 0.0
  %v1483 = vmax.f32 %v1477, 0.0
  %v1484 = vmax.f32 %v1479, 0.0
  %v1485 = vld [vmem:[%s23] sm:$0xf]
  %v1486 = vld [vmem:[%s25] sm:$0xf]
  %v1487 = vmul.f32 %v1481, %v184
  %v1488 = vmul.f32 %v1482, %v185
  %v1489 = vmul.f32 %v1483, %v186
  %v1490 = vmul.f32 %v1484, %v182
  %v1491 = vmul.f32 %v1481, %v226
  %v1492 = vmul.f32 %v1482, %v227
  %v1493 = vmul.f32 %v1483, %v228
  %v1494 = vmul.f32 %v1484, %v224
  %v1495 = vmul.f32 %v1481, %v268
  %v1496 = vmul.f32 %v1482, %v269
  %v1497 = vmul.f32 %v1483, %v270
  %v1498 = vmul.f32 %v1484, %v266
  %v1499 = vmul.f32 %v1481, %v310
  %v1500 = vmul.f32 %v1482, %v311
  %v1501 = vmul.f32 %v1483, %v312
  %v1502 = vmul.f32 %v1484, %v308
  %v1503 = vmul.f32 %v1481, %v344
  %v1504 = vmul.f32 %v1482, %v352
  %v1505 = vmul.f32 %v1483, %v353
  %v1506 = vmul.f32 %v1484, %v354
  %v1507 = vmul.f32 %v1481, %v386
  %v1508 = vmul.f32 %v1482, %v394
  %v1509 = vmul.f32 %v1483, %v395
  %v1510 = vmul.f32 %v1484, %v396
  %v1511 = vmul.f32 %v1481, %v428
  %v1512 = vmul.f32 %v1482, %v436
  %v1513 = vmul.f32 %v1483, %v437
  %v1514 = vmul.f32 %v1484, %v438
  %v1515 = vmul.f32 %v1481, %v470
  %v1516 = vmul.f32 %v1482, %v478
  %v1517 = vmul.f32 %v1483, %v479
  %v1518 = vmul.f32 %v1484, %v480
  %v1523 = vrot.slane %v1491, 4
  %v1524 = vrot.slane %v1492, 4
  %v1525 = vrot.slane %v1493, 4
  %v1526 = vrot.slane %v1494, 4
  %1527 = vrot.lane.b32.xlu0 %v1523, 127
  %v1528 = vpop.permute.xlu0 %1527
  %1529 = vrot.lane.b32.xlu0 %v1524, 127
  %v1530 = vpop.permute.xlu0 %1529
  %1531 = vrot.lane.b32.xlu0 %v1525, 127
  %v1532 = vpop.permute.xlu0 %1531
  %1533 = vrot.lane.b32.xlu0 %v1526, 127
  %v1534 = vpop.permute.xlu0 %1533
  %v1535 = vsel %vm309, %v502, %v1528
  %v1536 = vsel %vm309, %v1528, %v1530
  %v1537 = vsel %vm309, %v1530, %v1532
  %v1538 = vsel %vm309, %v1532, %v1534
  %1548 = vrot.lane.b32.xlu0 %v1495, 126
  %v1549 = vpop.permute.xlu0 %1548
  %1550 = vrot.lane.b32.xlu0 %v1496, 126
  %v1551 = vpop.permute.xlu0 %1550
  %1552 = vrot.lane.b32.xlu0 %v1497, 126
  %v1553 = vpop.permute.xlu0 %1552
  %1554 = vrot.lane.b32.xlu0 %v1498, 126
  %v1555 = vpop.permute.xlu0 %1554
  %v1556 = vsel %vm535, %v526, %v1549
  %v1557 = vsel %vm535, %v1549, %v1551
  %v1558 = vsel %vm535, %v1551, %v1553
  %v1559 = vsel %vm535, %v1553, %v1555
  %v1569 = vrot.slane %v1499, 4
  %v1570 = vrot.slane %v1500, 4
  %v1571 = vrot.slane %v1501, 4
  %v1572 = vrot.slane %v1502, 4
  %1573 = vrot.lane.b32.xlu0 %v1569, 112
  %v1574 = vpop.permute.xlu0 %1573
  %1575 = vrot.lane.b32.xlu0 %v1570, 112
  %v1576 = vpop.permute.xlu0 %1575
  %1577 = vrot.lane.b32.xlu0 %v1571, 112
  %v1578 = vpop.permute.xlu0 %1577
  %1579 = vrot.lane.b32.xlu0 %v1572, 112
  %v1580 = vpop.permute.xlu0 %1579
  %v1581 = vsel %vm225, %v556, %v1574
  %v1582 = vsel %vm225, %v1574, %v1576
  %v1583 = vsel %vm225, %v1576, %v1578
  %v1584 = vsel %vm225, %v1578, %v1580
  %1594 = vrot.lane.b32.xlu0 %v1481, 111
  %v1595 = vpop.permute.xlu0 %1594
  %1596 = vrot.lane.b32.xlu0 %v1482, 111
  %v1597 = vpop.permute.xlu0 %1596
  %1598 = vrot.lane.b32.xlu0 %v1483, 111
  %v1599 = vpop.permute.xlu0 %1598
  %1600 = vrot.lane.b32.xlu0 %v1484, 111
  %v1601 = vpop.permute.xlu0 %1600
  %v1602 = vsel %vm183, %v1595, %v1597
  %v1603 = vsel %vm183, %v1597, %v1599
  %v1604 = vsel %vm183, %v1599, %v1601
  %v1614 = vrot.slane %v1503, 4
  %v1615 = vrot.slane %v1504, 4
  %v1616 = vrot.slane %v1505, 4
  %v1617 = vrot.slane %v1506, 4
  %1618 = vrot.lane.b32.xlu0 %v1614, 110
  %v1619 = vpop.permute.xlu0 %1618
  %1620 = vrot.lane.b32.xlu0 %v1615, 110
  %v1621 = vpop.permute.xlu0 %1620
  %1622 = vrot.lane.b32.xlu0 %v1616, 110
  %v1623 = vpop.permute.xlu0 %1622
  %1624 = vrot.lane.b32.xlu0 %v1617, 110
  %v1625 = vpop.permute.xlu0 %1624
  %v1626 = vsel %vm610, %v1619, %v1621
  %v1627 = vsel %vm610, %v1621, %v1623
  %v1628 = vsel %vm610, %v1623, %v1625
  %v1629 = vsel %vm610, %v1625, %v609
  %1639 = vrot.lane.b32.xlu0 %v1507, 96
  %v1640 = vpop.permute.xlu0 %1639
  %1641 = vrot.lane.b32.xlu0 %v1508, 96
  %v1642 = vpop.permute.xlu0 %1641
  %1643 = vrot.lane.b32.xlu0 %v1509, 96
  %v1644 = vpop.permute.xlu0 %1643
  %1645 = vrot.lane.b32.xlu0 %v1510, 96
  %v1646 = vpop.permute.xlu0 %1645
  %v1647 = vsel %vm635, %v1640, %v1642
  %v1648 = vsel %vm635, %v1642, %v1644
  %v1649 = vsel %vm635, %v1644, %v1646
  %v1650 = vsel %vm635, %v1646, %v634
  %v1660 = vrot.slane %v1511, 4
  %v1661 = vrot.slane %v1512, 4
  %v1662 = vrot.slane %v1513, 4
  %v1663 = vrot.slane %v1514, 4
  %1664 = vrot.lane.b32.xlu0 %v1660, 95
  %v1665 = vpop.permute.xlu0 %1664
  %1666 = vrot.lane.b32.xlu0 %v1661, 95
  %v1667 = vpop.permute.xlu0 %1666
  %1668 = vrot.lane.b32.xlu0 %v1662, 95
  %v1669 = vpop.permute.xlu0 %1668
  %1670 = vrot.lane.b32.xlu0 %v1663, 95
  %v1671 = vpop.permute.xlu0 %1670
  %v1672 = vsel %vm665, %v1665, %v1667
  %v1673 = vsel %vm665, %v1667, %v1669
  %v1674 = vsel %vm665, %v1669, %v1671
  %v1675 = vsel %vm665, %v1671, %v664
  %1685 = vrot.lane.b32.xlu0 %v1515, 94
  %v1686 = vpop.permute.xlu0 %1685
  %1687 = vrot.lane.b32.xlu0 %v1516, 94
  %v1688 = vpop.permute.xlu0 %1687
  %1689 = vrot.lane.b32.xlu0 %v1517, 94
  %v1690 = vpop.permute.xlu0 %1689
  %1691 = vrot.lane.b32.xlu0 %v1518, 94
  %v1692 = vpop.permute.xlu0 %1691
  %v1693 = vsel %vm690, %v1686, %v1688
  %v1694 = vsel %vm690, %v1688, %v1690
  %v1695 = vsel %vm690, %v1690, %v1692
  %v1696 = vsel %vm690, %v1692, %v689
  %v1697 = vsel %vm695, %v192, %v1535
  %v1698 = vsel %vm695, %v1487, %v1536
  %v1699 = vsel %vm695, %v1488, %v1537
  %v1700 = vsel %vm695, %v1489, %v1538
  %v1701 = vsel %vm695, %v1490, %v1534
  %v1702 = vsel %vm695, %v1556, %v1581
  %v1703 = vsel %vm695, %v1557, %v1582
  %v1704 = vsel %vm695, %v1558, %v1583
  %v1705 = vsel %vm695, %v1559, %v1584
  %v1706 = vsel %vm695, %v1555, %v1580
  %v1707 = vsel %vm695, %v1595, %v1619
  %v1708 = vsel %vm695, %v1602, %v1626
  %v1709 = vsel %vm695, %v1603, %v1627
  %v1710 = vsel %vm695, %v1604, %v1628
  %v1711 = vsel %vm695, %v1601, %v1629
  %v1712 = vsel %vm695, %v1640, %v1665
  %v1713 = vsel %vm695, %v1647, %v1672
  %v1714 = vsel %vm695, %v1648, %v1673
  %v1715 = vsel %vm695, %v1649, %v1674
  %v1716 = vsel %vm695, %v1650, %v1675
  %1718 = vset.pattern.permute.xlu0 0
  %1719 = vperm.xlu0 %1718, %v1486
  %v1720 = vpop.permute.xlu0 %1719
  %1742 = vrot.lane.b32.xlu0 %v1697, 17
  %v1743 = vpop.permute.xlu0 %1742
  %1744 = vrot.lane.b32.xlu0 %v1698, 17
  %v1745 = vpop.permute.xlu0 %1744
  %1746 = vrot.lane.b32.xlu0 %v1699, 17
  %v1747 = vpop.permute.xlu0 %1746
  %1748 = vrot.lane.b32.xlu0 %v1700, 17
  %v1749 = vpop.permute.xlu0 %1748
  %1750 = vrot.lane.b32.xlu0 %v1701, 17
  %v1751 = vpop.permute.xlu0 %1750
  %1752 = vrot.lane.b32.xlu0 %v1702, 17
  %v1753 = vpop.permute.xlu0 %1752
  %1754 = vrot.lane.b32.xlu0 %v1703, 17
  %v1755 = vpop.permute.xlu0 %1754
  %1756 = vrot.lane.b32.xlu0 %v1704, 17
  %v1757 = vpop.permute.xlu0 %1756
  %1758 = vrot.lane.b32.xlu0 %v1705, 17
  %v1759 = vpop.permute.xlu0 %1758
  %1760 = vrot.lane.b32.xlu0 %v1706, 17
  %v1761 = vpop.permute.xlu0 %1760
  %1762 = vrot.lane.b32.xlu0 %v1707, 17
  %v1763 = vpop.permute.xlu0 %1762
  %1764 = vrot.lane.b32.xlu0 %v1708, 17
  %v1765 = vpop.permute.xlu0 %1764
  %1766 = vrot.lane.b32.xlu0 %v1709, 17
  %v1767 = vpop.permute.xlu0 %1766
  %1768 = vrot.lane.b32.xlu0 %v1710, 17
  %v1769 = vpop.permute.xlu0 %1768
  %1770 = vrot.lane.b32.xlu0 %v1711, 17
  %v1771 = vpop.permute.xlu0 %1770
  %1772 = vrot.lane.b32.xlu0 %v1712, 17
  %v1773 = vpop.permute.xlu0 %1772
  %1774 = vrot.lane.b32.xlu0 %v1713, 17
  %v1775 = vpop.permute.xlu0 %1774
  %1776 = vrot.lane.b32.xlu0 %v1714, 17
  %v1777 = vpop.permute.xlu0 %1776
  %1778 = vrot.lane.b32.xlu0 %v1715, 17
  %v1779 = vpop.permute.xlu0 %1778
  %1780 = vrot.lane.b32.xlu0 %v1716, 17
  %v1781 = vpop.permute.xlu0 %1780
  %1782 = vrot.lane.b32.xlu0 %v1686, 17
  %v1783 = vpop.permute.xlu0 %1782
  %1784 = vrot.lane.b32.xlu0 %v1693, 17
  %v1785 = vpop.permute.xlu0 %1784
  %1786 = vrot.lane.b32.xlu0 %v1694, 17
  %v1787 = vpop.permute.xlu0 %1786
  %1788 = vrot.lane.b32.xlu0 %v1695, 17
  %v1789 = vpop.permute.xlu0 %1788
  %1790 = vrot.lane.b32.xlu0 %v1696, 17
  %v1791 = vpop.permute.xlu0 %1790
  %v1792 = vsel %vm477, %v1743, %v1745
  %v1793 = vsel %vm477, %v1745, %v1747
  %v1794 = vsel %vm477, %v1747, %v1749
  %v1795 = vsel %vm477, %v1749, %v1751
  %v1796 = vsel %vm477, %v1753, %v1755
  %v1797 = vsel %vm477, %v1755, %v1757
  %v1798 = vsel %vm477, %v1757, %v1759
  %v1799 = vsel %vm477, %v1759, %v1761
  %v1800 = vsel %vm477, %v1763, %v1765
  %v1801 = vsel %vm477, %v1765, %v1767
  %v1802 = vsel %vm477, %v1767, %v1769
  %v1803 = vsel %vm477, %v1769, %v1771
  %v1804 = vsel %vm477, %v1773, %v1775
  %v1805 = vsel %vm477, %v1775, %v1777
  %v1806 = vsel %vm477, %v1777, %v1779
  %v1807 = vsel %vm477, %v1779, %v1781
  %v1808 = vsel %vm477, %v1783, %v1785
  %v1809 = vsel %vm477, %v1785, %v1787
  %v1810 = vsel %vm477, %v1787, %v1789
  %v1811 = vsel %vm477, %v1789, %v1791
  %v1829 = vsel %vm827, %v1485, 0
  %v1831 = vsel %vm695, %v1808, 0
  %v1833 = vsel %vm695, %v1809, 0
  %v1835 = vsel %vm695, %v1810, 0
  %v1837 = vsel %vm695, %v1811, 0
  %1839 = vmatprep.subr.mxu0 %v1793
  %1840 = vmatpush1.msra.mxu0 %v1792
  %1841 = vmatprep.subr.mxu0 %v1797
  %1842 = vmatpush1.msra.mxu0 %v1796
  %1843 = vmatprep.subr.mxu0 %v1801
  %1844 = vmatpush1.msra.mxu0 %v1800
  %1845 = vmatprep.subr.mxu0 %v1805
  %1846 = vmatpush1.msra.mxu0 %v1804
  %1847 = vmatprep.subr.mxu0 %v1833
  %1848 = vmatpush1.msra.mxu0 %v1831
  %1849 = vmatprep.subr.mxu0 0.0
  %1850 = vmatpush1.msra.mxu0 0.0
  %1851 = vmatprep.subr.mxu0 0.0
  %1852 = vmatpush1.msra.mxu0 0.0
  %1853 = vmatprep.subr.mxu0 0.0
  %1854 = vmatpush1.msra.mxu0 0.0
  %1855 = vmatprep.subr.mxu0 0.0
  %1856 = vmatpush1.msra.mxu0 0.0
  %1857 = vmatprep.subr.mxu0 0.0
  %1858 = vmatpush1.msra.mxu0 0.0
  %1859 = vmatprep.subr.mxu0 0.0
  %1860 = vmatpush1.msra.mxu0 0.0
  %1861 = vmatprep.subr.mxu0 0.0
  %1862 = vmatpush1.msra.mxu0 0.0
  %1863 = vmatprep.subr.mxu0 0.0
  %1864 = vmatpush1.msra.mxu0 0.0
  %1865 = vmatprep.subr.mxu0 0.0
  %1866 = vmatpush1.msra.mxu0 0.0
  %1867 = vmatprep.subr.mxu0 0.0
  %1868 = vmatpush1.msra.mxu0 0.0
  %1869 = vmatprep.subr.mxu0 0.0
  %1870 = vmatpush1.msra.mxu0 0.0
  %1871 = vmatprep.subr.mxu0 0.0
  %1872 = vmatpush1.msra.mxu0 0.0
  %1873 = vmatprep.subr.mxu0 0.0
  %1874 = vmatpush1.msra.mxu0 0.0
  %1875 = vmatprep.subr.mxu0 0.0
  %1876 = vmatpush1.msra.mxu0 0.0
  %1877 = vmatprep.subr.mxu0 0.0
  %1878 = vmatpush1.msra.mxu0 0.0
  %1879 = vmatprep.subr.mxu0 0.0
  %1880 = vmatpush1.msra.mxu0 0.0
  %1881 = vmatprep.subr.mxu0 0.0
  %1882 = vmatpush1.msra.mxu0 0.0
  %1883 = vmatprep.subr.mxu0 0.0
  %1884 = vmatpush1.msra.mxu0 0.0
  %1885 = vmatprep.subr.mxu0 0.0
  %1886 = vmatpush1.msra.mxu0 0.0
  %1887 = vmatprep.subr.mxu0 0.0
  %1888 = vmatpush1.msra.mxu0 0.0
  %1889 = vmatprep.subr.mxu0 0.0
  %1890 = vmatpush1.msra.mxu0 0.0
  %1891 = vmatprep.subr.mxu0 0.0
  %1892 = vmatpush1.msra.mxu0 0.0
  %1893 = vmatprep.subr.mxu0 0.0
  %1894 = vmatpush1.msra.mxu0 0.0
  %1895 = vmatprep.subr.mxu0 0.0
  %1896 = vmatpush1.msra.mxu0 0.0
  %1897 = vmatprep.subr.mxu0 0.0
  %1898 = vmatpush1.msra.mxu0 0.0
  %1899 = vmatprep.subr.mxu0 0.0
  %1900 = vmatpush1.msra.mxu0 0.0
  %1901 = vmatprep.subr.mxu0 0.0
  %1902 = vmatpush1.msra.mxu0 0.0
  %1903 = vmatprep.mubr.f32.mxu0 0.0
  %1904 = vmatmul.mubr.f32.gmra.mrb[0].mxu0 %v1829
  %v1905 = vpop.f32.mrb[0].mxu0
  %v1906 = vadd.f32 %v1720, %v1905
  %v1907 = vpop.f32.mrb[0].mxu0
  %v1908 = vadd.f32 %v1720, %v1907
  %1909 = vdwg.mxu0
  %1910 = vmatprep.subr.mxu0 %v1795
  %1911 = vmatpush1.msra.mxu0 %v1794
  %1912 = vmatprep.subr.mxu0 %v1799
  %1913 = vmatpush1.msra.mxu0 %v1798
  %1914 = vmatprep.subr.mxu0 %v1803
  %1915 = vmatpush1.msra.mxu0 %v1802
  %1916 = vmatprep.subr.mxu0 %v1807
  %1917 = vmatpush1.msra.mxu0 %v1806
  %1918 = vmatprep.subr.mxu0 %v1837
  %1919 = vmatpush1.msra.mxu0 %v1835
  %1920 = vmatprep.subr.mxu0 0.0
  %1921 = vmatpush1.msra.mxu0 0.0
  %1922 = vmatprep.subr.mxu0 0.0
  %1923 = vmatpush1.msra.mxu0 0.0
  %1924 = vmatprep.subr.mxu0 0.0
  %1925 = vmatpush1.msra.mxu0 0.0
  %1926 = vmatprep.subr.mxu0 0.0
  %1927 = vmatpush1.msra.mxu0 0.0
  %1928 = vmatprep.subr.mxu0 0.0
  %1929 = vmatpush1.msra.mxu0 0.0
  %1930 = vmatprep.subr.mxu0 0.0
  %1931 = vmatpush1.msra.mxu0 0.0
  %1932 = vmatprep.subr.mxu0 0.0
  %1933 = vmatpush1.msra.mxu0 0.0
  %1934 = vmatprep.subr.mxu0 0.0
  %1935 = vmatpush1.msra.mxu0 0.0
  %1936 = vmatprep.subr.mxu0 0.0
  %1937 = vmatpush1.msra.mxu0 0.0
  %1938 = vmatprep.subr.mxu0 0.0
  %1939 = vmatpush1.msra.mxu0 0.0
  %1940 = vmatprep.subr.mxu0 0.0
  %1941 = vmatpush1.msra.mxu0 0.0
  %1942 = vmatprep.subr.mxu0 0.0
  %1943 = vmatpush1.msra.mxu0 0.0
  %1944 = vmatprep.subr.mxu0 0.0
  %1945 = vmatpush1.msra.mxu0 0.0
  %1946 = vmatprep.subr.mxu0 0.0
  %1947 = vmatpush1.msra.mxu0 0.0
  %1948 = vmatprep.subr.mxu0 0.0
  %1949 = vmatpush1.msra.mxu0 0.0
  %1950 = vmatprep.subr.mxu0 0.0
  %1951 = vmatpush1.msra.mxu0 0.0
  %1952 = vmatprep.subr.mxu0 0.0
  %1953 = vmatpush1.msra.mxu0 0.0
  %1954 = vmatprep.subr.mxu0 0.0
  %1955 = vmatpush1.msra.mxu0 0.0
  %1956 = vmatprep.subr.mxu0 0.0
  %1957 = vmatpush1.msra.mxu0 0.0
  %1958 = vmatprep.subr.mxu0 0.0
  %1959 = vmatpush1.msra.mxu0 0.0
  %1960 = vmatprep.subr.mxu0 0.0
  %1961 = vmatpush1.msra.mxu0 0.0
  %1962 = vmatprep.subr.mxu0 0.0
  %1963 = vmatpush1.msra.mxu0 0.0
  %1964 = vmatprep.subr.mxu0 0.0
  %1965 = vmatpush1.msra.mxu0 0.0
  %1966 = vmatprep.subr.mxu0 0.0
  %1967 = vmatpush1.msra.mxu0 0.0
  %1968 = vmatprep.subr.mxu0 0.0
  %1969 = vmatpush1.msra.mxu0 0.0
  %1970 = vmatprep.subr.mxu0 0.0
  %1971 = vmatpush1.msra.mxu0 0.0
  %1972 = vmatprep.subr.mxu0 0.0
  %1973 = vmatpush1.msra.mxu0 0.0
  %1974 = vmatprep.mubr.f32.mxu0 0.0
  %1975 = vmatmul.mubr.f32.gmra.mrb[0].mxu0 %v1829
  %v1976 = vpop.f32.mrb[0].mxu0
  %v1977 = vadd.f32 %v1720, %v1976
  %v1978 = vpop.f32.mrb[0].mxu0
  %v1979 = vadd.f32 %v1720, %v1978
  %1980 = vdwg.mxu0
  %v1981 = vmax.f32 %v1906, 0.0
  %v1982 = vmax.f32 %v1908, 0.0
  %v1983 = vmax.f32 %v1977, 0.0
  %v1984 = vmax.f32 %v1979, 0.0
  %v1985 = vld [vmem:[%s27] sm:$0xf]
  %v1986 = vld [vmem:[%s29] sm:$0xf]
  %v1987 = vmul.f32 %v1981, %v184
  %v1988 = vmul.f32 %v1982, %v185
  %v1989 = vmul.f32 %v1983, %v186
  %v1990 = vmul.f32 %v1984, %v182
  %v1991 = vmul.f32 %v1981, %v226
  %v1992 = vmul.f32 %v1982, %v227
  %v1993 = vmul.f32 %v1983, %v228
  %v1994 = vmul.f32 %v1984, %v224
  %v1995 = vmul.f32 %v1981, %v268
  %v1996 = vmul.f32 %v1982, %v269
  %v1997 = vmul.f32 %v1983, %v270
  %v1998 = vmul.f32 %v1984, %v266
  %v1999 = vmul.f32 %v1981, %v310
  %v2000 = vmul.f32 %v1982, %v311
  %v2001 = vmul.f32 %v1983, %v312
  %v2002 = vmul.f32 %v1984, %v308
  %v2003 = vmul.f32 %v1981, %v344
  %v2004 = vmul.f32 %v1982, %v352
  %v2005 = vmul.f32 %v1983, %v353
  %v2006 = vmul.f32 %v1984, %v354
  %v2007 = vmul.f32 %v1981, %v386
  %v2008 = vmul.f32 %v1982, %v394
  %v2009 = vmul.f32 %v1983, %v395
  %v2010 = vmul.f32 %v1984, %v396
  %v2011 = vmul.f32 %v1981, %v428
  %v2012 = vmul.f32 %v1982, %v436
  %v2013 = vmul.f32 %v1983, %v437
  %v2014 = vmul.f32 %v1984, %v438
  %v2015 = vmul.f32 %v1981, %v470
  %v2016 = vmul.f32 %v1982, %v478
  %v2017 = vmul.f32 %v1983, %v479
  %v2018 = vmul.f32 %v1984, %v480
  %v2023 = vrot.slane %v1991, 4
  %v2024 = vrot.slane %v1992, 4
  %v2025 = vrot.slane %v1993, 4
  %v2026 = vrot.slane %v1994, 4
  %2027 = vrot.lane.b32.xlu0 %v2023, 127
  %v2028 = vpop.permute.xlu0 %2027
  %2029 = vrot.lane.b32.xlu0 %v2024, 127
  %v2030 = vpop.permute.xlu0 %2029
  %2031 = vrot.lane.b32.xlu0 %v2025, 127
  %v2032 = vpop.permute.xlu0 %2031
  %2033 = vrot.lane.b32.xlu0 %v2026, 127
  %v2034 = vpop.permute.xlu0 %2033
  %v2035 = vsel %vm309, %v502, %v2028
  %v2036 = vsel %vm309, %v2028, %v2030
  %v2037 = vsel %vm309, %v2030, %v2032
  %v2038 = vsel %vm309, %v2032, %v2034
  %2048 = vrot.lane.b32.xlu0 %v1995, 126
  %v2049 = vpop.permute.xlu0 %2048
  %2050 = vrot.lane.b32.xlu0 %v1996, 126
  %v2051 = vpop.permute.xlu0 %2050
  %2052 = vrot.lane.b32.xlu0 %v1997, 126
  %v2053 = vpop.permute.xlu0 %2052
  %2054 = vrot.lane.b32.xlu0 %v1998, 126
  %v2055 = vpop.permute.xlu0 %2054
  %v2056 = vsel %vm535, %v526, %v2049
  %v2057 = vsel %vm535, %v2049, %v2051
  %v2058 = vsel %vm535, %v2051, %v2053
  %v2059 = vsel %vm535, %v2053, %v2055
  %v2069 = vrot.slane %v1999, 4
  %v2070 = vrot.slane %v2000, 4
  %v2071 = vrot.slane %v2001, 4
  %v2072 = vrot.slane %v2002, 4
  %2073 = vrot.lane.b32.xlu0 %v2069, 112
  %v2074 = vpop.permute.xlu0 %2073
  %2075 = vrot.lane.b32.xlu0 %v2070, 112
  %v2076 = vpop.permute.xlu0 %2075
  %2077 = vrot.lane.b32.xlu0 %v2071, 112
  %v2078 = vpop.permute.xlu0 %2077
  %2079 = vrot.lane.b32.xlu0 %v2072, 112
  %v2080 = vpop.permute.xlu0 %2079
  %v2081 = vsel %vm225, %v556, %v2074
  %v2082 = vsel %vm225, %v2074, %v2076
  %v2083 = vsel %vm225, %v2076, %v2078
  %v2084 = vsel %vm225, %v2078, %v2080
  %2094 = vrot.lane.b32.xlu0 %v1981, 111
  %v2095 = vpop.permute.xlu0 %2094
  %2096 = vrot.lane.b32.xlu0 %v1982, 111
  %v2097 = vpop.permute.xlu0 %2096
  %2098 = vrot.lane.b32.xlu0 %v1983, 111
  %v2099 = vpop.permute.xlu0 %2098
  %2100 = vrot.lane.b32.xlu0 %v1984, 111
  %v2101 = vpop.permute.xlu0 %2100
  %v2102 = vsel %vm183, %v2095, %v2097
  %v2103 = vsel %vm183, %v2097, %v2099
  %v2104 = vsel %vm183, %v2099, %v2101
  %v2114 = vrot.slane %v2003, 4
  %v2115 = vrot.slane %v2004, 4
  %v2116 = vrot.slane %v2005, 4
  %v2117 = vrot.slane %v2006, 4
  %2118 = vrot.lane.b32.xlu0 %v2114, 110
  %v2119 = vpop.permute.xlu0 %2118
  %2120 = vrot.lane.b32.xlu0 %v2115, 110
  %v2121 = vpop.permute.xlu0 %2120
  %2122 = vrot.lane.b32.xlu0 %v2116, 110
  %v2123 = vpop.permute.xlu0 %2122
  %2124 = vrot.lane.b32.xlu0 %v2117, 110
  %v2125 = vpop.permute.xlu0 %2124
  %v2126 = vsel %vm610, %v2119, %v2121
  %v2127 = vsel %vm610, %v2121, %v2123
  %v2128 = vsel %vm610, %v2123, %v2125
  %v2129 = vsel %vm610, %v2125, %v609
  %2139 = vrot.lane.b32.xlu0 %v2007, 96
  %v2140 = vpop.permute.xlu0 %2139
  %2141 = vrot.lane.b32.xlu0 %v2008, 96
  %v2142 = vpop.permute.xlu0 %2141
  %2143 = vrot.lane.b32.xlu0 %v2009, 96
  %v2144 = vpop.permute.xlu0 %2143
  %2145 = vrot.lane.b32.xlu0 %v2010, 96
  %v2146 = vpop.permute.xlu0 %2145
  %v2147 = vsel %vm635, %v2140, %v2142
  %v2148 = vsel %vm635, %v2142, %v2144
  %v2149 = vsel %vm635, %v2144, %v2146
  %v2150 = vsel %vm635, %v2146, %v634
  %v2160 = vrot.slane %v2011, 4
  %v2161 = vrot.slane %v2012, 4
  %v2162 = vrot.slane %v2013, 4
  %v2163 = vrot.slane %v2014, 4
  %2164 = vrot.lane.b32.xlu0 %v2160, 95
  %v2165 = vpop.permute.xlu0 %2164
  %2166 = vrot.lane.b32.xlu0 %v2161, 95
  %v2167 = vpop.permute.xlu0 %2166
  %2168 = vrot.lane.b32.xlu0 %v2162, 95
  %v2169 = vpop.permute.xlu0 %2168
  %2170 = vrot.lane.b32.xlu0 %v2163, 95
  %v2171 = vpop.permute.xlu0 %2170
  %v2172 = vsel %vm665, %v2165, %v2167
  %v2173 = vsel %vm665, %v2167, %v2169
  %v2174 = vsel %vm665, %v2169, %v2171
  %v2175 = vsel %vm665, %v2171, %v664
  %2185 = vrot.lane.b32.xlu0 %v2015, 94
  %v2186 = vpop.permute.xlu0 %2185
  %2187 = vrot.lane.b32.xlu0 %v2016, 94
  %v2188 = vpop.permute.xlu0 %2187
  %2189 = vrot.lane.b32.xlu0 %v2017, 94
  %v2190 = vpop.permute.xlu0 %2189
  %2191 = vrot.lane.b32.xlu0 %v2018, 94
  %v2192 = vpop.permute.xlu0 %2191
  %v2193 = vsel %vm690, %v2186, %v2188
  %v2194 = vsel %vm690, %v2188, %v2190
  %v2195 = vsel %vm690, %v2190, %v2192
  %v2196 = vsel %vm690, %v2192, %v689
  %v2197 = vsel %vm695, %v192, %v2035
  %v2198 = vsel %vm695, %v1987, %v2036
  %v2199 = vsel %vm695, %v1988, %v2037
  %v2200 = vsel %vm695, %v1989, %v2038
  %v2201 = vsel %vm695, %v1990, %v2034
  %v2202 = vsel %vm695, %v2056, %v2081
  %v2203 = vsel %vm695, %v2057, %v2082
  %v2204 = vsel %vm695, %v2058, %v2083
  %v2205 = vsel %vm695, %v2059, %v2084
  %v2206 = vsel %vm695, %v2055, %v2080
  %v2207 = vsel %vm695, %v2095, %v2119
  %v2208 = vsel %vm695, %v2102, %v2126
  %v2209 = vsel %vm695, %v2103, %v2127
  %v2210 = vsel %vm695, %v2104, %v2128
  %v2211 = vsel %vm695, %v2101, %v2129
  %v2212 = vsel %vm695, %v2140, %v2165
  %v2213 = vsel %vm695, %v2147, %v2172
  %v2214 = vsel %vm695, %v2148, %v2173
  %v2215 = vsel %vm695, %v2149, %v2174
  %v2216 = vsel %vm695, %v2150, %v2175
  %2218 = vset.pattern.permute.xlu0 0
  %2219 = vperm.xlu0 %2218, %v1986
  %v2220 = vpop.permute.xlu0 %2219
  %2242 = vrot.lane.b32.xlu0 %v2197, 17
  %v2243 = vpop.permute.xlu0 %2242
  %2244 = vrot.lane.b32.xlu0 %v2198, 17
  %v2245 = vpop.permute.xlu0 %2244
  %2246 = vrot.lane.b32.xlu0 %v2199, 17
  %v2247 = vpop.permute.xlu0 %2246
  %2248 = vrot.lane.b32.xlu0 %v2200, 17
  %v2249 = vpop.permute.xlu0 %2248
  %2250 = vrot.lane.b32.xlu0 %v2201, 17
  %v2251 = vpop.permute.xlu0 %2250
  %2252 = vrot.lane.b32.xlu0 %v2202, 17
  %v2253 = vpop.permute.xlu0 %2252
  %2254 = vrot.lane.b32.xlu0 %v2203, 17
  %v2255 = vpop.permute.xlu0 %2254
  %2256 = vrot.lane.b32.xlu0 %v2204, 17
  %v2257 = vpop.permute.xlu0 %2256
  %2258 = vrot.lane.b32.xlu0 %v2205, 17
  %v2259 = vpop.permute.xlu0 %2258
  %2260 = vrot.lane.b32.xlu0 %v2206, 17
  %v2261 = vpop.permute.xlu0 %2260
  %2262 = vrot.lane.b32.xlu0 %v2207, 17
  %v2263 = vpop.permute.xlu0 %2262
  %2264 = vrot.lane.b32.xlu0 %v2208, 17
  %v2265 = vpop.permute.xlu0 %2264
  %2266 = vrot.lane.b32.xlu0 %v2209, 17
  %v2267 = vpop.permute.xlu0 %2266
  %2268 = vrot.lane.b32.xlu0 %v2210, 17
  %v2269 = vpop.permute.xlu0 %2268
  %2270 = vrot.lane.b32.xlu0 %v2211, 17
  %v2271 = vpop.permute.xlu0 %2270
  %2272 = vrot.lane.b32.xlu0 %v2212, 17
  %v2273 = vpop.permute.xlu0 %2272
  %2274 = vrot.lane.b32.xlu0 %v2213, 17
  %v2275 = vpop.permute.xlu0 %2274
  %2276 = vrot.lane.b32.xlu0 %v2214, 17
  %v2277 = vpop.permute.xlu0 %2276
  %2278 = vrot.lane.b32.xlu0 %v2215, 17
  %v2279 = vpop.permute.xlu0 %2278
  %2280 = vrot.lane.b32.xlu0 %v2216, 17
  %v2281 = vpop.permute.xlu0 %2280
  %2282 = vrot.lane.b32.xlu0 %v2186, 17
  %v2283 = vpop.permute.xlu0 %2282
  %2284 = vrot.lane.b32.xlu0 %v2193, 17
  %v2285 = vpop.permute.xlu0 %2284
  %2286 = vrot.lane.b32.xlu0 %v2194, 17
  %v2287 = vpop.permute.xlu0 %2286
  %2288 = vrot.lane.b32.xlu0 %v2195, 17
  %v2289 = vpop.permute.xlu0 %2288
  %2290 = vrot.lane.b32.xlu0 %v2196, 17
  %v2291 = vpop.permute.xlu0 %2290
  %v2292 = vsel %vm477, %v2243, %v2245
  %v2293 = vsel %vm477, %v2245, %v2247
  %v2294 = vsel %vm477, %v2247, %v2249
  %v2295 = vsel %vm477, %v2249, %v2251
  %v2296 = vsel %vm477, %v2253, %v2255
  %v2297 = vsel %vm477, %v2255, %v2257
  %v2298 = vsel %vm477, %v2257, %v2259
  %v2299 = vsel %vm477, %v2259, %v2261
  %v2300 = vsel %vm477, %v2263, %v2265
  %v2301 = vsel %vm477, %v2265, %v2267
  %v2302 = vsel %vm477, %v2267, %v2269
  %v2303 = vsel %vm477, %v2269, %v2271
  %v2304 = vsel %vm477, %v2273, %v2275
  %v2305 = vsel %vm477, %v2275, %v2277
  %v2306 = vsel %vm477, %v2277, %v2279
  %v2307 = vsel %vm477, %v2279, %v2281
  %v2308 = vsel %vm477, %v2283, %v2285
  %v2309 = vsel %vm477, %v2285, %v2287
  %v2310 = vsel %vm477, %v2287, %v2289
  %v2311 = vsel %vm477, %v2289, %v2291
  %v2329 = vsel %vm827, %v1985, 0
  %v2331 = vsel %vm695, %v2308, 0
  %v2333 = vsel %vm695, %v2309, 0
  %v2335 = vsel %vm695, %v2310, 0
  %v2337 = vsel %vm695, %v2311, 0
  %2339 = vmatprep.subr.mxu0 %v2293
  %2340 = vmatpush1.msra.mxu0 %v2292
  %2341 = vmatprep.subr.mxu0 %v2297
  %2342 = vmatpush1.msra.mxu0 %v2296
  %2343 = vmatprep.subr.mxu0 %v2301
  %2344 = vmatpush1.msra.mxu0 %v2300
  %2345 = vmatprep.subr.mxu0 %v2305
  %2346 = vmatpush1.msra.mxu0 %v2304
  %2347 = vmatprep.subr.mxu0 %v2333
  %2348 = vmatpush1.msra.mxu0 %v2331
  %2349 = vmatprep.subr.mxu0 0.0
  %2350 = vmatpush1.msra.mxu0 0.0
  %2351 = vmatprep.subr.mxu0 0.0
  %2352 = vmatpush1.msra.mxu0 0.0
  %2353 = vmatprep.subr.mxu0 0.0
  %2354 = vmatpush1.msra.mxu0 0.0
  %2355 = vmatprep.subr.mxu0 0.0
  %2356 = vmatpush1.msra.mxu0 0.0
  %2357 = vmatprep.subr.mxu0 0.0
  %2358 = vmatpush1.msra.mxu0 0.0
  %2359 = vmatprep.subr.mxu0 0.0
  %2360 = vmatpush1.msra.mxu0 0.0
  %2361 = vmatprep.subr.mxu0 0.0
  %2362 = vmatpush1.msra.mxu0 0.0
  %2363 = vmatprep.subr.mxu0 0.0
  %2364 = vmatpush1.msra.mxu0 0.0
  %2365 = vmatprep.subr.mxu0 0.0
  %2366 = vmatpush1.msra.mxu0 0.0
  %2367 = vmatprep.subr.mxu0 0.0
  %2368 = vmatpush1.msra.mxu0 0.0
  %2369 = vmatprep.subr.mxu0 0.0
  %2370 = vmatpush1.msra.mxu0 0.0
  %2371 = vmatprep.subr.mxu0 0.0
  %2372 = vmatpush1.msra.mxu0 0.0
  %2373 = vmatprep.subr.mxu0 0.0
  %2374 = vmatpush1.msra.mxu0 0.0
  %2375 = vmatprep.subr.mxu0 0.0
  %2376 = vmatpush1.msra.mxu0 0.0
  %2377 = vmatprep.subr.mxu0 0.0
  %2378 = vmatpush1.msra.mxu0 0.0
  %2379 = vmatprep.subr.mxu0 0.0
  %2380 = vmatpush1.msra.mxu0 0.0
  %2381 = vmatprep.subr.mxu0 0.0
  %2382 = vmatpush1.msra.mxu0 0.0
  %2383 = vmatprep.subr.mxu0 0.0
  %2384 = vmatpush1.msra.mxu0 0.0
  %2385 = vmatprep.subr.mxu0 0.0
  %2386 = vmatpush1.msra.mxu0 0.0
  %2387 = vmatprep.subr.mxu0 0.0
  %2388 = vmatpush1.msra.mxu0 0.0
  %2389 = vmatprep.subr.mxu0 0.0
  %2390 = vmatpush1.msra.mxu0 0.0
  %2391 = vmatprep.subr.mxu0 0.0
  %2392 = vmatpush1.msra.mxu0 0.0
  %2393 = vmatprep.subr.mxu0 0.0
  %2394 = vmatpush1.msra.mxu0 0.0
  %2395 = vmatprep.subr.mxu0 0.0
  %2396 = vmatpush1.msra.mxu0 0.0
  %2397 = vmatprep.subr.mxu0 0.0
  %2398 = vmatpush1.msra.mxu0 0.0
  %2399 = vmatprep.subr.mxu0 0.0
  %2400 = vmatpush1.msra.mxu0 0.0
  %2401 = vmatprep.subr.mxu0 0.0
  %2402 = vmatpush1.msra.mxu0 0.0
  %2403 = vmatprep.mubr.f32.mxu0 0.0
  %2404 = vmatmul.mubr.f32.gmra.mrb[0].mxu0 %v2329
  %v2405 = vpop.f32.mrb[0].mxu0
  %v2406 = vadd.f32 %v2220, %v2405
  %v2407 = vpop.f32.mrb[0].mxu0
  %v2408 = vadd.f32 %v2220, %v2407
  %2409 = vdwg.mxu0
  %2410 = vmatprep.subr.mxu0 %v2295
  %2411 = vmatpush1.msra.mxu0 %v2294
  %2412 = vmatprep.subr.mxu0 %v2299
  %2413 = vmatpush1.msra.mxu0 %v2298
  %2414 = vmatprep.subr.mxu0 %v2303
  %2415 = vmatpush1.msra.mxu0 %v2302
  %2416 = vmatprep.subr.mxu0 %v2307
  %2417 = vmatpush1.msra.mxu0 %v2306
  %2418 = vmatprep.subr.mxu0 %v2337
  %2419 = vmatpush1.msra.mxu0 %v2335
  %2420 = vmatprep.subr.mxu0 0.0
  %2421 = vmatpush1.msra.mxu0 0.0
  %2422 = vmatprep.subr.mxu0 0.0
  %2423 = vmatpush1.msra.mxu0 0.0
  %2424 = vmatprep.subr.mxu0 0.0
  %2425 = vmatpush1.msra.mxu0 0.0
  %2426 = vmatprep.subr.mxu0 0.0
  %2427 = vmatpush1.msra.mxu0 0.0
  %2428 = vmatprep.subr.mxu0 0.0
  %2429 = vmatpush1.msra.mxu0 0.0
  %2430 = vmatprep.subr.mxu0 0.0
  %2431 = vmatpush1.msra.mxu0 0.0
  %2432 = vmatprep.subr.mxu0 0.0
  %2433 = vmatpush1.msra.mxu0 0.0
  %2434 = vmatprep.subr.mxu0 0.0
  %2435 = vmatpush1.msra.mxu0 0.0
  %2436 = vmatprep.subr.mxu0 0.0
  %2437 = vmatpush1.msra.mxu0 0.0
  %2438 = vmatprep.subr.mxu0 0.0
  %2439 = vmatpush1.msra.mxu0 0.0
  %2440 = vmatprep.subr.mxu0 0.0
  %2441 = vmatpush1.msra.mxu0 0.0
  %2442 = vmatprep.subr.mxu0 0.0
  %2443 = vmatpush1.msra.mxu0 0.0
  %2444 = vmatprep.subr.mxu0 0.0
  %2445 = vmatpush1.msra.mxu0 0.0
  %2446 = vmatprep.subr.mxu0 0.0
  %2447 = vmatpush1.msra.mxu0 0.0
  %2448 = vmatprep.subr.mxu0 0.0
  %2449 = vmatpush1.msra.mxu0 0.0
  %2450 = vmatprep.subr.mxu0 0.0
  %2451 = vmatpush1.msra.mxu0 0.0
  %2452 = vmatprep.subr.mxu0 0.0
  %2453 = vmatpush1.msra.mxu0 0.0
  %2454 = vmatprep.subr.mxu0 0.0
  %2455 = vmatpush1.msra.mxu0 0.0
  %2456 = vmatprep.subr.mxu0 0.0
  %2457 = vmatpush1.msra.mxu0 0.0
  %2458 = vmatprep.subr.mxu0 0.0
  %2459 = vmatpush1.msra.mxu0 0.0
  %2460 = vmatprep.subr.mxu0 0.0
  %2461 = vmatpush1.msra.mxu0 0.0
  %2462 = vmatprep.subr.mxu0 0.0
  %2463 = vmatpush1.msra.mxu0 0.0
  %2464 = vmatprep.subr.mxu0 0.0
  %2465 = vmatpush1.msra.mxu0 0.0
  %2466 = vmatprep.subr.mxu0 0.0
  %2467 = vmatpush1.msra.mxu0 0.0
  %2468 = vmatprep.subr.mxu0 0.0
  %2469 = vmatpush1.msra.mxu0 0.0
  %2470 = vmatprep.subr.mxu0 0.0
  %2471 = vmatpush1.msra.mxu0 0.0
  %2472 = vmatprep.subr.mxu0 0.0
  %2473 = vmatpush1.msra.mxu0 0.0
  %2474 = vmatprep.mubr.f32.mxu0 0.0
  %2475 = vmatmul.mubr.f32.gmra.mrb[0].mxu0 %v2329
  %v2476 = vpop.f32.mrb[0].mxu0
  %v2477 = vadd.f32 %v2220, %v2476
  %v2478 = vpop.f32.mrb[0].mxu0
  %v2479 = vadd.f32 %v2220, %v2478
  %2480 = vdwg.mxu0
  %v2481 = vmax.f32 %v2406, 0.0
  %v2482 = vmax.f32 %v2408, 0.0
  %v2483 = vmax.f32 %v2477, 0.0
  %v2484 = vmax.f32 %v2479, 0.0
  %v2485 = vld [vmem:[%s3] sm:$0xff]
  %v2486 = vld [vmem:[%s31] sm:$0xff]
  %v2487 = vld [vmem:[%s33] sm:$0xff]
  %v2488 = vlaneseq
  %v2489 = vshrl.u32 %v2488, 7
  %v2490 = vsub.s32 0, %v2489
  %v2491 = vrot.slane %v143, %v2490
  %2493 = vrot.lane.b32.xlu0 %v2491, 119
  %v2494 = vpop.permute.xlu0 %2493
  %v2496 = vmul.f32 %v2494, 0.0
  %v2497 = vmul.f32 %v2485, %v2494
  %v2498 = vlaneseq
  %v2499 = vshrl.u32 %v2498, 7
  %v2500 = vsub.s32 1, %v2499
  %v2501 = vrot.slane %v143, %v2500
  %2503 = vrot.lane.b32.xlu0 %v2501, 120
  %v2504 = vpop.permute.xlu0 %2503
  %v2506 = vmul.f32 %v2504, 0.0
  %v2507 = vmul.f32 %v2485, %v2504
  %v2508 = vlaneseq
  %v2509 = vshrl.u32 %v2508, 7
  %v2510 = vsub.s32 2, %v2509
  %v2511 = vrot.slane %v143, %v2510
  %2513 = vrot.lane.b32.xlu0 %v2511, 121
  %v2514 = vpop.permute.xlu0 %2513
  %v2516 = vmul.f32 %v2514, 0.0
  %v2517 = vmul.f32 %v2485, %v2514
  %v2518 = vlaneseq
  %v2519 = vshrl.u32 %v2518, 7
  %v2520 = vsub.s32 3, %v2519
  %v2521 = vrot.slane %v143, %v2520
  %2523 = vrot.lane.b32.xlu0 %v2521, 127
  %v2524 = vpop.permute.xlu0 %2523
  %v2526 = vmul.f32 %v2524, 0.0
  %v2527 = vmul.f32 %v2485, %v2524
  %v2528 = vlaneseq
  %v2529 = vshrl.u32 %v2528, 7
  %v2530 = vsub.s32 5, %v2529
  %v2531 = vrot.slane %v143, %v2530
  %2533 = vrot.lane.b32.xlu0 %v2531, 1
  %v2534 = vpop.permute.xlu0 %2533
  %v2536 = vmul.f32 %v2485, %v2534
  %v2537 = vmul.f32 %v2534, 0.0
  %v2538 = vlaneseq
  %v2539 = vshrl.u32 %v2538, 7
  %v2540 = vsub.s32 6, %v2539
  %v2541 = vrot.slane %v143, %v2540
  %2543 = vrot.lane.b32.xlu0 %v2541, 7
  %v2544 = vpop.permute.xlu0 %2543
  %v2546 = vmul.f32 %v2485, %v2544
  %v2547 = vmul.f32 %v2544, 0.0
  %v2548 = vlaneseq
  %v2549 = vshrl.u32 %v2548, 7
  %v2550 = vsub.s32 7, %v2549
  %v2551 = vrot.slane %v143, %v2550
  %2553 = vrot.lane.b32.xlu0 %v2551, 8
  %v2554 = vpop.permute.xlu0 %2553
  %v2556 = vmul.f32 %v2485, %v2554
  %v2557 = vmul.f32 %v2554, 0.0
  %v2558 = vlaneseq
  %v2559 = vshrl.u32 %v2558, 7
  %v2560 = vsub.s32 0, %v2559
  %v2561 = vrot.slane %v144, %v2560
  %2563 = vrot.lane.b32.xlu0 %v2561, 9
  %v2564 = vpop.permute.xlu0 %2563
  %v2566 = vmul.f32 %v2485, %v2564
  %v2567 = vmul.f32 %v2564, 0.0
  %2570 = vrot.lane.b32.xlu0 %v2506, 127
  %v2571 = vpop.permute.xlu0 %2570
  %2572 = vrot.lane.b32.xlu0 %v2507, 127
  %v2573 = vpop.permute.xlu0 %2572
  %v2574 = vsel %vm309, %v2571, %v2573
  %2577 = vrot.lane.b32.xlu0 %v2516, 126
  %v2578 = vpop.permute.xlu0 %2577
  %2579 = vrot.lane.b32.xlu0 %v2517, 126
  %v2580 = vpop.permute.xlu0 %2579
  %v2581 = vsel %vm535, %v2578, %v2580
  %2584 = vrot.lane.b32.xlu0 %v2526, 120
  %v2585 = vpop.permute.xlu0 %2584
  %2586 = vrot.lane.b32.xlu0 %v2527, 120
  %v2587 = vpop.permute.xlu0 %2586
  %vm2588 = vcmask 982016
  %v2589 = vsel %vm2588, %v2585, %v2587
  %2591 = vrot.lane.b32.xlu0 %v2485, 119
  %v2592 = vpop.permute.xlu0 %2591
  %2595 = vrot.lane.b32.xlu0 %v2536, 118
  %v2596 = vpop.permute.xlu0 %2595
  %2597 = vrot.lane.b32.xlu0 %v2537, 118
  %v2598 = vpop.permute.xlu0 %2597
  %vm2599 = vcmask 965632
  %v2600 = vsel %vm2599, %v2596, %v2598
  %2603 = vrot.lane.b32.xlu0 %v2546, 112
  %v2604 = vpop.permute.xlu0 %2603
  %2605 = vrot.lane.b32.xlu0 %v2547, 112
  %v2606 = vpop.permute.xlu0 %2605
  %v2607 = vsel %vm225, %v2604, %v2606
  %2610 = vrot.lane.b32.xlu0 %v2556, 111
  %v2611 = vpop.permute.xlu0 %2610
  %2612 = vrot.lane.b32.xlu0 %v2557, 111
  %v2613 = vpop.permute.xlu0 %2612
  %v2614 = vsel %vm183, %v2611, %v2613
  %2617 = vrot.lane.b32.xlu0 %v2566, 110
  %v2618 = vpop.permute.xlu0 %2617
  %2619 = vrot.lane.b32.xlu0 %v2567, 110
  %v2620 = vpop.permute.xlu0 %2619
  %v2621 = vsel %vm610, %v2618, %v2620
  %2623 = vset.pattern.permute.xlu0 0
  %2624 = vperm.xlu0 %2623, %v2487
  %v2625 = vpop.permute.xlu0 %2624
  %2629 = vrot.lane.b32.xlu0 %v2496, 9
  %v2630 = vpop.permute.xlu0 %2629
  %2631 = vrot.lane.b32.xlu0 %v2497, 9
  %v2632 = vpop.permute.xlu0 %2631
  %2633 = vrot.lane.b32.xlu0 %v2574, 9
  %v2634 = vpop.permute.xlu0 %2633
  %2635 = vrot.lane.b32.xlu0 %v2573, 9
  %v2636 = vpop.permute.xlu0 %2635
  %2637 = vrot.lane.b32.xlu0 %v2581, 9
  %v2638 = vpop.permute.xlu0 %2637
  %2639 = vrot.lane.b32.xlu0 %v2580, 9
  %v2640 = vpop.permute.xlu0 %2639
  %2641 = vrot.lane.b32.xlu0 %v2589, 9
  %v2642 = vpop.permute.xlu0 %2641
  %2643 = vrot.lane.b32.xlu0 %v2587, 9
  %v2644 = vpop.permute.xlu0 %2643
  %2645 = vrot.lane.b32.xlu0 %v2592, 9
  %v2646 = vpop.permute.xlu0 %2645
  %2647 = vrot.lane.b32.xlu0 %v2596, 9
  %v2648 = vpop.permute.xlu0 %2647
  %2649 = vrot.lane.b32.xlu0 %v2600, 9
  %v2650 = vpop.permute.xlu0 %2649
  %2651 = vrot.lane.b32.xlu0 %v2604, 9
  %v2652 = vpop.permute.xlu0 %2651
  %2653 = vrot.lane.b32.xlu0 %v2607, 9
  %v2654 = vpop.permute.xlu0 %2653
  %2655 = vrot.lane.b32.xlu0 %v2611, 9
  %v2656 = vpop.permute.xlu0 %2655
  %2657 = vrot.lane.b32.xlu0 %v2614, 9
  %v2658 = vpop.permute.xlu0 %2657
  %2659 = vrot.lane.b32.xlu0 %v2618, 9
  %v2660 = vpop.permute.xlu0 %2659
  %2661 = vrot.lane.b32.xlu0 %v2621, 9
  %v2662 = vpop.permute.xlu0 %2661
  %vm2663 = vcmask 72704
  %v2664 = vsel %vm2663, %v2630, %v2632
  %v2665 = vsel %vm2663, %v2634, %v2636
  %v2666 = vsel %vm2663, %v2638, %v2640
  %v2667 = vsel %vm2663, %v2642, %v2644
  %v2668 = vsel %vm2663, %v2648, %v2650
  %v2669 = vsel %vm2663, %v2652, %v2654
  %v2670 = vsel %vm2663, %v2656, %v2658
  %v2671 = vsel %vm2663, %v2660, %v2662
  %vm2681 = vcmask 588800
  %v2683 = vsel %vm2681, %v2486, 0
  %2685 = vmatprep.subr.mxu0 0.0
  %2686 = vmatpush1.msra.mxu0 %v2664
  %2687 = vmatprep.subr.mxu0 0.0
  %2688 = vmatpush1.msra.mxu0 %v2665
  %2689 = vmatprep.subr.mxu0 0.0
  %2690 = vmatpush1.msra.mxu0 %v2666
  %2691 = vmatprep.subr.mxu0 0.0
  %2692 = vmatpush1.msra.mxu0 %v2667
  %2693 = vmatprep.subr.mxu0 0.0
  %2694 = vmatpush1.msra.mxu0 %v2646
  %2695 = vmatprep.subr.mxu0 0.0
  %2696 = vmatpush1.msra.mxu0 %v2668
  %2697 = vmatprep.subr.mxu0 0.0
  %2698 = vmatpush1.msra.mxu0 %v2669
  %2699 = vmatprep.subr.mxu0 0.0
  %2700 = vmatpush1.msra.mxu0 %v2670
  %2701 = vmatprep.subr.mxu0 0.0
  %2702 = vmatpush1.msra.mxu0 %v2671
  %2703 = vmatprep.subr.mxu0 0.0
  %2704 = vmatpush1.msra.mxu0 0.0
  %2705 = vmatprep.subr.mxu0 0.0
  %2706 = vmatpush1.msra.mxu0 0.0
  %2707 = vmatprep.subr.mxu0 0.0
  %2708 = vmatpush1.msra.mxu0 0.0
  %2709 = vmatprep.subr.mxu0 0.0
  %2710 = vmatpush1.msra.mxu0 0.0
  %2711 = vmatprep.subr.mxu0 0.0
  %2712 = vmatpush1.msra.mxu0 0.0
  %2713 = vmatprep.subr.mxu0 0.0
  %2714 = vmatpush1.msra.mxu0 0.0
  %2715 = vmatprep.subr.mxu0 0.0
  %2716 = vmatpush1.msra.mxu0 0.0
  %2717 = vmatprep.subr.mxu0 0.0
  %2718 = vmatpush1.msra.mxu0 0.0
  %2719 = vmatprep.subr.mxu0 0.0
  %2720 = vmatpush1.msra.mxu0 0.0
  %2721 = vmatprep.subr.mxu0 0.0
  %2722 = vmatpush1.msra.mxu0 0.0
  %2723 = vmatprep.subr.mxu0 0.0
  %2724 = vmatpush1.msra.mxu0 0.0
  %2725 = vmatprep.subr.mxu0 0.0
  %2726 = vmatpush1.msra.mxu0 0.0
  %2727 = vmatprep.subr.mxu0 0.0
  %2728 = vmatpush1.msra.mxu0 0.0
  %2729 = vmatprep.subr.mxu0 0.0
  %2730 = vmatpush1.msra.mxu0 0.0
  %2731 = vmatprep.subr.mxu0 0.0
  %2732 = vmatpush1.msra.mxu0 0.0
  %2733 = vmatprep.subr.mxu0 0.0
  %2734 = vmatpush1.msra.mxu0 0.0
  %2735 = vmatprep.subr.mxu0 0.0
  %2736 = vmatpush1.msra.mxu0 0.0
  %2737 = vmatprep.subr.mxu0 0.0
  %2738 = vmatpush1.msra.mxu0 0.0
  %2739 = vmatprep.subr.mxu0 0.0
  %2740 = vmatpush1.msra.mxu0 0.0
  %2741 = vmatprep.subr.mxu0 0.0
  %2742 = vmatpush1.msra.mxu0 0.0
  %2743 = vmatprep.subr.mxu0 0.0
  %2744 = vmatpush1.msra.mxu0 0.0
  %2745 = vmatprep.subr.mxu0 0.0
  %2746 = vmatpush1.msra.mxu0 0.0
  %2747 = vmatprep.subr.mxu0 0.0
  %2748 = vmatpush1.msra.mxu0 0.0
  %2749 = vmatprep.mubr.f32.mxu0 0.0
  %2750 = vmatmul.mubr.f32.gmra.mrb[0].mxu0 %v2683
  %v2751 = vpop.f32.mrb[0].mxu0
  %v2752 = vadd.f32 %v2625, %v2751
  %v2753 = vpop.f32.mrb[0].mxu0
  %2754 = vdwg.mxu0
  %v2755 = vmax.f32 %v2752, 0.0
  %v2756 = vld [vmem:[%s35] sm:$0xff]
  %v2757 = vld [vmem:[%s37] sm:$0xff]
  %v2758 = vmul.f32 %v2755, %v2494
  %v2759 = vmul.f32 %v2755, %v2504
  %v2760 = vmul.f32 %v2755, %v2514
  %v2761 = vmul.f32 %v2755, %v2524
  %v2762 = vmul.f32 %v2755, %v2534
  %v2763 = vmul.f32 %v2755, %v2544
  %v2764 = vmul.f32 %v2755, %v2554
  %v2765 = vmul.f32 %v2755, %v2564
  %2767 = vrot.lane.b32.xlu0 %v2759, 127
  %v2768 = vpop.permute.xlu0 %2767
  %v2769 = vsel %vm309, %v2571, %v2768
  %2771 = vrot.lane.b32.xlu0 %v2760, 126
  %v2772 = vpop.permute.xlu0 %2771
  %v2773 = vsel %vm535, %v2578, %v2772
  %2775 = vrot.lane.b32.xlu0 %v2761, 120
  %v2776 = vpop.permute.xlu0 %2775
  %v2777 = vsel %vm2588, %v2585, %v2776
  %2779 = vrot.lane.b32.xlu0 %v2755, 119
  %v2780 = vpop.permute.xlu0 %2779
  %2782 = vrot.lane.b32.xlu0 %v2762, 118
  %v2783 = vpop.permute.xlu0 %2782
  %v2784 = vsel %vm2599, %v2783, %v2598
  %2786 = vrot.lane.b32.xlu0 %v2763, 112
  %v2787 = vpop.permute.xlu0 %2786
  %v2788 = vsel %vm225, %v2787, %v2606
  %2790 = vrot.lane.b32.xlu0 %v2764, 111
  %v2791 = vpop.permute.xlu0 %2790
  %v2792 = vsel %vm183, %v2791, %v2613
  %2794 = vrot.lane.b32.xlu0 %v2765, 110
  %v2795 = vpop.permute.xlu0 %2794
  %v2796 = vsel %vm610, %v2795, %v2620
  %2798 = vset.pattern.permute.xlu0 0
  %2799 = vperm.xlu0 %2798, %v2757
  %v2800 = vpop.permute.xlu0 %2799
  %2803 = vrot.lane.b32.xlu0 %v2758, 9
  %v2804 = vpop.permute.xlu0 %2803
  %2805 = vrot.lane.b32.xlu0 %v2769, 9
  %v2806 = vpop.permute.xlu0 %2805
  %2807 = vrot.lane.b32.xlu0 %v2768, 9
  %v2808 = vpop.permute.xlu0 %2807
  %2809 = vrot.lane.b32.xlu0 %v2773, 9
  %v2810 = vpop.permute.xlu0 %2809
  %2811 = vrot.lane.b32.xlu0 %v2772, 9
  %v2812 = vpop.permute.xlu0 %2811
  %2813 = vrot.lane.b32.xlu0 %v2777, 9
  %v2814 = vpop.permute.xlu0 %2813
  %2815 = vrot.lane.b32.xlu0 %v2776, 9
  %v2816 = vpop.permute.xlu0 %2815
  %2817 = vrot.lane.b32.xlu0 %v2780, 9
  %v2818 = vpop.permute.xlu0 %2817
  %2819 = vrot.lane.b32.xlu0 %v2783, 9
  %v2820 = vpop.permute.xlu0 %2819
  %2821 = vrot.lane.b32.xlu0 %v2784, 9
  %v2822 = vpop.permute.xlu0 %2821
  %2823 = vrot.lane.b32.xlu0 %v2787, 9
  %v2824 = vpop.permute.xlu0 %2823
  %2825 = vrot.lane.b32.xlu0 %v2788, 9
  %v2826 = vpop.permute.xlu0 %2825
  %2827 = vrot.lane.b32.xlu0 %v2791, 9
  %v2828 = vpop.permute.xlu0 %2827
  %2829 = vrot.lane.b32.xlu0 %v2792, 9
  %v2830 = vpop.permute.xlu0 %2829
  %2831 = vrot.lane.b32.xlu0 %v2795, 9
  %v2832 = vpop.permute.xlu0 %2831
  %2833 = vrot.lane.b32.xlu0 %v2796, 9
  %v2834 = vpop.permute.xlu0 %2833
  %v2835 = vsel %vm2663, %v2630, %v2804
  %v2836 = vsel %vm2663, %v2806, %v2808
  %v2837 = vsel %vm2663, %v2810, %v2812
  %v2838 = vsel %vm2663, %v2814, %v2816
  %v2839 = vsel %vm2663, %v2820, %v2822
  %v2840 = vsel %vm2663, %v2824, %v2826
  %v2841 = vsel %vm2663, %v2828, %v2830
  %v2842 = vsel %vm2663, %v2832, %v2834
  %v2853 = vsel %vm2681, %v2756, 0
  %2855 = vmatprep.subr.mxu0 0.0
  %2856 = vmatpush1.msra.mxu0 %v2835
  %2857 = vmatprep.subr.mxu0 0.0
  %2858 = vmatpush1.msra.mxu0 %v2836
  %2859 = vmatprep.subr.mxu0 0.0
  %2860 = vmatpush1.msra.mxu0 %v2837
  %2861 = vmatprep.subr.mxu0 0.0
  %2862 = vmatpush1.msra.mxu0 %v2838
  %2863 = vmatprep.subr.mxu0 0.0
  %2864 = vmatpush1.msra.mxu0 %v2818
  %2865 = vmatprep.subr.mxu0 0.0
  %2866 = vmatpush1.msra.mxu0 %v2839
  %2867 = vmatprep.subr.mxu0 0.0
  %2868 = vmatpush1.msra.mxu0 %v2840
  %2869 = vmatprep.subr.mxu0 0.0
  %2870 = vmatpush1.msra.mxu0 %v2841
  %2871 = vmatprep.subr.mxu0 0.0
  %2872 = vmatpush1.msra.mxu0 %v2842
  %2873 = vmatprep.subr.mxu0 0.0
  %2874 = vmatpush1.msra.mxu0 0.0
  %2875 = vmatprep.subr.mxu0 0.0
  %2876 = vmatpush1.msra.mxu0 0.0
  %2877 = vmatprep.subr.mxu0 0.0
  %2878 = vmatpush1.msra.mxu0 0.0
  %2879 = vmatprep.subr.mxu0 0.0
  %2880 = vmatpush1.msra.mxu0 0.0
  %2881 = vmatprep.subr.mxu0 0.0
  %2882 = vmatpush1.msra.mxu0 0.0
  %2883 = vmatprep.subr.mxu0 0.0
  %2884 = vmatpush1.msra.mxu0 0.0
  %2885 = vmatprep.subr.mxu0 0.0
  %2886 = vmatpush1.msra.mxu0 0.0
  %2887 = vmatprep.subr.mxu0 0.0
  %2888 = vmatpush1.msra.mxu0 0.0
  %2889 = vmatprep.subr.mxu0 0.0
  %2890 = vmatpush1.msra.mxu0 0.0
  %2891 = vmatprep.subr.mxu0 0.0
  %2892 = vmatpush1.msra.mxu0 0.0
  %2893 = vmatprep.subr.mxu0 0.0
  %2894 = vmatpush1.msra.mxu0 0.0
  %2895 = vmatprep.subr.mxu0 0.0
  %2896 = vmatpush1.msra.mxu0 0.0
  %2897 = vmatprep.subr.mxu0 0.0
  %2898 = vmatpush1.msra.mxu0 0.0
  %2899 = vmatprep.subr.mxu0 0.0
  %2900 = vmatpush1.msra.mxu0 0.0
  %2901 = vmatprep.subr.mxu0 0.0
  %2902 = vmatpush1.msra.mxu0 0.0
  %2903 = vmatprep.subr.mxu0 0.0
  %2904 = vmatpush1.msra.mxu0 0.0
  %2905 = vmatprep.subr.mxu0 0.0
  %2906 = vmatpush1.msra.mxu0 0.0
  %2907 = vmatprep.subr.mxu0 0.0
  %2908 = vmatpush1.msra.mxu0 0.0
  %2909 = vmatprep.subr.mxu0 0.0
  %2910 = vmatpush1.msra.mxu0 0.0
  %2911 = vmatprep.subr.mxu0 0.0
  %2912 = vmatpush1.msra.mxu0 0.0
  %2913 = vmatprep.subr.mxu0 0.0
  %2914 = vmatpush1.msra.mxu0 0.0
  %2915 = vmatprep.subr.mxu0 0.0
  %2916 = vmatpush1.msra.mxu0 0.0
  %2917 = vmatprep.subr.mxu0 0.0
  %2918 = vmatpush1.msra.mxu0 0.0
  %2919 = vmatprep.mubr.f32.mxu0 0.0
  %2920 = vmatmul.mubr.f32.gmra.mrb[0].mxu0 %v2853
  %v2921 = vpop.f32.mrb[0].mxu0
  %v2922 = vadd.f32 %v2800, %v2921
  %v2923 = vpop.f32.mrb[0].mxu0
  %2924 = vdwg.mxu0
  %v2925 = vmax.f32 %v2922, 0.0
  %v2926 = vld [vmem:[%s39] sm:$0xff]
  %v2927 = vld [vmem:[%s41] sm:$0xff]
  %v2928 = vmul.f32 %v2925, %v2494
  %v2929 = vmul.f32 %v2925, %v2504
  %v2930 = vmul.f32 %v2925, %v2514
  %v2931 = vmul.f32 %v2925, %v2524
  %v2932 = vmul.f32 %v2925, %v2534
  %v2933 = vmul.f32 %v2925, %v2544
  %v2934 = vmul.f32 %v2925, %v2554
  %v2935 = vmul.f32 %v2925, %v2564
  %2937 = vrot.lane.b32.xlu0 %v2929, 127
  %v2938 = vpop.permute.xlu0 %2937
  %v2939 = vsel %vm309, %v2571, %v2938
  %2941 = vrot.lane.b32.xlu0 %v2930, 126
  %v2942 = vpop.permute.xlu0 %2941
  %v2943 = vsel %vm535, %v2578, %v2942
  %2945 = vrot.lane.b32.xlu0 %v2931, 120
  %v2946 = vpop.permute.xlu0 %2945
  %v2947 = vsel %vm2588, %v2585, %v2946
  %2949 = vrot.lane.b32.xlu0 %v2925, 119
  %v2950 = vpop.permute.xlu0 %2949
  %2952 = vrot.lane.b32.xlu0 %v2932, 118
  %v2953 = vpop.permute.xlu0 %2952
  %v2954 = vsel %vm2599, %v2953, %v2598
  %2956 = vrot.lane.b32.xlu0 %v2933, 112
  %v2957 = vpop.permute.xlu0 %2956
  %v2958 = vsel %vm225, %v2957, %v2606
  %2960 = vrot.lane.b32.xlu0 %v2934, 111
  %v2961 = vpop.permute.xlu0 %2960
  %v2962 = vsel %vm183, %v2961, %v2613
  %2964 = vrot.lane.b32.xlu0 %v2935, 110
  %v2965 = vpop.permute.xlu0 %2964
  %v2966 = vsel %vm610, %v2965, %v2620
  %2968 = vset.pattern.permute.xlu0 0
  %2969 = vperm.xlu0 %2968, %v2927
  %v2970 = vpop.permute.xlu0 %2969
  %2973 = vrot.lane.b32.xlu0 %v2928, 9
  %v2974 = vpop.permute.xlu0 %2973
  %2975 = vrot.lane.b32.xlu0 %v2939, 9
  %v2976 = vpop.permute.xlu0 %2975
  %2977 = vrot.lane.b32.xlu0 %v2938, 9
  %v2978 = vpop.permute.xlu0 %2977
  %2979 = vrot.lane.b32.xlu0 %v2943, 9
  %v2980 = vpop.permute.xlu0 %2979
  %2981 = vrot.lane.b32.xlu0 %v2942, 9
  %v2982 = vpop.permute.xlu0 %2981
  %2983 = vrot.lane.b32.xlu0 %v2947, 9
  %v2984 = vpop.permute.xlu0 %2983
  %2985 = vrot.lane.b32.xlu0 %v2946, 9
  %v2986 = vpop.permute.xlu0 %2985
  %2987 = vrot.lane.b32.xlu0 %v2950, 9
  %v2988 = vpop.permute.xlu0 %2987
  %2989 = vrot.lane.b32.xlu0 %v2953, 9
  %v2990 = vpop.permute.xlu0 %2989
  %2991 = vrot.lane.b32.xlu0 %v2954, 9
  %v2992 = vpop.permute.xlu0 %2991
  %2993 = vrot.lane.b32.xlu0 %v2957, 9
  %v2994 = vpop.permute.xlu0 %2993
  %2995 = vrot.lane.b32.xlu0 %v2958, 9
  %v2996 = vpop.permute.xlu0 %2995
  %2997 = vrot.lane.b32.xlu0 %v2961, 9
  %v2998 = vpop.permute.xlu0 %2997
  %2999 = vrot.lane.b32.xlu0 %v2962, 9
  %v3000 = vpop.permute.xlu0 %2999
  %3001 = vrot.lane.b32.xlu0 %v2965, 9
  %v3002 = vpop.permute.xlu0 %3001
  %3003 = vrot.lane.b32.xlu0 %v2966, 9
  %v3004 = vpop.permute.xlu0 %3003
  %v3005 = vsel %vm2663, %v2630, %v2974
  %v3006 = vsel %vm2663, %v2976, %v2978
  %v3007 = vsel %vm2663, %v2980, %v2982
  %v3008 = vsel %vm2663, %v2984, %v2986
  %v3009 = vsel %vm2663, %v2990, %v2992
  %v3010 = vsel %vm2663, %v2994, %v2996
  %v3011 = vsel %vm2663, %v2998, %v3000
  %v3012 = vsel %vm2663, %v3002, %v3004
  %v3023 = vsel %vm2681, %v2926, 0
  %3025 = vmatprep.subr.mxu0 0.0
  %3026 = vmatpush1.msra.mxu0 %v3005
  %3027 = vmatprep.subr.mxu0 0.0
  %3028 = vmatpush1.msra.mxu0 %v3006
  %3029 = vmatprep.subr.mxu0 0.0
  %3030 = vmatpush1.msra.mxu0 %v3007
  %3031 = vmatprep.subr.mxu0 0.0
  %3032 = vmatpush1.msra.mxu0 %v3008
  %3033 = vmatprep.subr.mxu0 0.0
  %3034 = vmatpush1.msra.mxu0 %v2988
  %3035 = vmatprep.subr.mxu0 0.0
  %3036 = vmatpush1.msra.mxu0 %v3009
  %3037 = vmatprep.subr.mxu0 0.0
  %3038 = vmatpush1.msra.mxu0 %v3010
  %3039 = vmatprep.subr.mxu0 0.0
  %3040 = vmatpush1.msra.mxu0 %v3011
  %3041 = vmatprep.subr.mxu0 0.0
  %3042 = vmatpush1.msra.mxu0 %v3012
  %3043 = vmatprep.subr.mxu0 0.0
  %3044 = vmatpush1.msra.mxu0 0.0
  %3045 = vmatprep.subr.mxu0 0.0
  %3046 = vmatpush1.msra.mxu0 0.0
  %3047 = vmatprep.subr.mxu0 0.0
  %3048 = vmatpush1.msra.mxu0 0.0
  %3049 = vmatprep.subr.mxu0 0.0
  %3050 = vmatpush1.msra.mxu0 0.0
  %3051 = vmatprep.subr.mxu0 0.0
  %3052 = vmatpush1.msra.mxu0 0.0
  %3053 = vmatprep.subr.mxu0 0.0
  %3054 = vmatpush1.msra.mxu0 0.0
  %3055 = vmatprep.subr.mxu0 0.0
  %3056 = vmatpush1.msra.mxu0 0.0
  %3057 = vmatprep.subr.mxu0 0.0
  %3058 = vmatpush1.msra.mxu0 0.0
  %3059 = vmatprep.subr.mxu0 0.0
  %3060 = vmatpush1.msra.mxu0 0.0
  %3061 = vmatprep.subr.mxu0 0.0
  %3062 = vmatpush1.msra.mxu0 0.0
  %3063 = vmatprep.subr.mxu0 0.0
  %3064 = vmatpush1.msra.mxu0 0.0
  %3065 = vmatprep.subr.mxu0 0.0
  %3066 = vmatpush1.msra.mxu0 0.0
  %3067 = vmatprep.subr.mxu0 0.0
  %3068 = vmatpush1.msra.mxu0 0.0
  %3069 = vmatprep.subr.mxu0 0.0
  %3070 = vmatpush1.msra.mxu0 0.0
  %3071 = vmatprep.subr.mxu0 0.0
  %3072 = vmatpush1.msra.mxu0 0.0
  %3073 = vmatprep.subr.mxu0 0.0
  %3074 = vmatpush1.msra.mxu0 0.0
  %3075 = vmatprep.subr.mxu0 0.0
  %3076 = vmatpush1.msra.mxu0 0.0
  %3077 = vmatprep.subr.mxu0 0.0
  %3078 = vmatpush1.msra.mxu0 0.0
  %3079 = vmatprep.subr.mxu0 0.0
  %3080 = vmatpush1.msra.mxu0 0.0
  %3081 = vmatprep.subr.mxu0 0.0
  %3082 = vmatpush1.msra.mxu0 0.0
  %3083 = vmatprep.subr.mxu0 0.0
  %3084 = vmatpush1.msra.mxu0 0.0
  %3085 = vmatprep.subr.mxu0 0.0
  %3086 = vmatpush1.msra.mxu0 0.0
  %3087 = vmatprep.subr.mxu0 0.0
  %3088 = vmatpush1.msra.mxu0 0.0
  %3089 = vmatprep.mubr.f32.mxu0 0.0
  %3090 = vmatmul.mubr.f32.gmra.mrb[0].mxu0 %v3023
  %v3091 = vpop.f32.mrb[0].mxu0
  %v3092 = vadd.f32 %v2970, %v3091
  %v3093 = vpop.f32.mrb[0].mxu0
  %3094 = vdwg.mxu0
  %v3095 = vmax.f32 %v3092, 0.0
  %v3096 = vld [vmem:[%s43] sm:$0xff]
  %v3097 = vld [vmem:[%s45] sm:$0xff]
  %v3098 = vmul.f32 %v3095, %v2494
  %v3099 = vmul.f32 %v3095, %v2504
  %v3100 = vmul.f32 %v3095, %v2514
  %v3101 = vmul.f32 %v3095, %v2524
  %v3102 = vmul.f32 %v3095, %v2534
  %v3103 = vmul.f32 %v3095, %v2544
  %v3104 = vmul.f32 %v3095, %v2554
  %v3105 = vmul.f32 %v3095, %v2564
  %3107 = vrot.lane.b32.xlu0 %v3099, 127
  %v3108 = vpop.permute.xlu0 %3107
  %v3109 = vsel %vm309, %v2571, %v3108
  %3111 = vrot.lane.b32.xlu0 %v3100, 126
  %v3112 = vpop.permute.xlu0 %3111
  %v3113 = vsel %vm535, %v2578, %v3112
  %3115 = vrot.lane.b32.xlu0 %v3101, 120
  %v3116 = vpop.permute.xlu0 %3115
  %v3117 = vsel %vm2588, %v2585, %v3116
  %3119 = vrot.lane.b32.xlu0 %v3095, 119
  %v3120 = vpop.permute.xlu0 %3119
  %3122 = vrot.lane.b32.xlu0 %v3102, 118
  %v3123 = vpop.permute.xlu0 %3122
  %v3124 = vsel %vm2599, %v3123, %v2598
  %3126 = vrot.lane.b32.xlu0 %v3103, 112
  %v3127 = vpop.permute.xlu0 %3126
  %v3128 = vsel %vm225, %v3127, %v2606
  %3130 = vrot.lane.b32.xlu0 %v3104, 111
  %v3131 = vpop.permute.xlu0 %3130
  %v3132 = vsel %vm183, %v3131, %v2613
  %3134 = vrot.lane.b32.xlu0 %v3105, 110
  %v3135 = vpop.permute.xlu0 %3134
  %v3136 = vsel %vm610, %v3135, %v2620
  %3138 = vset.pattern.permute.xlu0 0
  %3139 = vperm.xlu0 %3138, %v3097
  %v3140 = vpop.permute.xlu0 %3139
  %3143 = vrot.lane.b32.xlu0 %v3098, 9
  %v3144 = vpop.permute.xlu0 %3143
  %3145 = vrot.lane.b32.xlu0 %v3109, 9
  %v3146 = vpop.permute.xlu0 %3145
  %3147 = vrot.lane.b32.xlu0 %v3108, 9
  %v3148 = vpop.permute.xlu0 %3147
  %3149 = vrot.lane.b32.xlu0 %v3113, 9
  %v3150 = vpop.permute.xlu0 %3149
  %3151 = vrot.lane.b32.xlu0 %v3112, 9
  %v3152 = vpop.permute.xlu0 %3151
  %3153 = vrot.lane.b32.xlu0 %v3117, 9
  %v3154 = vpop.permute.xlu0 %3153
  %3155 = vrot.lane.b32.xlu0 %v3116, 9
  %v3156 = vpop.permute.xlu0 %3155
  %3157 = vrot.lane.b32.xlu0 %v3120, 9
  %v3158 = vpop.permute.xlu0 %3157
  %3159 = vrot.lane.b32.xlu0 %v3123, 9
  %v3160 = vpop.permute.xlu0 %3159
  %3161 = vrot.lane.b32.xlu0 %v3124, 9
  %v3162 = vpop.permute.xlu0 %3161
  %3163 = vrot.lane.b32.xlu0 %v3127, 9
  %v3164 = vpop.permute.xlu0 %3163
  %3165 = vrot.lane.b32.xlu0 %v3128, 9
  %v3166 = vpop.permute.xlu0 %3165
  %3167 = vrot.lane.b32.xlu0 %v3131, 9
  %v3168 = vpop.permute.xlu0 %3167
  %3169 = vrot.lane.b32.xlu0 %v3132, 9
  %v3170 = vpop.permute.xlu0 %3169
  %3171 = vrot.lane.b32.xlu0 %v3135, 9
  %v3172 = vpop.permute.xlu0 %3171
  %3173 = vrot.lane.b32.xlu0 %v3136, 9
  %v3174 = vpop.permute.xlu0 %3173
  %v3175 = vsel %vm2663, %v2630, %v3144
  %v3176 = vsel %vm2663, %v3146, %v3148
  %v3177 = vsel %vm2663, %v3150, %v3152
  %v3178 = vsel %vm2663, %v3154, %v3156
  %v3179 = vsel %vm2663, %v3160, %v3162
  %v3180 = vsel %vm2663, %v3164, %v3166
  %v3181 = vsel %vm2663, %v3168, %v3170
  %v3182 = vsel %vm2663, %v3172, %v3174
  %v3193 = vsel %vm2681, %v3096, 0
  %3195 = vmatprep.subr.mxu0 0.0
  %3196 = vmatpush1.msra.mxu0 %v3175
  %3197 = vmatprep.subr.mxu0 0.0
  %3198 = vmatpush1.msra.mxu0 %v3176
  %3199 = vmatprep.subr.mxu0 0.0
  %3200 = vmatpush1.msra.mxu0 %v3177
  %3201 = vmatprep.subr.mxu0 0.0
  %3202 = vmatpush1.msra.mxu0 %v3178
  %3203 = vmatprep.subr.mxu0 0.0
  %3204 = vmatpush1.msra.mxu0 %v3158
  %3205 = vmatprep.subr.mxu0 0.0
  %3206 = vmatpush1.msra.mxu0 %v3179
  %3207 = vmatprep.subr.mxu0 0.0
  %3208 = vmatpush1.msra.mxu0 %v3180
  %3209 = vmatprep.subr.mxu0 0.0
  %3210 = vmatpush1.msra.mxu0 %v3181
  %3211 = vmatprep.subr.mxu0 0.0
  %3212 = vmatpush1.msra.mxu0 %v3182
  %3213 = vmatprep.subr.mxu0 0.0
  %3214 = vmatpush1.msra.mxu0 0.0
  %3215 = vmatprep.subr.mxu0 0.0
  %3216 = vmatpush1.msra.mxu0 0.0
  %3217 = vmatprep.subr.mxu0 0.0
  %3218 = vmatpush1.msra.mxu0 0.0
  %3219 = vmatprep.subr.mxu0 0.0
  %3220 = vmatpush1.msra.mxu0 0.0
  %3221 = vmatprep.subr.mxu0 0.0
  %3222 = vmatpush1.msra.mxu0 0.0
  %3223 = vmatprep.subr.mxu0 0.0
  %3224 = vmatpush1.msra.mxu0 0.0
  %3225 = vmatprep.subr.mxu0 0.0
  %3226 = vmatpush1.msra.mxu0 0.0
  %3227 = vmatprep.subr.mxu0 0.0
  %3228 = vmatpush1.msra.mxu0 0.0
  %3229 = vmatprep.subr.mxu0 0.0
  %3230 = vmatpush1.msra.mxu0 0.0
  %3231 = vmatprep.subr.mxu0 0.0
  %3232 = vmatpush1.msra.mxu0 0.0
  %3233 = vmatprep.subr.mxu0 0.0
  %3234 = vmatpush1.msra.mxu0 0.0
  %3235 = vmatprep.subr.mxu0 0.0
  %3236 = vmatpush1.msra.mxu0 0.0
  %3237 = vmatprep.subr.mxu0 0.0
  %3238 = vmatpush1.msra.mxu0 0.0
  %3239 = vmatprep.subr.mxu0 0.0
  %3240 = vmatpush1.msra.mxu0 0.0
  %3241 = vmatprep.subr.mxu0 0.0
  %3242 = vmatpush1.msra.mxu0 0.0
  %3243 = vmatprep.subr.mxu0 0.0
  %3244 = vmatpush1.msra.mxu0 0.0
  %3245 = vmatprep.subr.mxu0 0.0
  %3246 = vmatpush1.msra.mxu0 0.0
  %3247 = vmatprep.subr.mxu0 0.0
  %3248 = vmatpush1.msra.mxu0 0.0
  %3249 = vmatprep.subr.mxu0 0.0
  %3250 = vmatpush1.msra.mxu0 0.0
  %3251 = vmatprep.subr.mxu0 0.0
  %3252 = vmatpush1.msra.mxu0 0.0
  %3253 = vmatprep.subr.mxu0 0.0
  %3254 = vmatpush1.msra.mxu0 0.0
  %3255 = vmatprep.subr.mxu0 0.0
  %3256 = vmatpush1.msra.mxu0 0.0
  %3257 = vmatprep.subr.mxu0 0.0
  %3258 = vmatpush1.msra.mxu0 0.0
  %3259 = vmatprep.mubr.f32.mxu0 0.0
  %3260 = vmatmul.mubr.f32.gmra.mrb[0].mxu0 %v3193
  %v3261 = vpop.f32.mrb[0].mxu0
  %v3262 = vadd.f32 %v3140, %v3261
  %v3263 = vpop.f32.mrb[0].mxu0
  %3264 = vdwg.mxu0
  %v3265 = vmax.f32 %v3262, 0.0
  %v3266 = vld [vmem:[%s47] sm:$0xf]
  %vm3267 = vcmask 64512
  %v3269 = vsel %vm3267, %v3266, 0
  %3271 = vmatprep.subr.mxu0 0.0
  %3272 = vmatpush1.msra.mxu0 %v3265
  %3273 = vmatprep.subr.mxu0 0.0
  %3274 = vmatpush1.msra.mxu0 0.0
  %3275 = vmatprep.subr.mxu0 0.0
  %3276 = vmatpush1.msra.mxu0 0.0
  %3277 = vmatprep.subr.mxu0 0.0
  %3278 = vmatpush1.msra.mxu0 0.0
  %3279 = vmatprep.subr.mxu0 0.0
  %3280 = vmatpush1.msra.mxu0 0.0
  %3281 = vmatprep.subr.mxu0 0.0
  %3282 = vmatpush1.msra.mxu0 0.0
  %3283 = vmatprep.subr.mxu0 0.0
  %3284 = vmatpush1.msra.mxu0 0.0
  %3285 = vmatprep.subr.mxu0 0.0
  %3286 = vmatpush1.msra.mxu0 0.0
  %3287 = vmatprep.subr.mxu0 0.0
  %3288 = vmatpush1.msra.mxu0 0.0
  %3289 = vmatprep.subr.mxu0 0.0
  %3290 = vmatpush1.msra.mxu0 0.0
  %3291 = vmatprep.subr.mxu0 0.0
  %3292 = vmatpush1.msra.mxu0 0.0
  %3293 = vmatprep.subr.mxu0 0.0
  %3294 = vmatpush1.msra.mxu0 0.0
  %3295 = vmatprep.subr.mxu0 0.0
  %3296 = vmatpush1.msra.mxu0 0.0
  %3297 = vmatprep.subr.mxu0 0.0
  %3298 = vmatpush1.msra.mxu0 0.0
  %3299 = vmatprep.subr.mxu0 0.0
  %3300 = vmatpush1.msra.mxu0 0.0
  %3301 = vmatprep.subr.mxu0 0.0
  %3302 = vmatpush1.msra.mxu0 0.0
  %3303 = vmatprep.subr.mxu0 0.0
  %3304 = vmatpush1.msra.mxu0 0.0
  %3305 = vmatprep.subr.mxu0 0.0
  %3306 = vmatpush1.msra.mxu0 0.0
  %3307 = vmatprep.subr.mxu0 0.0
  %3308 = vmatpush1.msra.mxu0 0.0
  %3309 = vmatprep.subr.mxu0 0.0
  %3310 = vmatpush1.msra.mxu0 0.0
  %3311 = vmatprep.subr.mxu0 0.0
  %3312 = vmatpush1.msra.mxu0 0.0
  %3313 = vmatprep.subr.mxu0 0.0
  %3314 = vmatpush1.msra.mxu0 0.0
  %3315 = vmatprep.subr.mxu0 0.0
  %3316 = vmatpush1.msra.mxu0 0.0
  %3317 = vmatprep.subr.mxu0 0.0
  %3318 = vmatpush1.msra.mxu0 0.0
  %3319 = vmatprep.subr.mxu0 0.0
  %3320 = vmatpush1.msra.mxu0 0.0
  %3321 = vmatprep.subr.mxu0 0.0
  %3322 = vmatpush1.msra.mxu0 0.0
  %3323 = vmatprep.subr.mxu0 0.0
  %3324 = vmatpush1.msra.mxu0 0.0
  %3325 = vmatprep.subr.mxu0 0.0
  %3326 = vmatpush1.msra.mxu0 0.0
  %3327 = vmatprep.subr.mxu0 0.0
  %3328 = vmatpush1.msra.mxu0 0.0
  %3329 = vmatprep.subr.mxu0 0.0
  %3330 = vmatpush1.msra.mxu0 0.0
  %3331 = vmatprep.subr.mxu0 0.0
  %3332 = vmatpush1.msra.mxu0 0.0
  %3333 = vmatprep.subr.mxu0 0.0
  %3334 = vmatpush1.msra.mxu0 0.0
  %3335 = vmatprep.mubr.f32.mxu0 0.0
  %3336 = vmatmul.mubr.f32.gmra.mrb[0].mxu0 %v3269
  %v3337 = vpop.f32.mrb[0].mxu0
  %v3338 = vadd.f32 0.0, %v3337
  %v3339 = vpop.f32.mrb[0].mxu0
  %3340 = vdwg.mxu0
  %v3341 = vld [vmem:[%s13] sm:$0xff]
  %v3342 = vld [vmem:[%s13 + $0x8] sm:$0xff]
  %v3343 = vld [vmem:[%s13 + $0x10] sm:$0xff]
  %v3344 = vld [vmem:[%s13 + $0x18] sm:$0xff]
  %v3345 = vld [vmem:[%s13 + $0x20] sm:$0xff]
  %v3346 = vld [vmem:[%s13 + $0x28] sm:$0xff]
  %v3347 = vld [vmem:[%s13 + $0x30] sm:$0xff]
  %v3348 = vld [vmem:[%s13 + $0x38] sm:$0xff]
  %v3349 = vld [vmem:[%s13 + $0x40] sm:$0xff]
  %v3350 = vld [vmem:[%s13 + $0x48] sm:$0xff]
  %v3351 = vld [vmem:[%s13 + $0x50] sm:$0xff]
  %v3352 = vld [vmem:[%s13 + $0x58] sm:$0xff]
  %v3353 = vld [vmem:[%s13 + $0x60] sm:$0xff]
  %v3354 = vld [vmem:[%s13 + $0x68] sm:$0xff]
  %v3355 = vld [vmem:[%s13 + $0x70] sm:$0xff]
  %v3356 = vld [vmem:[%s13 + $0x78] sm:$0xff]
  %v3357 = vld [vmem:[%s13 + $0x80] sm:$0xff]
  %v3358 = vld [vmem:[%s13 + $0x88] sm:$0xff]
  %v3359 = vld [vmem:[%s13 + $0x90] sm:$0xff]
  %v3360 = vld [vmem:[%s13 + $0x98] sm:$0xff]
  %v3361 = vld [vmem:[%s13 + $0xa0] sm:$0xff]
  %v3362 = vld [vmem:[%s13 + $0xa8] sm:$0xff]
  %v3363 = vld [vmem:[%s13 + $0xb0] sm:$0xff]
  %v3364 = vld [vmem:[%s13 + $0xb8] sm:$0xff]
  %v3365 = vld [vmem:[%s13 + $0xc0] sm:$0xff]
  %v3366 = vld [vmem:[%s13 + $0xc8] sm:$0xff]
  %v3367 = vld [vmem:[%s13 + $0xd0] sm:$0xff]
  %v3368 = vld [vmem:[%s13 + $0xd8] sm:$0xff]
  %v3369 = vld [vmem:[%s13 + $0xe0] sm:$0xff]
  %v3370 = vld [vmem:[%s13 + $0xe8] sm:$0xff]
  %v3371 = vld [vmem:[%s13 + $0xf0] sm:$0xff]
  %v3372 = vld [vmem:[%s13 + $0xf8] sm:$0xff]
  %v3373 = vld [vmem:[%s13 + $0x100] sm:$0xff]
  %v3374 = vld [vmem:[%s13 + $0x108] sm:$0xff]
  %v3375 = vld [vmem:[%s13 + $0x110] sm:$0xff]
  %v3376 = vld [vmem:[%s13 + $0x118] sm:$0xff]
  %v3377 = vld [vmem:[%s13 + $0x120] sm:$0xff]
  %v3378 = vld [vmem:[%s13 + $0x128] sm:$0xff]
  %v3379 = vld [vmem:[%s13 + $0x130] sm:$0xff]
  %v3380 = vld [vmem:[%s13 + $0x138] sm:$0xff]
  %v3381 = vld [vmem:[%s13 + $0x140] sm:$0xff]
  %v3382 = vld [vmem:[%s13 + $0x148] sm:$0xff]
  %v3383 = vld [vmem:[%s13 + $0x150] sm:$0xff]
  %v3384 = vld [vmem:[%s13 + $0x158] sm:$0xff]
  %v3385 = vld [vmem:[%s13 + $0x160] sm:$0xff]
  %v3386 = vld [vmem:[%s13 + $0x168] sm:$0xff]
  %v3387 = vld [vmem:[%s13 + $0x170] sm:$0xff]
  %v3388 = vld [vmem:[%s13 + $0x178] sm:$0xff]
  %v3389 = vld [vmem:[%s13 + $0x180] sm:$0xff]
  %v3390 = vld [vmem:[%s13 + $0x188] sm:$0xff]
  %v3391 = vld [vmem:[%s13 + $0x190] sm:$0xff]
  %v3392 = vld [vmem:[%s13 + $0x198] sm:$0xff]
  %v3393 = vld [vmem:[%s13 + $0x1a0] sm:$0xff]
  %v3394 = vld [vmem:[%s13 + $0x1a8] sm:$0xff]
  %v3395 = vld [vmem:[%s13 + $0x1b0] sm:$0xff]
  %v3396 = vld [vmem:[%s13 + $0x1b8] sm:$0xff]
  %v3397 = vld [vmem:[%s13 + $0x1c0] sm:$0xff]
  %v3398 = vld [vmem:[%s13 + $0x1c8] sm:$0xff]
  %v3399 = vld [vmem:[%s13 + $0x1d0] sm:$0xff]
  %v3400 = vld [vmem:[%s13 + $0x1d8] sm:$0xff]
  %v3401 = vld [vmem:[%s13 + $0x1e0] sm:$0xff]
  %v3402 = vld [vmem:[%s13 + $0x1e8] sm:$0xff]
  %v3403 = vld [vmem:[%s13 + $0x1f0] sm:$0xff]
  %v3404 = vld [vmem:[%s13 + $0x1f8] sm:$0xff]
  %3405 = vmatprep.subr.mxu0 %v3342
  %3406 = vmatpush1.msra.mxu0 %v3341
  %3407 = vmatprep.subr.mxu0 %v3346
  %3408 = vmatpush1.msra.mxu0 %v3345
  %3409 = vmatprep.subr.mxu0 %v3350
  %3410 = vmatpush1.msra.mxu0 %v3349
  %3411 = vmatprep.subr.mxu0 %v3354
  %3412 = vmatpush1.msra.mxu0 %v3353
  %3413 = vmatprep.subr.mxu0 %v3358
  %3414 = vmatpush1.msra.mxu0 %v3357
  %3415 = vmatprep.subr.mxu0 %v3362
  %3416 = vmatpush1.msra.mxu0 %v3361
  %3417 = vmatprep.subr.mxu0 %v3366
  %3418 = vmatpush1.msra.mxu0 %v3365
  %3419 = vmatprep.subr.mxu0 %v3370
  %3420 = vmatpush1.msra.mxu0 %v3369
  %3421 = vmatprep.subr.mxu0 %v3374
  %3422 = vmatpush1.msra.mxu0 %v3373
  %3423 = vmatprep.subr.mxu0 %v3378
  %3424 = vmatpush1.msra.mxu0 %v3377
  %3425 = vmatprep.subr.mxu0 %v3382
  %3426 = vmatpush1.msra.mxu0 %v3381
  %3427 = vmatprep.subr.mxu0 %v3386
  %3428 = vmatpush1.msra.mxu0 %v3385
  %3429 = vmatprep.subr.mxu0 %v3390
  %3430 = vmatpush1.msra.mxu0 %v3389
  %3431 = vmatprep.subr.mxu0 %v3394
  %3432 = vmatpush1.msra.mxu0 %v3393
  %3433 = vmatprep.subr.mxu0 %v3398
  %3434 = vmatpush1.msra.mxu0 %v3397
  %3435 = vmatprep.subr.mxu0 %v3402
  %3436 = vmatpush1.msra.mxu0 %v3401
  %3437 = vmatprep.subr.mxu0 0.0
  %3438 = vmatpush1.msra.mxu0 0.0
  %3439 = vmatprep.subr.mxu0 0.0
  %3440 = vmatpush1.msra.mxu0 0.0
  %3441 = vmatprep.subr.mxu0 0.0
  %3442 = vmatpush1.msra.mxu0 0.0
  %3443 = vmatprep.subr.mxu0 0.0
  %3444 = vmatpush1.msra.mxu0 0.0
  %3445 = vmatprep.subr.mxu0 0.0
  %3446 = vmatpush1.msra.mxu0 0.0
  %3447 = vmatprep.subr.mxu0 0.0
  %3448 = vmatpush1.msra.mxu0 0.0
  %3449 = vmatprep.subr.mxu0 0.0
  %3450 = vmatpush1.msra.mxu0 0.0
  %3451 = vmatprep.subr.mxu0 0.0
  %3452 = vmatpush1.msra.mxu0 0.0
  %3453 = vmatprep.subr.mxu0 0.0
  %3454 = vmatpush1.msra.mxu0 0.0
  %3455 = vmatprep.subr.mxu0 0.0
  %3456 = vmatpush1.msra.mxu0 0.0
  %3457 = vmatprep.subr.mxu0 0.0
  %3458 = vmatpush1.msra.mxu0 0.0
  %3459 = vmatprep.subr.mxu0 0.0
  %3460 = vmatpush1.msra.mxu0 0.0
  %3461 = vmatprep.subr.mxu0 0.0
  %3462 = vmatpush1.msra.mxu0 0.0
  %3463 = vmatprep.subr.mxu0 0.0
  %3464 = vmatpush1.msra.mxu0 0.0
  %3465 = vmatprep.subr.mxu0 0.0
  %3466 = vmatpush1.msra.mxu0 0.0
  %3467 = vmatprep.subr.mxu0 0.0
  %3468 = vmatpush1.msra.mxu0 0.0
  %3469 = vmatprep.mubr.f32.mxu0 0.0
  %3470 = vmatmul.mubr.f32.gmra.mrb[0].mxu0 %v3338
  %v3471 = vpop.f32.mrb[0].mxu0
  %v3472 = vadd.f32 0.0, %v3471
  %v3473 = vpop.f32.mrb[0].mxu0
  %v3474 = vadd.f32 0.0, %v3473
  %3475 = vdwg.mxu0
  %3476 = vmatprep.subr.mxu0 %v3344
  %3477 = vmatpush1.msra.mxu0 %v3343
  %3478 = vmatprep.subr.mxu0 %v3348
  %3479 = vmatpush1.msra.mxu0 %v3347
  %3480 = vmatprep.subr.mxu0 %v3352
  %3481 = vmatpush1.msra.mxu0 %v3351
  %3482 = vmatprep.subr.mxu0 %v3356
  %3483 = vmatpush1.msra.mxu0 %v3355
  %3484 = vmatprep.subr.mxu0 %v3360
  %3485 = vmatpush1.msra.mxu0 %v3359
  %3486 = vmatprep.subr.mxu0 %v3364
  %3487 = vmatpush1.msra.mxu0 %v3363
  %3488 = vmatprep.subr.mxu0 %v3368
  %3489 = vmatpush1.msra.mxu0 %v3367
  %3490 = vmatprep.subr.mxu0 %v3372
  %3491 = vmatpush1.msra.mxu0 %v3371
  %3492 = vmatprep.subr.mxu0 %v3376
  %3493 = vmatpush1.msra.mxu0 %v3375
  %3494 = vmatprep.subr.mxu0 %v3380
  %3495 = vmatpush1.msra.mxu0 %v3379
  %3496 = vmatprep.subr.mxu0 %v3384
  %3497 = vmatpush1.msra.mxu0 %v3383
  %3498 = vmatprep.subr.mxu0 %v3388
  %3499 = vmatpush1.msra.mxu0 %v3387
  %3500 = vmatprep.subr.mxu0 %v3392
  %3501 = vmatpush1.msra.mxu0 %v3391
  %3502 = vmatprep.subr.mxu0 %v3396
  %3503 = vmatpush1.msra.mxu0 %v3395
  %3504 = vmatprep.subr.mxu0 %v3400
  %3505 = vmatpush1.msra.mxu0 %v3399
  %3506 = vmatprep.subr.mxu0 %v3404
  %3507 = vmatpush1.msra.mxu0 %v3403
  %3508 = vmatprep.subr.mxu0 0.0
  %3509 = vmatpush1.msra.mxu0 0.0
  %3510 = vmatprep.subr.mxu0 0.0
  %3511 = vmatpush1.msra.mxu0 0.0
  %3512 = vmatprep.subr.mxu0 0.0
  %3513 = vmatpush1.msra.mxu0 0.0
  %3514 = vmatprep.subr.mxu0 0.0
  %3515 = vmatpush1.msra.mxu0 0.0
  %3516 = vmatprep.subr.mxu0 0.0
  %3517 = vmatpush1.msra.mxu0 0.0
  %3518 = vmatprep.subr.mxu0 0.0
  %3519 = vmatpush1.msra.mxu0 0.0
  %3520 = vmatprep.subr.mxu0 0.0
  %3521 = vmatpush1.msra.mxu0 0.0
  %3522 = vmatprep.subr.mxu0 0.0
  %3523 = vmatpush1.msra.mxu0 0.0
  %3524 = vmatprep.subr.mxu0 0.0
  %3525 = vmatpush1.msra.mxu0 0.0
  %3526 = vmatprep.subr.mxu0 0.0
  %3527 = vmatpush1.msra.mxu0 0.0
  %3528 = vmatprep.subr.mxu0 0.0
  %3529 = vmatpush1.msra.mxu0 0.0
  %3530 = vmatprep.subr.mxu0 0.0
  %3531 = vmatpush1.msra.mxu0 0.0
  %3532 = vmatprep.subr.mxu0 0.0
  %3533 = vmatpush1.msra.mxu0 0.0
  %3534 = vmatprep.subr.mxu0 0.0
  %3535 = vmatpush1.msra.mxu0 0.0
  %3536 = vmatprep.subr.mxu0 0.0
  %3537 = vmatpush1.msra.mxu0 0.0
  %3538 = vmatprep.subr.mxu0 0.0
  %3539 = vmatpush1.msra.mxu0 0.0
  %3540 = vmatprep.mubr.f32.mxu0 0.0
  %3541 = vmatmul.mubr.f32.gmra.mrb[0].mxu0 %v3338
  %v3542 = vpop.f32.mrb[0].mxu0
  %v3543 = vadd.f32 0.0, %v3542
  %v3544 = vpop.f32.mrb[0].mxu0
  %v3545 = vadd.f32 0.0, %v3544
  %3546 = vdwg.mxu0
  %v3547 = vadd.f32 %v2481, %v3472
  %v3548 = vadd.f32 %v2482, %v3474
  %v3549 = vadd.f32 %v2483, %v3543
  %v3550 = vadd.f32 %v2484, %v3545
  %v3551 = vld [vmem:[%s49] sm:$0xf]
  %3553 = vset.pattern.permute.xlu0 0
  %3554 = vperm.xlu0 %3553, %v3551
  %v3555 = vpop.permute.xlu0 %3554
  %v3557 = vadd.f32 %v3547, %v3555
  %v3558 = vadd.f32 %v3548, %v3555
  %v3559 = vadd.f32 %v3549, %v3555
  %v3560 = vadd.f32 %v3550, %v3555
  %v3565 = vcombine.low %v3557, %v3558
  %v3566 = vcombine.low %v3559, %v3560
  %3569 = vst [vmem:[%s63] sm:$0xff] %v3565
  %3570 = vst [vmem:[%s63 + $0x8] sm:$0xff] %v3566
  %v3571 = vmul.f32 %v2481, %v184
  %v3572 = vmul.f32 %v2482, %v185
  %v3573 = vmul.f32 %v2483, %v186
  %v3574 = vmul.f32 %v2484, %v182
  %v3575 = vmul.f32 %v2481, %v226
  %v3576 = vmul.f32 %v2482, %v227
  %v3577 = vmul.f32 %v2483, %v228
  %v3578 = vmul.f32 %v2484, %v224
  %v3579 = vmul.f32 %v2481, %v268
  %v3580 = vmul.f32 %v2482, %v269
  %v3581 = vmul.f32 %v2483, %v270
  %v3582 = vmul.f32 %v2484, %v266
  %v3583 = vmul.f32 %v2481, %v310
  %v3584 = vmul.f32 %v2482, %v311
  %v3585 = vmul.f32 %v2483, %v312
  %v3586 = vmul.f32 %v2484, %v308
  %v3587 = vmul.f32 %v2481, %v344
  %v3588 = vmul.f32 %v2482, %v352
  %v3589 = vmul.f32 %v2483, %v353
  %v3590 = vmul.f32 %v2484, %v354
  %v3591 = vmul.f32 %v2481, %v386
  %v3592 = vmul.f32 %v2482, %v394
  %v3593 = vmul.f32 %v2483, %v395
  %v3594 = vmul.f32 %v2484, %v396
  %v3595 = vmul.f32 %v2481, %v428
  %v3596 = vmul.f32 %v2482, %v436
  %v3597 = vmul.f32 %v2483, %v437
  %v3598 = vmul.f32 %v2484, %v438
  %v3599 = vmul.f32 %v2481, %v470
  %v3600 = vmul.f32 %v2482, %v478
  %v3601 = vmul.f32 %v2483, %v479
  %v3602 = vmul.f32 %v2484, %v480
  %v3607 = vrot.slane %v3575, 4
  %v3608 = vrot.slane %v3576, 4
  %v3609 = vrot.slane %v3577, 4
  %v3610 = vrot.slane %v3578, 4
  %3611 = vrot.lane.b32.xlu0 %v3607, 127
  %v3612 = vpop.permute.xlu0 %3611
  %3613 = vrot.lane.b32.xlu0 %v3608, 127
  %v3614 = vpop.permute.xlu0 %3613
  %3615 = vrot.lane.b32.xlu0 %v3609, 127
  %v3616 = vpop.permute.xlu0 %3615
  %3617 = vrot.lane.b32.xlu0 %v3610, 127
  %v3618 = vpop.permute.xlu0 %3617
  %v3619 = vsel %vm309, %v502, %v3612
  %v3620 = vsel %vm309, %v3612, %v3614
  %v3621 = vsel %vm309, %v3614, %v3616
  %v3622 = vsel %vm309, %v3616, %v3618
  %3632 = vrot.lane.b32.xlu0 %v3579, 126
  %v3633 = vpop.permute.xlu0 %3632
  %3634 = vrot.lane.b32.xlu0 %v3580, 126
  %v3635 = vpop.permute.xlu0 %3634
  %3636 = vrot.lane.b32.xlu0 %v3581, 126
  %v3637 = vpop.permute.xlu0 %3636
  %3638 = vrot.lane.b32.xlu0 %v3582, 126
  %v3639 = vpop.permute.xlu0 %3638
  %v3640 = vsel %vm535, %v526, %v3633
  %v3641 = vsel %vm535, %v3633, %v3635
  %v3642 = vsel %vm535, %v3635, %v3637
  %v3643 = vsel %vm535, %v3637, %v3639
  %v3653 = vrot.slane %v3583, 4
  %v3654 = vrot.slane %v3584, 4
  %v3655 = vrot.slane %v3585, 4
  %v3656 = vrot.slane %v3586, 4
  %3657 = vrot.lane.b32.xlu0 %v3653, 112
  %v3658 = vpop.permute.xlu0 %3657
  %3659 = vrot.lane.b32.xlu0 %v3654, 112
  %v3660 = vpop.permute.xlu0 %3659
  %3661 = vrot.lane.b32.xlu0 %v3655, 112
  %v3662 = vpop.permute.xlu0 %3661
  %3663 = vrot.lane.b32.xlu0 %v3656, 112
  %v3664 = vpop.permute.xlu0 %3663
  %v3665 = vsel %vm225, %v556, %v3658
  %v3666 = vsel %vm225, %v3658, %v3660
  %v3667 = vsel %vm225, %v3660, %v3662
  %v3668 = vsel %vm225, %v3662, %v3664
  %3678 = vrot.lane.b32.xlu0 %v2481, 111
  %v3679 = vpop.permute.xlu0 %3678
  %3680 = vrot.lane.b32.xlu0 %v2482, 111
  %v3681 = vpop.permute.xlu0 %3680
  %3682 = vrot.lane.b32.xlu0 %v2483, 111
  %v3683 = vpop.permute.xlu0 %3682
  %3684 = vrot.lane.b32.xlu0 %v2484, 111
  %v3685 = vpop.permute.xlu0 %3684
  %v3686 = vsel %vm183, %v3679, %v3681
  %v3687 = vsel %vm183, %v3681, %v3683
  %v3688 = vsel %vm183, %v3683, %v3685
  %v3698 = vrot.slane %v3587, 4
  %v3699 = vrot.slane %v3588, 4
  %v3700 = vrot.slane %v3589, 4
  %v3701 = vrot.slane %v3590, 4
  %3702 = vrot.lane.b32.xlu0 %v3698, 110
  %v3703 = vpop.permute.xlu0 %3702
  %3704 = vrot.lane.b32.xlu0 %v3699, 110
  %v3705 = vpop.permute.xlu0 %3704
  %3706 = vrot.lane.b32.xlu0 %v3700, 110
  %v3707 = vpop.permute.xlu0 %3706
  %3708 = vrot.lane.b32.xlu0 %v3701, 110
  %v3709 = vpop.permute.xlu0 %3708
  %v3710 = vsel %vm610, %v3703, %v3705
  %v3711 = vsel %vm610, %v3705, %v3707
  %v3712 = vsel %vm610, %v3707, %v3709
  %v3713 = vsel %vm610, %v3709, %v609
  %3723 = vrot.lane.b32.xlu0 %v3591, 96
  %v3724 = vpop.permute.xlu0 %3723
  %3725 = vrot.lane.b32.xlu0 %v3592, 96
  %v3726 = vpop.permute.xlu0 %3725
  %3727 = vrot.lane.b32.xlu0 %v3593, 96
  %v3728 = vpop.permute.xlu0 %3727
  %3729 = vrot.lane.b32.xlu0 %v3594, 96
  %v3730 = vpop.permute.xlu0 %3729
  %v3731 = vsel %vm635, %v3724, %v3726
  %v3732 = vsel %vm635, %v3726, %v3728
  %v3733 = vsel %vm635, %v3728, %v3730
  %v3734 = vsel %vm635, %v3730, %v634
  %v3744 = vrot.slane %v3595, 4
  %v3745 = vrot.slane %v3596, 4
  %v3746 = vrot.slane %v3597, 4
  %v3747 = vrot.slane %v3598, 4
  %3748 = vrot.lane.b32.xlu0 %v3744, 95
  %v3749 = vpop.permute.xlu0 %3748
  %3750 = vrot.lane.b32.xlu0 %v3745, 95
  %v3751 = vpop.permute.xlu0 %3750
  %3752 = vrot.lane.b32.xlu0 %v3746, 95
  %v3753 = vpop.permute.xlu0 %3752
  %3754 = vrot.lane.b32.xlu0 %v3747, 95
  %v3755 = vpop.permute.xlu0 %3754
  %v3756 = vsel %vm665, %v3749, %v3751
  %v3757 = vsel %vm665, %v3751, %v3753
  %v3758 = vsel %vm665, %v3753, %v3755
  %v3759 = vsel %vm665, %v3755, %v664
  %3769 = vrot.lane.b32.xlu0 %v3599, 94
  %v3770 = vpop.permute.xlu0 %3769
  %3771 = vrot.lane.b32.xlu0 %v3600, 94
  %v3772 = vpop.permute.xlu0 %3771
  %3773 = vrot.lane.b32.xlu0 %v3601, 94
  %v3774 = vpop.permute.xlu0 %3773
  %3775 = vrot.lane.b32.xlu0 %v3602, 94
  %v3776 = vpop.permute.xlu0 %3775
  %v3777 = vsel %vm690, %v3770, %v3772
  %v3778 = vsel %vm690, %v3772, %v3774
  %v3779 = vsel %vm690, %v3774, %v3776
  %v3780 = vsel %vm690, %v3776, %v689
  %v3781 = vsel %vm695, %v192, %v3619
  %v3782 = vsel %vm695, %v3571, %v3620
  %v3783 = vsel %vm695, %v3572, %v3621
  %v3784 = vsel %vm695, %v3573, %v3622
  %v3785 = vsel %vm695, %v3574, %v3618
  %v3786 = vsel %vm695, %v3640, %v3665
  %v3787 = vsel %vm695, %v3641, %v3666
  %v3788 = vsel %vm695, %v3642, %v3667
  %v3789 = vsel %vm695, %v3643, %v3668
  %v3790 = vsel %vm695, %v3639, %v3664
  %v3791 = vsel %vm695, %v3679, %v3703
  %v3792 = vsel %vm695, %v3686, %v3710
  %v3793 = vsel %vm695, %v3687, %v3711
  %v3794 = vsel %vm695, %v3688, %v3712
  %v3795 = vsel %vm695, %v3685, %v3713
  %v3796 = vsel %vm695, %v3724, %v3749
  %v3797 = vsel %vm695, %v3731, %v3756
  %v3798 = vsel %vm695, %v3732, %v3757
  %v3799 = vsel %vm695, %v3733, %v3758
  %v3800 = vsel %vm695, %v3734, %v3759
  %v3801 = vld [vmem:[%s51] sm:$0xff]
  %v3802 = vld [vmem:[%s51 + $0x8] sm:$0xff]
  %v3803 = vld [vmem:[%s53] sm:$0xff]
  %v3804 = vld [vmem:[%s53 + $0x8] sm:$0xff]
  %3806 = vset.pattern.permute.xlu0 0
  %3807 = vperm.xlu0 %3806, %v3803
  %v3808 = vpop.permute.xlu0 %3807
  %3811 = vset.pattern.permute.xlu0 0
  %3812 = vperm.xlu0 %3811, %v3804
  %v3813 = vpop.permute.xlu0 %3812
  %3835 = vrot.lane.b32.xlu0 %v3781, 17
  %v3836 = vpop.permute.xlu0 %3835
  %3837 = vrot.lane.b32.xlu0 %v3782, 17
  %v3838 = vpop.permute.xlu0 %3837
  %3839 = vrot.lane.b32.xlu0 %v3783, 17
  %v3840 = vpop.permute.xlu0 %3839
  %3841 = vrot.lane.b32.xlu0 %v3784, 17
  %v3842 = vpop.permute.xlu0 %3841
  %3843 = vrot.lane.b32.xlu0 %v3785, 17
  %v3844 = vpop.permute.xlu0 %3843
  %3845 = vrot.lane.b32.xlu0 %v3786, 17
  %v3846 = vpop.permute.xlu0 %3845
  %3847 = vrot.lane.b32.xlu0 %v3787, 17
  %v3848 = vpop.permute.xlu0 %3847
  %3849 = vrot.lane.b32.xlu0 %v3788, 17
  %v3850 = vpop.permute.xlu0 %3849
  %3851 = vrot.lane.b32.xlu0 %v3789, 17
  %v3852 = vpop.permute.xlu0 %3851
  %3853 = vrot.lane.b32.xlu0 %v3790, 17
  %v3854 = vpop.permute.xlu0 %3853
  %3855 = vrot.lane.b32.xlu0 %v3791, 17
  %v3856 = vpop.permute.xlu0 %3855
  %3857 = vrot.lane.b32.xlu0 %v3792, 17
  %v3858 = vpop.permute.xlu0 %3857
  %3859 = vrot.lane.b32.xlu0 %v3793, 17
  %v3860 = vpop.permute.xlu0 %3859
  %3861 = vrot.lane.b32.xlu0 %v3794, 17
  %v3862 = vpop.permute.xlu0 %3861
  %3863 = vrot.lane.b32.xlu0 %v3795, 17
  %v3864 = vpop.permute.xlu0 %3863
  %3865 = vrot.lane.b32.xlu0 %v3796, 17
  %v3866 = vpop.permute.xlu0 %3865
  %3867 = vrot.lane.b32.xlu0 %v3797, 17
  %v3868 = vpop.permute.xlu0 %3867
  %3869 = vrot.lane.b32.xlu0 %v3798, 17
  %v3870 = vpop.permute.xlu0 %3869
  %3871 = vrot.lane.b32.xlu0 %v3799, 17
  %v3872 = vpop.permute.xlu0 %3871
  %3873 = vrot.lane.b32.xlu0 %v3800, 17
  %v3874 = vpop.permute.xlu0 %3873
  %3875 = vrot.lane.b32.xlu0 %v3770, 17
  %v3876 = vpop.permute.xlu0 %3875
  %3877 = vrot.lane.b32.xlu0 %v3777, 17
  %v3878 = vpop.permute.xlu0 %3877
  %3879 = vrot.lane.b32.xlu0 %v3778, 17
  %v3880 = vpop.permute.xlu0 %3879
  %3881 = vrot.lane.b32.xlu0 %v3779, 17
  %v3882 = vpop.permute.xlu0 %3881
  %3883 = vrot.lane.b32.xlu0 %v3780, 17
  %v3884 = vpop.permute.xlu0 %3883
  %v3885 = vsel %vm477, %v3836, %v3838
  %v3886 = vsel %vm477, %v3838, %v3840
  %v3887 = vsel %vm477, %v3840, %v3842
  %v3888 = vsel %vm477, %v3842, %v3844
  %v3889 = vsel %vm477, %v3846, %v3848
  %v3890 = vsel %vm477, %v3848, %v3850
  %v3891 = vsel %vm477, %v3850, %v3852
  %v3892 = vsel %vm477, %v3852, %v3854
  %v3893 = vsel %vm477, %v3856, %v3858
  %v3894 = vsel %vm477, %v3858, %v3860
  %v3895 = vsel %vm477, %v3860, %v3862
  %v3896 = vsel %vm477, %v3862, %v3864
  %v3897 = vsel %vm477, %v3866, %v3868
  %v3898 = vsel %vm477, %v3868, %v3870
  %v3899 = vsel %vm477, %v3870, %v3872
  %v3900 = vsel %vm477, %v3872, %v3874
  %v3901 = vsel %vm477, %v3876, %v3878
  %v3902 = vsel %vm477, %v3878, %v3880
  %v3903 = vsel %vm477, %v3880, %v3882
  %v3904 = vsel %vm477, %v3882, %v3884
  %v3922 = vsel %vm827, %v3801, 0
  %v3925 = vsel %vm827, %v3802, 0
  %v3927 = vsel %vm695, %v3901, 0
  %v3929 = vsel %vm695, %v3902, 0
  %v3931 = vsel %vm695, %v3903, 0
  %v3933 = vsel %vm695, %v3904, 0
  %3935 = vmatprep.subr.mxu0 %v3886
  %3936 = vmatpush1.msra.mxu0 %v3885
  %3937 = vmatprep.subr.mxu0 %v3890
  %3938 = vmatpush1.msra.mxu0 %v3889
  %3939 = vmatprep.subr.mxu0 %v3894
  %3940 = vmatpush1.msra.mxu0 %v3893
  %3941 = vmatprep.subr.mxu0 %v3898
  %3942 = vmatpush1.msra.mxu0 %v3897
  %3943 = vmatprep.subr.mxu0 %v3929
  %3944 = vmatpush1.msra.mxu0 %v3927
  %3945 = vmatprep.subr.mxu0 0.0
  %3946 = vmatpush1.msra.mxu0 0.0
  %3947 = vmatprep.subr.mxu0 0.0
  %3948 = vmatpush1.msra.mxu0 0.0
  %3949 = vmatprep.subr.mxu0 0.0
  %3950 = vmatpush1.msra.mxu0 0.0
  %3951 = vmatprep.subr.mxu0 0.0
  %3952 = vmatpush1.msra.mxu0 0.0
  %3953 = vmatprep.subr.mxu0 0.0
  %3954 = vmatpush1.msra.mxu0 0.0
  %3955 = vmatprep.subr.mxu0 0.0
  %3956 = vmatpush1.msra.mxu0 0.0
  %3957 = vmatprep.subr.mxu0 0.0
  %3958 = vmatpush1.msra.mxu0 0.0
  %3959 = vmatprep.subr.mxu0 0.0
  %3960 = vmatpush1.msra.mxu0 0.0
  %3961 = vmatprep.subr.mxu0 0.0
  %3962 = vmatpush1.msra.mxu0 0.0
  %3963 = vmatprep.subr.mxu0 0.0
  %3964 = vmatpush1.msra.mxu0 0.0
  %3965 = vmatprep.subr.mxu0 0.0
  %3966 = vmatpush1.msra.mxu0 0.0
  %3967 = vmatprep.subr.mxu0 0.0
  %3968 = vmatpush1.msra.mxu0 0.0
  %3969 = vmatprep.subr.mxu0 0.0
  %3970 = vmatpush1.msra.mxu0 0.0
  %3971 = vmatprep.subr.mxu0 0.0
  %3972 = vmatpush1.msra.mxu0 0.0
  %3973 = vmatprep.subr.mxu0 0.0
  %3974 = vmatpush1.msra.mxu0 0.0
  %3975 = vmatprep.subr.mxu0 0.0
  %3976 = vmatpush1.msra.mxu0 0.0
  %3977 = vmatprep.subr.mxu0 0.0
  %3978 = vmatpush1.msra.mxu0 0.0
  %3979 = vmatprep.subr.mxu0 0.0
  %3980 = vmatpush1.msra.mxu0 0.0
  %3981 = vmatprep.subr.mxu0 0.0
  %3982 = vmatpush1.msra.mxu0 0.0
  %3983 = vmatprep.subr.mxu0 0.0
  %3984 = vmatpush1.msra.mxu0 0.0
  %3985 = vmatprep.subr.mxu0 0.0
  %3986 = vmatpush1.msra.mxu0 0.0
  %3987 = vmatprep.subr.mxu0 0.0
  %3988 = vmatpush1.msra.mxu0 0.0
  %3989 = vmatprep.subr.mxu0 0.0
  %3990 = vmatpush1.msra.mxu0 0.0
  %3991 = vmatprep.subr.mxu0 0.0
  %3992 = vmatpush1.msra.mxu0 0.0
  %3993 = vmatprep.subr.mxu0 0.0
  %3994 = vmatpush1.msra.mxu0 0.0
  %3995 = vmatprep.subr.mxu0 0.0
  %3996 = vmatpush1.msra.mxu0 0.0
  %3997 = vmatprep.subr.mxu0 0.0
  %3998 = vmatpush1.msra.mxu0 0.0
  %3999 = vmatprep.mubr.f32.mxu0 0.0
  %4000 = vmatmul.mubr.f32.gmra.mrb[0].mxu0 %v3922
  %v4001 = vpop.f32.mrb[0].mxu0
  %v4002 = vadd.f32 %v3808, %v4001
  %v4003 = vpop.f32.mrb[0].mxu0
  %v4004 = vadd.f32 %v3808, %v4003
  %4005 = vmatprep.mubr.f32.mxu0 0.0
  %4006 = vmatmul.mubr.f32.gmra.mrb[0].mxu0 %v3925
  %v4007 = vpop.f32.mrb[0].mxu0
  %v4008 = vadd.f32 %v3813, %v4007
  %v4009 = vpop.f32.mrb[0].mxu0
  %v4010 = vadd.f32 %v3813, %v4009
  %4011 = vdwg.mxu0
  %4012 = vmatprep.subr.mxu0 %v3888
  %4013 = vmatpush1.msra.mxu0 %v3887
  %4014 = vmatprep.subr.mxu0 %v3892
  %4015 = vmatpush1.msra.mxu0 %v3891
  %4016 = vmatprep.subr.mxu0 %v3896
  %4017 = vmatpush1.msra.mxu0 %v3895
  %4018 = vmatprep.subr.mxu0 %v3900
  %4019 = vmatpush1.msra.mxu0 %v3899
  %4020 = vmatprep.subr.mxu0 %v3933
  %4021 = vmatpush1.msra.mxu0 %v3931
  %4022 = vmatprep.subr.mxu0 0.0
  %4023 = vmatpush1.msra.mxu0 0.0
  %4024 = vmatprep.subr.mxu0 0.0
  %4025 = vmatpush1.msra.mxu0 0.0
  %4026 = vmatprep.subr.mxu0 0.0
  %4027 = vmatpush1.msra.mxu0 0.0
  %4028 = vmatprep.subr.mxu0 0.0
  %4029 = vmatpush1.msra.mxu0 0.0
  %4030 = vmatprep.subr.mxu0 0.0
  %4031 = vmatpush1.msra.mxu0 0.0
  %4032 = vmatprep.subr.mxu0 0.0
  %4033 = vmatpush1.msra.mxu0 0.0
  %4034 = vmatprep.subr.mxu0 0.0
  %4035 = vmatpush1.msra.mxu0 0.0
  %4036 = vmatprep.subr.mxu0 0.0
  %4037 = vmatpush1.msra.mxu0 0.0
  %4038 = vmatprep.subr.mxu0 0.0
  %4039 = vmatpush1.msra.mxu0 0.0
  %4040 = vmatprep.subr.mxu0 0.0
  %4041 = vmatpush1.msra.mxu0 0.0
  %4042 = vmatprep.subr.mxu0 0.0
  %4043 = vmatpush1.msra.mxu0 0.0
  %4044 = vmatprep.subr.mxu0 0.0
  %4045 = vmatpush1.msra.mxu0 0.0
  %4046 = vmatprep.subr.mxu0 0.0
  %4047 = vmatpush1.msra.mxu0 0.0
  %4048 = vmatprep.subr.mxu0 0.0
  %4049 = vmatpush1.msra.mxu0 0.0
  %4050 = vmatprep.subr.mxu0 0.0
  %4051 = vmatpush1.msra.mxu0 0.0
  %4052 = vmatprep.subr.mxu0 0.0
  %4053 = vmatpush1.msra.mxu0 0.0
  %4054 = vmatprep.subr.mxu0 0.0
  %4055 = vmatpush1.msra.mxu0 0.0
  %4056 = vmatprep.subr.mxu0 0.0
  %4057 = vmatpush1.msra.mxu0 0.0
  %4058 = vmatprep.subr.mxu0 0.0
  %4059 = vmatpush1.msra.mxu0 0.0
  %4060 = vmatprep.subr.mxu0 0.0
  %4061 = vmatpush1.msra.mxu0 0.0
  %4062 = vmatprep.subr.mxu0 0.0
  %4063 = vmatpush1.msra.mxu0 0.0
  %4064 = vmatprep.subr.mxu0 0.0
  %4065 = vmatpush1.msra.mxu0 0.0
  %4066 = vmatprep.subr.mxu0 0.0
  %4067 = vmatpush1.msra.mxu0 0.0
  %4068 = vmatprep.subr.mxu0 0.0
  %4069 = vmatpush1.msra.mxu0 0.0
  %4070 = vmatprep.subr.mxu0 0.0
  %4071 = vmatpush1.msra.mxu0 0.0
  %4072 = vmatprep.subr.mxu0 0.0
  %4073 = vmatpush1.msra.mxu0 0.0
  %4074 = vmatprep.subr.mxu0 0.0
  %4075 = vmatpush1.msra.mxu0 0.0
  %4076 = vmatprep.mubr.f32.mxu0 0.0
  %4077 = vmatmul.mubr.f32.gmra.mrb[0].mxu0 %v3922
  %v4078 = vpop.f32.mrb[0].mxu0
  %v4079 = vadd.f32 %v3808, %v4078
  %v4080 = vpop.f32.mrb[0].mxu0
  %v4081 = vadd.f32 %v3808, %v4080
  %4082 = vmatprep.mubr.f32.mxu0 0.0
  %4083 = vmatmul.mubr.f32.gmra.mrb[0].mxu0 %v3925
  %v4084 = vpop.f32.mrb[0].mxu0
  %v4085 = vadd.f32 %v3813, %v4084
  %v4086 = vpop.f32.mrb[0].mxu0
  %v4087 = vadd.f32 %v3813, %v4086
  %4088 = vdwg.mxu0
  %v4089 = vld [vmem:[%s9] sm:$0xff]
  %v4090 = vld [vmem:[%s9 + $0x8] sm:$0xff]
  %v4091 = vld [vmem:[%s9 + $0x10] sm:$0xff]
  %v4092 = vld [vmem:[%s9 + $0x18] sm:$0xff]
  %v4093 = vld [vmem:[%s9 + $0x20] sm:$0xff]
  %v4094 = vld [vmem:[%s9 + $0x28] sm:$0xff]
  %v4095 = vld [vmem:[%s9 + $0x30] sm:$0xff]
  %v4096 = vld [vmem:[%s9 + $0x38] sm:$0xff]
  %v4097 = vld [vmem:[%s9 + $0x40] sm:$0xff]
  %v4098 = vld [vmem:[%s9 + $0x48] sm:$0xff]
  %v4099 = vld [vmem:[%s9 + $0x50] sm:$0xff]
  %v4100 = vld [vmem:[%s9 + $0x58] sm:$0xff]
  %v4101 = vld [vmem:[%s9 + $0x60] sm:$0xff]
  %v4102 = vld [vmem:[%s9 + $0x68] sm:$0xff]
  %v4103 = vld [vmem:[%s9 + $0x70] sm:$0xff]
  %v4104 = vld [vmem:[%s9 + $0x78] sm:$0xff]
  %v4105 = vld [vmem:[%s9 + $0x80] sm:$0xff]
  %v4106 = vld [vmem:[%s9 + $0x88] sm:$0xff]
  %v4107 = vld [vmem:[%s9 + $0x90] sm:$0xff]
  %v4108 = vld [vmem:[%s9 + $0x98] sm:$0xff]
  %v4109 = vld [vmem:[%s9 + $0xa0] sm:$0xff]
  %v4110 = vld [vmem:[%s9 + $0xa8] sm:$0xff]
  %v4111 = vld [vmem:[%s9 + $0xb0] sm:$0xff]
  %v4112 = vld [vmem:[%s9 + $0xb8] sm:$0xff]
  %v4113 = vld [vmem:[%s9 + $0xc0] sm:$0xff]
  %v4114 = vld [vmem:[%s9 + $0xc8] sm:$0xff]
  %v4115 = vld [vmem:[%s9 + $0xd0] sm:$0xff]
  %v4116 = vld [vmem:[%s9 + $0xd8] sm:$0xff]
  %v4117 = vld [vmem:[%s9 + $0xe0] sm:$0xff]
  %v4118 = vld [vmem:[%s9 + $0xe8] sm:$0xff]
  %v4119 = vld [vmem:[%s9 + $0xf0] sm:$0xff]
  %v4120 = vld [vmem:[%s9 + $0xf8] sm:$0xff]
  %v4121 = vld [vmem:[%s9 + $0x100] sm:$0xff]
  %v4122 = vld [vmem:[%s9 + $0x108] sm:$0xff]
  %v4123 = vld [vmem:[%s9 + $0x110] sm:$0xff]
  %v4124 = vld [vmem:[%s9 + $0x118] sm:$0xff]
  %v4125 = vld [vmem:[%s9 + $0x120] sm:$0xff]
  %v4126 = vld [vmem:[%s9 + $0x128] sm:$0xff]
  %v4127 = vld [vmem:[%s9 + $0x130] sm:$0xff]
  %v4128 = vld [vmem:[%s9 + $0x138] sm:$0xff]
  %v4129 = vld [vmem:[%s9 + $0x140] sm:$0xff]
  %v4130 = vld [vmem:[%s9 + $0x148] sm:$0xff]
  %v4131 = vld [vmem:[%s9 + $0x150] sm:$0xff]
  %v4132 = vld [vmem:[%s9 + $0x158] sm:$0xff]
  %v4133 = vld [vmem:[%s9 + $0x160] sm:$0xff]
  %v4134 = vld [vmem:[%s9 + $0x168] sm:$0xff]
  %v4135 = vld [vmem:[%s9 + $0x170] sm:$0xff]
  %v4136 = vld [vmem:[%s9 + $0x178] sm:$0xff]
  %v4137 = vld [vmem:[%s9 + $0x180] sm:$0xff]
  %v4138 = vld [vmem:[%s9 + $0x188] sm:$0xff]
  %v4139 = vld [vmem:[%s9 + $0x190] sm:$0xff]
  %v4140 = vld [vmem:[%s9 + $0x198] sm:$0xff]
  %v4141 = vld [vmem:[%s9 + $0x1a0] sm:$0xff]
  %v4142 = vld [vmem:[%s9 + $0x1a8] sm:$0xff]
  %v4143 = vld [vmem:[%s9 + $0x1b0] sm:$0xff]
  %v4144 = vld [vmem:[%s9 + $0x1b8] sm:$0xff]
  %v4145 = vld [vmem:[%s9 + $0x1c0] sm:$0xff]
  %v4146 = vld [vmem:[%s9 + $0x1c8] sm:$0xff]
  %v4147 = vld [vmem:[%s9 + $0x1d0] sm:$0xff]
  %v4148 = vld [vmem:[%s9 + $0x1d8] sm:$0xff]
  %v4149 = vld [vmem:[%s9 + $0x1e0] sm:$0xff]
  %v4150 = vld [vmem:[%s9 + $0x1e8] sm:$0xff]
  %v4151 = vld [vmem:[%s9 + $0x1f0] sm:$0xff]
  %v4152 = vld [vmem:[%s9 + $0x1f8] sm:$0xff]
  %4153 = vmatprep.subr.mxu0 0.0
  %4154 = vmatpush1.msra.mxu0 %v4089
  %4155 = vmatprep.subr.mxu0 0.0
  %4156 = vmatpush1.msra.mxu0 %v4090
  %4157 = vmatprep.subr.mxu0 0.0
  %4158 = vmatpush1.msra.mxu0 %v4091
  %4159 = vmatprep.subr.mxu0 0.0
  %4160 = vmatpush1.msra.mxu0 %v4092
  %4161 = vmatprep.subr.mxu0 0.0
  %4162 = vmatpush1.msra.mxu0 %v4093
  %4163 = vmatprep.subr.mxu0 0.0
  %4164 = vmatpush1.msra.mxu0 %v4094
  %4165 = vmatprep.subr.mxu0 0.0
  %4166 = vmatpush1.msra.mxu0 %v4095
  %4167 = vmatprep.subr.mxu0 0.0
  %4168 = vmatpush1.msra.mxu0 %v4096
  %4169 = vmatprep.subr.mxu0 0.0
  %4170 = vmatpush1.msra.mxu0 %v4097
  %4171 = vmatprep.subr.mxu0 0.0
  %4172 = vmatpush1.msra.mxu0 %v4098
  %4173 = vmatprep.subr.mxu0 0.0
  %4174 = vmatpush1.msra.mxu0 %v4099
  %4175 = vmatprep.subr.mxu0 0.0
  %4176 = vmatpush1.msra.mxu0 %v4100
  %4177 = vmatprep.subr.mxu0 0.0
  %4178 = vmatpush1.msra.mxu0 %v4101
  %4179 = vmatprep.subr.mxu0 0.0
  %4180 = vmatpush1.msra.mxu0 %v4102
  %4181 = vmatprep.subr.mxu0 0.0
  %4182 = vmatpush1.msra.mxu0 %v4103
  %4183 = vmatprep.subr.mxu0 0.0
  %4184 = vmatpush1.msra.mxu0 %v4104
  %4185 = vmatprep.subr.mxu0 0.0
  %4186 = vmatpush1.msra.mxu0 %v4105
  %4187 = vmatprep.subr.mxu0 0.0
  %4188 = vmatpush1.msra.mxu0 %v4106
  %4189 = vmatprep.subr.mxu0 0.0
  %4190 = vmatpush1.msra.mxu0 %v4107
  %4191 = vmatprep.subr.mxu0 0.0
  %4192 = vmatpush1.msra.mxu0 %v4108
  %4193 = vmatprep.subr.mxu0 0.0
  %4194 = vmatpush1.msra.mxu0 %v4109
  %4195 = vmatprep.subr.mxu0 0.0
  %4196 = vmatpush1.msra.mxu0 %v4110
  %4197 = vmatprep.subr.mxu0 0.0
  %4198 = vmatpush1.msra.mxu0 %v4111
  %4199 = vmatprep.subr.mxu0 0.0
  %4200 = vmatpush1.msra.mxu0 %v4112
  %4201 = vmatprep.subr.mxu0 0.0
  %4202 = vmatpush1.msra.mxu0 %v4113
  %4203 = vmatprep.subr.mxu0 0.0
  %4204 = vmatpush1.msra.mxu0 %v4114
  %4205 = vmatprep.subr.mxu0 0.0
  %4206 = vmatpush1.msra.mxu0 %v4115
  %4207 = vmatprep.subr.mxu0 0.0
  %4208 = vmatpush1.msra.mxu0 %v4116
  %4209 = vmatprep.subr.mxu0 0.0
  %4210 = vmatpush1.msra.mxu0 %v4117
  %4211 = vmatprep.subr.mxu0 0.0
  %4212 = vmatpush1.msra.mxu0 %v4118
  %4213 = vmatprep.subr.mxu0 0.0
  %4214 = vmatpush1.msra.mxu0 %v4119
  %4215 = vmatprep.subr.mxu0 0.0
  %4216 = vmatpush1.msra.mxu0 %v4120
  %4217 = vmatprep.mubr.f32.mxu0 %v4004
  %4218 = vmatmul.mubr.f32.gmra.mrb[0].mxu0 %v4002
  %v4219 = vpop.f32.mrb[0].mxu0
  %v4220 = vadd.f32 0.0, %v4219
  %v4221 = vpop.f32.mrb[0].mxu0
  %4222 = vmatprep.mubr.f32.mxu0 %v4010
  %4223 = vmatmul.mubr.f32.gmra.mrb[0].mxu0 %v4008
  %v4224 = vpop.f32.mrb[0].mxu0
  %v4225 = vadd.f32 0.0, %v4224
  %v4226 = vpop.f32.mrb[0].mxu0
  %4227 = vdwg.mxu0
  %4228 = vmatprep.subr.mxu0 0.0
  %4229 = vmatpush1.msra.mxu0 %v4121
  %4230 = vmatprep.subr.mxu0 0.0
  %4231 = vmatpush1.msra.mxu0 %v4122
  %4232 = vmatprep.subr.mxu0 0.0
  %4233 = vmatpush1.msra.mxu0 %v4123
  %4234 = vmatprep.subr.mxu0 0.0
  %4235 = vmatpush1.msra.mxu0 %v4124
  %4236 = vmatprep.subr.mxu0 0.0
  %4237 = vmatpush1.msra.mxu0 %v4125
  %4238 = vmatprep.subr.mxu0 0.0
  %4239 = vmatpush1.msra.mxu0 %v4126
  %4240 = vmatprep.subr.mxu0 0.0
  %4241 = vmatpush1.msra.mxu0 %v4127
  %4242 = vmatprep.subr.mxu0 0.0
  %4243 = vmatpush1.msra.mxu0 %v4128
  %4244 = vmatprep.subr.mxu0 0.0
  %4245 = vmatpush1.msra.mxu0 %v4129
  %4246 = vmatprep.subr.mxu0 0.0
  %4247 = vmatpush1.msra.mxu0 %v4130
  %4248 = vmatprep.subr.mxu0 0.0
  %4249 = vmatpush1.msra.mxu0 %v4131
  %4250 = vmatprep.subr.mxu0 0.0
  %4251 = vmatpush1.msra.mxu0 %v4132
  %4252 = vmatprep.subr.mxu0 0.0
  %4253 = vmatpush1.msra.mxu0 %v4133
  %4254 = vmatprep.subr.mxu0 0.0
  %4255 = vmatpush1.msra.mxu0 %v4134
  %4256 = vmatprep.subr.mxu0 0.0
  %4257 = vmatpush1.msra.mxu0 %v4135
  %4258 = vmatprep.subr.mxu0 0.0
  %4259 = vmatpush1.msra.mxu0 %v4136
  %4260 = vmatprep.subr.mxu0 0.0
  %4261 = vmatpush1.msra.mxu0 %v4137
  %4262 = vmatprep.subr.mxu0 0.0
  %4263 = vmatpush1.msra.mxu0 %v4138
  %4264 = vmatprep.subr.mxu0 0.0
  %4265 = vmatpush1.msra.mxu0 %v4139
  %4266 = vmatprep.subr.mxu0 0.0
  %4267 = vmatpush1.msra.mxu0 %v4140
  %4268 = vmatprep.subr.mxu0 0.0
  %4269 = vmatpush1.msra.mxu0 %v4141
  %4270 = vmatprep.subr.mxu0 0.0
  %4271 = vmatpush1.msra.mxu0 %v4142
  %4272 = vmatprep.subr.mxu0 0.0
  %4273 = vmatpush1.msra.mxu0 %v4143
  %4274 = vmatprep.subr.mxu0 0.0
  %4275 = vmatpush1.msra.mxu0 %v4144
  %4276 = vmatprep.subr.mxu0 0.0
  %4277 = vmatpush1.msra.mxu0 %v4145
  %4278 = vmatprep.subr.mxu0 0.0
  %4279 = vmatpush1.msra.mxu0 %v4146
  %4280 = vmatprep.subr.mxu0 0.0
  %4281 = vmatpush1.msra.mxu0 %v4147
  %4282 = vmatprep.subr.mxu0 0.0
  %4283 = vmatpush1.msra.mxu0 %v4148
  %4284 = vmatprep.subr.mxu0 0.0
  %4285 = vmatpush1.msra.mxu0 %v4149
  %4286 = vmatprep.subr.mxu0 0.0
  %4287 = vmatpush1.msra.mxu0 %v4150
  %4288 = vmatprep.subr.mxu0 0.0
  %4289 = vmatpush1.msra.mxu0 %v4151
  %4290 = vmatprep.subr.mxu0 0.0
  %4291 = vmatpush1.msra.mxu0 %v4152
  %4292 = vmatprep.mubr.f32.mxu0 %v4081
  %4293 = vmatmul.mubr.f32.gmra.mrb[0].mxu0 %v4079
  %v4294 = vpop.f32.mrb[0].mxu0
  %v4295 = vadd.f32 %v4220, %v4294
  %v4296 = vpop.f32.mrb[0].mxu0
  %4297 = vmatprep.mubr.f32.mxu0 %v4087
  %4298 = vmatmul.mubr.f32.gmra.mrb[0].mxu0 %v4085
  %v4299 = vpop.f32.mrb[0].mxu0
  %v4300 = vadd.f32 %v4225, %v4299
  %v4301 = vpop.f32.mrb[0].mxu0
  %4302 = vdwg.mxu0
  %v4303 = vadd.f32 %v3265, %v4295
  %4304 = vst [vmem:[%s65] sm:$0xff] %v4303
  %v4305 = vld [vmem:[%s55] sm:$0xff]
  %v4306 = vld [vmem:[%s55 + $0x8] sm:$0xff]
  %v4307 = vld [vmem:[%s57] sm:$0xff]
  %v4308 = vld [vmem:[%s57 + $0x8] sm:$0xff]
  %v4309 = vmul.f32 %v4300, %v2494
  %v4310 = vmul.f32 %v4300, %v2504
  %v4311 = vmul.f32 %v4300, %v2514
  %v4312 = vmul.f32 %v4300, %v2524
  %v4313 = vmul.f32 %v4300, %v2534
  %v4314 = vmul.f32 %v4300, %v2544
  %v4315 = vmul.f32 %v4300, %v2554
  %v4316 = vmul.f32 %v4300, %v2564
  %4318 = vrot.lane.b32.xlu0 %v4310, 127
  %v4319 = vpop.permute.xlu0 %4318
  %v4320 = vsel %vm309, %v2571, %v4319
  %4322 = vrot.lane.b32.xlu0 %v4311, 126
  %v4323 = vpop.permute.xlu0 %4322
  %v4324 = vsel %vm535, %v2578, %v4323
  %4326 = vrot.lane.b32.xlu0 %v4312, 120
  %v4327 = vpop.permute.xlu0 %4326
  %v4328 = vsel %vm2588, %v2585, %v4327
  %4330 = vrot.lane.b32.xlu0 %v4300, 119
  %v4331 = vpop.permute.xlu0 %4330
  %4333 = vrot.lane.b32.xlu0 %v4313, 118
  %v4334 = vpop.permute.xlu0 %4333
  %v4335 = vsel %vm2599, %v4334, %v2598
  %4337 = vrot.lane.b32.xlu0 %v4314, 112
  %v4338 = vpop.permute.xlu0 %4337
  %v4339 = vsel %vm225, %v4338, %v2606
  %4341 = vrot.lane.b32.xlu0 %v4315, 111
  %v4342 = vpop.permute.xlu0 %4341
  %v4343 = vsel %vm183, %v4342, %v2613
  %4345 = vrot.lane.b32.xlu0 %v4316, 110
  %v4346 = vpop.permute.xlu0 %4345
  %v4347 = vsel %vm610, %v4346, %v2620
  %4349 = vset.pattern.permute.xlu0 0
  %4350 = vperm.xlu0 %4349, %v4307
  %v4351 = vpop.permute.xlu0 %4350
  %4354 = vset.pattern.permute.xlu0 0
  %4355 = vperm.xlu0 %4354, %v4308
  %v4356 = vpop.permute.xlu0 %4355
  %4359 = vrot.lane.b32.xlu0 %v4309, 9
  %v4360 = vpop.permute.xlu0 %4359
  %4361 = vrot.lane.b32.xlu0 %v4320, 9
  %v4362 = vpop.permute.xlu0 %4361
  %4363 = vrot.lane.b32.xlu0 %v4319, 9
  %v4364 = vpop.permute.xlu0 %4363
  %4365 = vrot.lane.b32.xlu0 %v4324, 9
  %v4366 = vpop.permute.xlu0 %4365
  %4367 = vrot.lane.b32.xlu0 %v4323, 9
  %v4368 = vpop.permute.xlu0 %4367
  %4369 = vrot.lane.b32.xlu0 %v4328, 9
  %v4370 = vpop.permute.xlu0 %4369
  %4371 = vrot.lane.b32.xlu0 %v4327, 9
  %v4372 = vpop.permute.xlu0 %4371
  %4373 = vrot.lane.b32.xlu0 %v4331, 9
  %v4374 = vpop.permute.xlu0 %4373
  %4375 = vrot.lane.b32.xlu0 %v4334, 9
  %v4376 = vpop.permute.xlu0 %4375
  %4377 = vrot.lane.b32.xlu0 %v4335, 9
  %v4378 = vpop.permute.xlu0 %4377
  %4379 = vrot.lane.b32.xlu0 %v4338, 9
  %v4380 = vpop.permute.xlu0 %4379
  %4381 = vrot.lane.b32.xlu0 %v4339, 9
  %v4382 = vpop.permute.xlu0 %4381
  %4383 = vrot.lane.b32.xlu0 %v4342, 9
  %v4384 = vpop.permute.xlu0 %4383
  %4385 = vrot.lane.b32.xlu0 %v4343, 9
  %v4386 = vpop.permute.xlu0 %4385
  %4387 = vrot.lane.b32.xlu0 %v4346, 9
  %v4388 = vpop.permute.xlu0 %4387
  %4389 = vrot.lane.b32.xlu0 %v4347, 9
  %v4390 = vpop.permute.xlu0 %4389
  %v4391 = vsel %vm2663, %v2630, %v4360
  %v4392 = vsel %vm2663, %v4362, %v4364
  %v4393 = vsel %vm2663, %v4366, %v4368
  %v4394 = vsel %vm2663, %v4370, %v4372
  %v4395 = vsel %vm2663, %v4376, %v4378
  %v4396 = vsel %vm2663, %v4380, %v4382
  %v4397 = vsel %vm2663, %v4384, %v4386
  %v4398 = vsel %vm2663, %v4388, %v4390
  %v4409 = vsel %vm2681, %v4305, 0
  %v4412 = vsel %vm2681, %v4306, 0
  %4414 = vmatprep.subr.mxu0 0.0
  %4415 = vmatpush1.msra.mxu0 %v4391
  %4416 = vmatprep.subr.mxu0 0.0
  %4417 = vmatpush1.msra.mxu0 %v4392
  %4418 = vmatprep.subr.mxu0 0.0
  %4419 = vmatpush1.msra.mxu0 %v4393
  %4420 = vmatprep.subr.mxu0 0.0
  %4421 = vmatpush1.msra.mxu0 %v4394
  %4422 = vmatprep.subr.mxu0 0.0
  %4423 = vmatpush1.msra.mxu0 %v4374
  %4424 = vmatprep.subr.mxu0 0.0
  %4425 = vmatpush1.msra.mxu0 %v4395
  %4426 = vmatprep.subr.mxu0 0.0
  %4427 = vmatpush1.msra.mxu0 %v4396
  %4428 = vmatprep.subr.mxu0 0.0
  %4429 = vmatpush1.msra.mxu0 %v4397
  %4430 = vmatprep.subr.mxu0 0.0
  %4431 = vmatpush1.msra.mxu0 %v4398
  %4432 = vmatprep.subr.mxu0 0.0
  %4433 = vmatpush1.msra.mxu0 0.0
  %4434 = vmatprep.subr.mxu0 0.0
  %4435 = vmatpush1.msra.mxu0 0.0
  %4436 = vmatprep.subr.mxu0 0.0
  %4437 = vmatpush1.msra.mxu0 0.0
  %4438 = vmatprep.subr.mxu0 0.0
  %4439 = vmatpush1.msra.mxu0 0.0
  %4440 = vmatprep.subr.mxu0 0.0
  %4441 = vmatpush1.msra.mxu0 0.0
  %4442 = vmatprep.subr.mxu0 0.0
  %4443 = vmatpush1.msra.mxu0 0.0
  %4444 = vmatprep.subr.mxu0 0.0
  %4445 = vmatpush1.msra.mxu0 0.0
  %4446 = vmatprep.subr.mxu0 0.0
  %4447 = vmatpush1.msra.mxu0 0.0
  %4448 = vmatprep.subr.mxu0 0.0
  %4449 = vmatpush1.msra.mxu0 0.0
  %4450 = vmatprep.subr.mxu0 0.0
  %4451 = vmatpush1.msra.mxu0 0.0
  %4452 = vmatprep.subr.mxu0 0.0
  %4453 = vmatpush1.msra.mxu0 0.0
  %4454 = vmatprep.subr.mxu0 0.0
  %4455 = vmatpush1.msra.mxu0 0.0
  %4456 = vmatprep.subr.mxu0 0.0
  %4457 = vmatpush1.msra.mxu0 0.0
  %4458 = vmatprep.subr.mxu0 0.0
  %4459 = vmatpush1.msra.mxu0 0.0
  %4460 = vmatprep.subr.mxu0 0.0
  %4461 = vmatpush1.msra.mxu0 0.0
  %4462 = vmatprep.subr.mxu0 0.0
  %4463 = vmatpush1.msra.mxu0 0.0
  %4464 = vmatprep.subr.mxu0 0.0
  %4465 = vmatpush1.msra.mxu0 0.0
  %4466 = vmatprep.subr.mxu0 0.0
  %4467 = vmatpush1.msra.mxu0 0.0
  %4468 = vmatprep.subr.mxu0 0.0
  %4469 = vmatpush1.msra.mxu0 0.0
  %4470 = vmatprep.subr.mxu0 0.0
  %4471 = vmatpush1.msra.mxu0 0.0
  %4472 = vmatprep.subr.mxu0 0.0
  %4473 = vmatpush1.msra.mxu0 0.0
  %4474 = vmatprep.subr.mxu0 0.0
  %4475 = vmatpush1.msra.mxu0 0.0
  %4476 = vmatprep.subr.mxu0 0.0
  %4477 = vmatpush1.msra.mxu0 0.0
  %4478 = vmatprep.mubr.f32.mxu0 0.0
  %4479 = vmatmul.mubr.f32.gmra.mrb[0].mxu0 %v4409
  %v4480 = vpop.f32.mrb[0].mxu0
  %v4481 = vadd.f32 %v4351, %v4480
  %v4482 = vpop.f32.mrb[0].mxu0
  %4483 = vmatprep.mubr.f32.mxu0 0.0
  %4484 = vmatmul.mubr.f32.gmra.mrb[0].mxu0 %v4412
  %v4485 = vpop.f32.mrb[0].mxu0
  %v4486 = vadd.f32 %v4356, %v4485
  %v4487 = vpop.f32.mrb[0].mxu0
  %4488 = vdwg.mxu0
  %v4489 = vld [vmem:[%s59] sm:$0xff]
  %v4490 = vld [vmem:[%s59 + $0x8] sm:$0xff]
  %v4491 = vld [vmem:[%s61] sm:$0xff]
  %v4492 = vld [vmem:[%s61 + $0x8] sm:$0xff]
  %v4493 = vmul.f32 %v3265, %v2494
  %v4494 = vmul.f32 %v3265, %v2504
  %v4495 = vmul.f32 %v3265, %v2514
  %v4496 = vmul.f32 %v3265, %v2524
  %v4497 = vmul.f32 %v3265, %v2534
  %v4498 = vmul.f32 %v3265, %v2544
  %v4499 = vmul.f32 %v3265, %v2554
  %v4500 = vmul.f32 %v3265, %v2564
  %4502 = vrot.lane.b32.xlu0 %v4494, 127
  %v4503 = vpop.permute.xlu0 %4502
  %v4504 = vsel %vm309, %v2571, %v4503
  %4506 = vrot.lane.b32.xlu0 %v4495, 126
  %v4507 = vpop.permute.xlu0 %4506
  %v4508 = vsel %vm535, %v2578, %v4507
  %4510 = vrot.lane.b32.xlu0 %v4496, 120
  %v4511 = vpop.permute.xlu0 %4510
  %v4512 = vsel %vm2588, %v2585, %v4511
  %4514 = vrot.lane.b32.xlu0 %v3265, 119
  %v4515 = vpop.permute.xlu0 %4514
  %4517 = vrot.lane.b32.xlu0 %v4497, 118
  %v4518 = vpop.permute.xlu0 %4517
  %v4519 = vsel %vm2599, %v4518, %v2598
  %4521 = vrot.lane.b32.xlu0 %v4498, 112
  %v4522 = vpop.permute.xlu0 %4521
  %v4523 = vsel %vm225, %v4522, %v2606
  %4525 = vrot.lane.b32.xlu0 %v4499, 111
  %v4526 = vpop.permute.xlu0 %4525
  %v4527 = vsel %vm183, %v4526, %v2613
  %4529 = vrot.lane.b32.xlu0 %v4500, 110
  %v4530 = vpop.permute.xlu0 %4529
  %v4531 = vsel %vm610, %v4530, %v2620
  %4533 = vset.pattern.permute.xlu0 0
  %4534 = vperm.xlu0 %4533, %v4491
  %v4535 = vpop.permute.xlu0 %4534
  %4538 = vset.pattern.permute.xlu0 0
  %4539 = vperm.xlu0 %4538, %v4492
  %v4540 = vpop.permute.xlu0 %4539
  %4543 = vrot.lane.b32.xlu0 %v4493, 9
  %v4544 = vpop.permute.xlu0 %4543
  %4545 = vrot.lane.b32.xlu0 %v4504, 9
  %v4546 = vpop.permute.xlu0 %4545
  %4547 = vrot.lane.b32.xlu0 %v4503, 9
  %v4548 = vpop.permute.xlu0 %4547
  %4549 = vrot.lane.b32.xlu0 %v4508, 9
  %v4550 = vpop.permute.xlu0 %4549
  %4551 = vrot.lane.b32.xlu0 %v4507, 9
  %v4552 = vpop.permute.xlu0 %4551
  %4553 = vrot.lane.b32.xlu0 %v4512, 9
  %v4554 = vpop.permute.xlu0 %4553
  %4555 = vrot.lane.b32.xlu0 %v4511, 9
  %v4556 = vpop.permute.xlu0 %4555
  %4557 = vrot.lane.b32.xlu0 %v4515, 9
  %v4558 = vpop.permute.xlu0 %4557
  %4559 = vrot.lane.b32.xlu0 %v4518, 9
  %v4560 = vpop.permute.xlu0 %4559
  %4561 = vrot.lane.b32.xlu0 %v4519, 9
  %v4562 = vpop.permute.xlu0 %4561
  %4563 = vrot.lane.b32.xlu0 %v4522, 9
  %v4564 = vpop.permute.xlu0 %4563
  %4565 = vrot.lane.b32.xlu0 %v4523, 9
  %v4566 = vpop.permute.xlu0 %4565
  %4567 = vrot.lane.b32.xlu0 %v4526, 9
  %v4568 = vpop.permute.xlu0 %4567
  %4569 = vrot.lane.b32.xlu0 %v4527, 9
  %v4570 = vpop.permute.xlu0 %4569
  %4571 = vrot.lane.b32.xlu0 %v4530, 9
  %v4572 = vpop.permute.xlu0 %4571
  %4573 = vrot.lane.b32.xlu0 %v4531, 9
  %v4574 = vpop.permute.xlu0 %4573
  %v4575 = vsel %vm2663, %v2630, %v4544
  %v4576 = vsel %vm2663, %v4546, %v4548
  %v4577 = vsel %vm2663, %v4550, %v4552
  %v4578 = vsel %vm2663, %v4554, %v4556
  %v4579 = vsel %vm2663, %v4560, %v4562
  %v4580 = vsel %vm2663, %v4564, %v4566
  %v4581 = vsel %vm2663, %v4568, %v4570
  %v4582 = vsel %vm2663, %v4572, %v4574
  %v4593 = vsel %vm2681, %v4489, 0
  %v4596 = vsel %vm2681, %v4490, 0
  %4598 = vmatprep.subr.mxu0 0.0
  %4599 = vmatpush1.msra.mxu0 %v4575
  %4600 = vmatprep.subr.mxu0 0.0
  %4601 = vmatpush1.msra.mxu0 %v4576
  %4602 = vmatprep.subr.mxu0 0.0
  %4603 = vmatpush1.msra.mxu0 %v4577
  %4604 = vmatprep.subr.mxu0 0.0
  %4605 = vmatpush1.msra.mxu0 %v4578
  %4606 = vmatprep.subr.mxu0 0.0
  %4607 = vmatpush1.msra.mxu0 %v4558
  %4608 = vmatprep.subr.mxu0 0.0
  %4609 = vmatpush1.msra.mxu0 %v4579
  %4610 = vmatprep.subr.mxu0 0.0
  %4611 = vmatpush1.msra.mxu0 %v4580
  %4612 = vmatprep.subr.mxu0 0.0
  %4613 = vmatpush1.msra.mxu0 %v4581
  %4614 = vmatprep.subr.mxu0 0.0
  %4615 = vmatpush1.msra.mxu0 %v4582
  %4616 = vmatprep.subr.mxu0 0.0
  %4617 = vmatpush1.msra.mxu0 0.0
  %4618 = vmatprep.subr.mxu0 0.0
  %4619 = vmatpush1.msra.mxu0 0.0
  %4620 = vmatprep.subr.mxu0 0.0
  %4621 = vmatpush1.msra.mxu0 0.0
  %4622 = vmatprep.subr.mxu0 0.0
  %4623 = vmatpush1.msra.mxu0 0.0
  %4624 = vmatprep.subr.mxu0 0.0
  %4625 = vmatpush1.msra.mxu0 0.0
  %4626 = vmatprep.subr.mxu0 0.0
  %4627 = vmatpush1.msra.mxu0 0.0
  %4628 = vmatprep.subr.mxu0 0.0
  %4629 = vmatpush1.msra.mxu0 0.0
  %4630 = vmatprep.subr.mxu0 0.0
  %4631 = vmatpush1.msra.mxu0 0.0
  %4632 = vmatprep.subr.mxu0 0.0
  %4633 = vmatpush1.msra.mxu0 0.0
  %4634 = vmatprep.subr.mxu0 0.0
  %4635 = vmatpush1.msra.mxu0 0.0
  %4636 = vmatprep.subr.mxu0 0.0
  %4637 = vmatpush1.msra.mxu0 0.0
  %4638 = vmatprep.subr.mxu0 0.0
  %4639 = vmatpush1.msra.mxu0 0.0
  %4640 = vmatprep.subr.mxu0 0.0
  %4641 = vmatpush1.msra.mxu0 0.0
  %4642 = vmatprep.subr.mxu0 0.0
  %4643 = vmatpush1.msra.mxu0 0.0
  %4644 = vmatprep.subr.mxu0 0.0
  %4645 = vmatpush1.msra.mxu0 0.0
  %4646 = vmatprep.subr.mxu0 0.0
  %4647 = vmatpush1.msra.mxu0 0.0
  %4648 = vmatprep.subr.mxu0 0.0
  %4649 = vmatpush1.msra.mxu0 0.0
  %4650 = vmatprep.subr.mxu0 0.0
  %4651 = vmatpush1.msra.mxu0 0.0
  %4652 = vmatprep.subr.mxu0 0.0
  %4653 = vmatpush1.msra.mxu0 0.0
  %4654 = vmatprep.subr.mxu0 0.0
  %4655 = vmatpush1.msra.mxu0 0.0
  %4656 = vmatprep.subr.mxu0 0.0
  %4657 = vmatpush1.msra.mxu0 0.0
  %4658 = vmatprep.subr.mxu0 0.0
  %4659 = vmatpush1.msra.mxu0 0.0
  %4660 = vmatprep.subr.mxu0 0.0
  %4661 = vmatpush1.msra.mxu0 0.0
  %4662 = vmatprep.mubr.f32.mxu0 0.0
  %4663 = vmatmul.mubr.f32.gmra.mrb[0].mxu0 %v4593
  %v4664 = vpop.f32.mrb[0].mxu0
  %v4665 = vadd.f32 %v4535, %v4664
  %v4666 = vpop.f32.mrb[0].mxu0
  %4667 = vmatprep.mubr.f32.mxu0 0.0
  %4668 = vmatmul.mubr.f32.gmra.mrb[0].mxu0 %v4596
  %v4669 = vpop.f32.mrb[0].mxu0
  %v4670 = vadd.f32 %v4540, %v4669
  %v4671 = vpop.f32.mrb[0].mxu0
  %4672 = vdwg.mxu0
  %v4673 = vadd.f32 %v4481, %v4665
  %v4674 = vadd.f32 %v4486, %v4670
  %v4675 = vld [vmem:[%s11] sm:$0xff]
  %v4676 = vld [vmem:[%s11 + $0x8] sm:$0xff]
  %v4677 = vld [vmem:[%s11 + $0x10] sm:$0xff]
  %v4678 = vld [vmem:[%s11 + $0x18] sm:$0xff]
  %v4679 = vld [vmem:[%s11 + $0x20] sm:$0xff]
  %v4680 = vld [vmem:[%s11 + $0x28] sm:$0xff]
  %v4681 = vld [vmem:[%s11 + $0x30] sm:$0xff]
  %v4682 = vld [vmem:[%s11 + $0x38] sm:$0xff]
  %v4683 = vld [vmem:[%s11 + $0x40] sm:$0xff]
  %v4684 = vld [vmem:[%s11 + $0x48] sm:$0xff]
  %v4685 = vld [vmem:[%s11 + $0x50] sm:$0xff]
  %v4686 = vld [vmem:[%s11 + $0x58] sm:$0xff]
  %v4687 = vld [vmem:[%s11 + $0x60] sm:$0xff]
  %v4688 = vld [vmem:[%s11 + $0x68] sm:$0xff]
  %v4689 = vld [vmem:[%s11 + $0x70] sm:$0xff]
  %v4690 = vld [vmem:[%s11 + $0x78] sm:$0xff]
  %4691 = vmatprep.subr.mxu0 0.0
  %4692 = vmatpush1.msra.mxu0 %v4675
  %4693 = vmatprep.subr.mxu0 0.0
  %4694 = vmatpush1.msra.mxu0 %v4676
  %4695 = vmatprep.subr.mxu0 0.0
  %4696 = vmatpush1.msra.mxu0 %v4677
  %4697 = vmatprep.subr.mxu0 0.0
  %4698 = vmatpush1.msra.mxu0 %v4678
  %4699 = vmatprep.subr.mxu0 0.0
  %4700 = vmatpush1.msra.mxu0 %v4679
  %4701 = vmatprep.subr.mxu0 0.0
  %4702 = vmatpush1.msra.mxu0 %v4680
  %4703 = vmatprep.subr.mxu0 0.0
  %4704 = vmatpush1.msra.mxu0 %v4681
  %4705 = vmatprep.subr.mxu0 0.0
  %4706 = vmatpush1.msra.mxu0 %v4682
  %4707 = vmatprep.subr.mxu0 0.0
  %4708 = vmatpush1.msra.mxu0 %v4683
  %4709 = vmatprep.subr.mxu0 0.0
  %4710 = vmatpush1.msra.mxu0 %v4684
  %4711 = vmatprep.subr.mxu0 0.0
  %4712 = vmatpush1.msra.mxu0 %v4685
  %4713 = vmatprep.subr.mxu0 0.0
  %4714 = vmatpush1.msra.mxu0 %v4686
  %4715 = vmatprep.subr.mxu0 0.0
  %4716 = vmatpush1.msra.mxu0 %v4687
  %4717 = vmatprep.subr.mxu0 0.0
  %4718 = vmatpush1.msra.mxu0 %v4688
  %4719 = vmatprep.subr.mxu0 0.0
  %4720 = vmatpush1.msra.mxu0 %v4689
  %4721 = vmatprep.subr.mxu0 0.0
  %4722 = vmatpush1.msra.mxu0 %v4690
  %4723 = vmatprep.subr.mxu0 0.0
  %4724 = vmatpush1.msra.mxu0 0.0
  %4725 = vmatprep.subr.mxu0 0.0
  %4726 = vmatpush1.msra.mxu0 0.0
  %4727 = vmatprep.subr.mxu0 0.0
  %4728 = vmatpush1.msra.mxu0 0.0
  %4729 = vmatprep.subr.mxu0 0.0
  %4730 = vmatpush1.msra.mxu0 0.0
  %4731 = vmatprep.subr.mxu0 0.0
  %4732 = vmatpush1.msra.mxu0 0.0
  %4733 = vmatprep.subr.mxu0 0.0
  %4734 = vmatpush1.msra.mxu0 0.0
  %4735 = vmatprep.subr.mxu0 0.0
  %4736 = vmatpush1.msra.mxu0 0.0
  %4737 = vmatprep.subr.mxu0 0.0
  %4738 = vmatpush1.msra.mxu0 0.0
  %4739 = vmatprep.subr.mxu0 0.0
  %4740 = vmatpush1.msra.mxu0 0.0
  %4741 = vmatprep.subr.mxu0 0.0
  %4742 = vmatpush1.msra.mxu0 0.0
  %4743 = vmatprep.subr.mxu0 0.0
  %4744 = vmatpush1.msra.mxu0 0.0
  %4745 = vmatprep.subr.mxu0 0.0
  %4746 = vmatpush1.msra.mxu0 0.0
  %4747 = vmatprep.subr.mxu0 0.0
  %4748 = vmatpush1.msra.mxu0 0.0
  %4749 = vmatprep.subr.mxu0 0.0
  %4750 = vmatpush1.msra.mxu0 0.0
  %4751 = vmatprep.subr.mxu0 0.0
  %4752 = vmatpush1.msra.mxu0 0.0
  %4753 = vmatprep.subr.mxu0 0.0
  %4754 = vmatpush1.msra.mxu0 0.0
  %4755 = vmatprep.mubr.f32.mxu0 0.0
  %4756 = vmatmul.mubr.f32.gmra.mrb[0].mxu0 %v4673
  %v4757 = vpop.f32.mrb[0].mxu0
  %v4758 = vadd.f32 0.0, %v4757
  %v4759 = vpop.f32.mrb[0].mxu0
  %4760 = vmatprep.mubr.f32.mxu0 0.0
  %4761 = vmatmul.mubr.f32.gmra.mrb[0].mxu0 %v4674
  %v4762 = vpop.f32.mrb[0].mxu0
  %v4763 = vadd.f32 0.0, %v4762
  %v4764 = vpop.f32.mrb[0].mxu0
  %4765 = vdwg.mxu0
  %vm4766 = vcmask 261120
  %4767 = vst.msk [vmem:[%s67] sm:$0xff] %vm4766, %v4758
  %4768 = vst.msk [vmem:[%s67 + $0x8] sm:$0xff] %vm4766, %v4763
  // Predicated region
  $region126: #{second_stage_forward.1} parent=0 // pred_check
    _
  $region127: #{second_stage_forward.1} parent=0 // pred_check_branch
    %4770 = sbr.rel (0) target = $region129
  $region128: #{second_stage_forward.1} parent=0 // pred_region
    _
  $region129: #{second_stage_forward.1} parent=0 // pred_fallthru
    _
  // Predicated region
  $region130: #{second_stage_forward.1} parent=0 // pred_check
    _
  $region131: #{second_stage_forward.1} parent=0 // pred_check_branch
    %4772 = sbr.rel (0) target = $region133
  $region132: #{second_stage_forward.1} parent=0 // pred_region
    _
  $region133: #{second_stage_forward.1} parent=0 // pred_fallthru
    _
  // Predicated region
  $region134: #{second_stage_forward.1} parent=0 // pred_check
    _
  $region135: #{second_stage_forward.1} parent=0 // pred_check_branch
    %4774 = sbr.rel (0) target = $region137
  $region136: #{second_stage_forward.1} parent=0 // pred_region
    _
  $region137: #{second_stage_forward.1} parent=0 // pred_fallthru
    _
  // Predicated region
  $region138: #{second_stage_forward.1} parent=0 // pred_check
    _
  $region139: #{second_stage_forward.1} parent=0 // pred_check_branch
    %4776 = sbr.rel (0) target = $region141
  $region140: #{second_stage_forward.1} parent=0 // pred_region
    _
  $region141: #{second_stage_forward.1} parent=0 // pred_fallthru
    _
  // Predicated region
  $region142: #{second_stage_forward.1} parent=0 // pred_check
    _
  $region143: #{second_stage_forward.1} parent=0 // pred_check_branch
    %4778 = sbr.rel (0) target = $region145
  $region144: #{second_stage_forward.1} parent=0 // pred_region
    _
  $region145: #{second_stage_forward.1} parent=0 // pred_fallthru
    _
  // Predicated region
  $region146: #{second_stage_forward.1} parent=0 // pred_check
    _
  $region147: #{second_stage_forward.1} parent=0 // pred_check_branch
    %4780 = sbr.rel (0) target = $region149
  $region148: #{second_stage_forward.1} parent=0 // pred_region
    _
  $region149: #{second_stage_forward.1} parent=0 // pred_fallthru
    _

</llo_original>
